<compile_context>
chip_gen: v5e
topology: v5e:2x2
jax: 0.10.0
libtpu: 0.0.40
codegen_flags: <defaults>
</compile_context>

<pallas_src>
import functools

import jax
import jax.numpy as jnp
from jax.experimental import pallas as pl
from jax.experimental.pallas import tpu as pltpu

# Row-tile for the matmul kernels. 256 is safe for v7x's 64 MiB VMEM at these
# K/N sizes; on v5e/v6e (128 MiB) it can be raised to 512 together with the
# VMEM limit below.
_TM_MAX = 256
_VMEM_LIMIT = 32 * 1024 * 1024
_BN_EPS = 1e-5
_NEG_SLOPE = 0.01


def _round_up(x, m):
    return (x + m - 1) // m * m


def _pad2(a, rows, cols):
    r, c = a.shape
    if r == rows and c == cols:
        return a
    return jnp.pad(a, ((0, rows - r), (0, cols - c)))


def _cparams(semantics):
    return pltpu.CompilerParams(dimension_semantics=semantics,
                                vmem_limit_bytes=_VMEM_LIMIT)


def _apply_act(y, act, neg_slope):
    if act == "leaky_relu":
        return jnp.where(y > 0, y, neg_slope * y)
    if act == "tanh":
        return jnp.tanh(y)
    return y


# ---------------------------------------------------------------------------
# Pallas kernels
# ---------------------------------------------------------------------------
def _matmul_act_kernel(x_ref, w_ref, b_ref, o_ref, *, act, neg_slope):
    """o = act(x @ w + b), one M-tile per grid step (bf16 MXU, f32 epilogue)."""
    y = jnp.dot(x_ref[...], w_ref[...], preferred_element_type=jnp.float32)
    y = y + b_ref[...]
    o_ref[...] = _apply_act(y, act, neg_slope).astype(o_ref.dtype)


def _matmul_stats_kernel(x_ref, w_ref, b_ref, y_ref, sum_ref, sq_ref, *,
                         m_true, mask_rows):
    """y = x @ w + b per M-tile; accumulate per-column sum / sumsq for BN."""
    pid = pl.program_id(0)
    y = jnp.dot(x_ref[...], w_ref[...], preferred_element_type=jnp.float32)
    y = y + b_ref[...]
    y_ref[...] = y

    @pl.when(pid == 0)
    def _():
        sum_ref[...] = jnp.zeros_like(sum_ref)
        sq_ref[...] = jnp.zeros_like(sq_ref)

    if mask_rows:  # static: padded rows must not bias the batch statistics
        rows = pid * y.shape[0] + jax.lax.broadcasted_iota(jnp.int32, y.shape, 0)
        y = jnp.where(rows < m_true, y, 0.0)
    sum_ref[...] += jnp.sum(y, axis=0, keepdims=True)
    sq_ref[...] += jnp.sum(y * y, axis=0, keepdims=True)


def _scale_shift_act_kernel(y_ref, scale_ref, shift_ref, o_ref, *, act, neg_slope):
    """o = act(y * scale + shift) — BN normalize + activation (f32 math)."""
    y = y_ref[...] * scale_ref[...] + shift_ref[...]
    o_ref[...] = _apply_act(y, act, neg_slope).astype(o_ref.dtype)


def _fc_reparam_kernel(x_ref, w_ref, b_ref, eps_ref, mu_ref, lv_ref, z_ref, *, lp):
    """Fused fc_mu + fc_logvar + reparameterize (z = mu + eps*exp(0.5*logvar))."""
    y = jnp.dot(x_ref[...], w_ref[...], preferred_element_type=jnp.float32)
    y = y + b_ref[...]
    mu = y[:, :lp]
    lv = y[:, lp:]
    mu_ref[...] = mu
    lv_ref[...] = lv
    z_ref[...] = mu + eps_ref[...] * jnp.exp(0.5 * lv)


# ---------------------------------------------------------------------------
# Pallas wrappers (padding / tiling / launch)
# ---------------------------------------------------------------------------
def _tile_m(M):
    tm = min(_TM_MAX, _round_up(M, 8))
    return tm, _round_up(M, tm)


def matmul_act(x, w, b, *, act="none", out_dtype=jnp.float32):
    M, K = x.shape
    _, N = w.shape
    Kp, Np = _round_up(K, 128), _round_up(N, 128)
    tm, Mp = _tile_m(M)
    xp = _pad2(x, Mp, Kp).astype(jnp.bfloat16)
    wp = _pad2(w, Kp, Np).astype(jnp.bfloat16)
    bp = _pad2(b.reshape(1, N).astype(jnp.float32), 1, Np)
    out = pl.pallas_call(
        functools.partial(_matmul_act_kernel, act=act, neg_slope=_NEG_SLOPE),
        out_shape=jax.ShapeDtypeStruct((Mp, Np), out_dtype),
        grid=(Mp // tm,),
        in_specs=[pl.BlockSpec((tm, Kp), lambda i: (i, 0)),
                  pl.BlockSpec((Kp, Np), lambda i: (0, 0)),
                  pl.BlockSpec((1, Np), lambda i: (0, 0))],
        out_specs=pl.BlockSpec((tm, Np), lambda i: (i, 0)),
        compiler_params=_cparams(("parallel",)),
    )(xp, wp, bp)
    return out[:M, :N]


def matmul_bn_act(x, w, b, *, act="leaky_relu", bn_groups=1,
                  out_dtype=jnp.float32):
    """act(batchnorm(x @ w + b)).

    bn_groups > 1: the output columns consist of `bn_groups` blocks (each a
    128-multiple wide) that all map onto the same physical output channels
    (used by the sub-pixel deconv); their statistics are combined per channel.
    """
    M, K = x.shape
    _, N = w.shape
    Kp = _round_up(K, 128)
    if bn_groups > 1:
        assert N % (128 * bn_groups) == 0
        Np = N
    else:
        Np = _round_up(N, 128)
    gw = Np // bn_groups
    tm, Mp = _tile_m(M)

    xp = _pad2(x, Mp, Kp).astype(jnp.bfloat16)
    wp = _pad2(w, Kp, Np).astype(jnp.bfloat16)
    bp = _pad2(b.reshape(1, N).astype(jnp.float32), 1, Np)
    grid = (Mp // tm,)

    # Pass 1: matmul + bias + per-column (sum, sumsq). Stats outputs are grid
    # accumulators (constant block index) -> axis must be "arbitrary".
    y, ssum, ssq = pl.pallas_call(
        functools.partial(_matmul_stats_kernel, m_true=M, mask_rows=(Mp != M)),
        out_shape=(jax.ShapeDtypeStruct((Mp, Np), jnp.float32),
                   jax.ShapeDtypeStruct((1, Np), jnp.float32),
                   jax.ShapeDtypeStruct((1, Np), jnp.float32)),
        grid=grid,
        in_specs=[pl.BlockSpec((tm, Kp), lambda i: (i, 0)),
                  pl.BlockSpec((Kp, Np), lambda i: (0, 0)),
                  pl.BlockSpec((1, Np), lambda i: (0, 0))],
        out_specs=(pl.BlockSpec((tm, Np), lambda i: (i, 0)),
                   pl.BlockSpec((1, Np), lambda i: (0, 0)),
                   pl.BlockSpec((1, Np), lambda i: (0, 0))),
        compiler_params=_cparams(("arbitrary",)),
    )(xp, wp, bp)

    # Tiny glue: fold group stats into per-channel mean / invstd (gamma=1, beta=0).
    cnt = float(M * bn_groups)
    s1 = ssum.reshape(bn_groups, gw).sum(axis=0)
    s2 = ssq.reshape(bn_groups, gw).sum(axis=0)
    mean = s1 / cnt
    var = s2 / cnt - mean * mean
    invstd = jax.lax.rsqrt(var + _BN_EPS)
    scale = jnp.tile(invstd, bn_groups).reshape(1, Np)
    shift = jnp.tile(-mean * invstd, bn_groups).reshape(1, Np)

    # Pass 2: normalize + activation, fully parallel over M tiles.
    out = pl.pallas_call(
        functools.partial(_scale_shift_act_kernel, act=act, neg_slope=_NEG_SLOPE),
        out_shape=jax.ShapeDtypeStruct((Mp, Np), out_dtype),
        grid=grid,
        in_specs=[pl.BlockSpec((tm, Np), lambda i: (i, 0)),
                  pl.BlockSpec((1, Np), lambda i: (0, 0)),
                  pl.BlockSpec((1, Np), lambda i: (0, 0))],
        out_specs=pl.BlockSpec((tm, Np), lambda i: (i, 0)),
        compiler_params=_cparams(("parallel",)),
    )(y, scale, shift)
    return out[:M, :N]


def fc_reparameterize(flat, w_cat, b_cat, eps, latent_dim):
    """One kernel: [mu | logvar] = flat @ W_cat + b_cat, z = mu + eps*std."""
    M, K = flat.shape
    lp = w_cat.shape[1] // 2
    Kp = _round_up(K, 128)
    tm, Mp = _tile_m(M)
    xp = _pad2(flat, Mp, Kp).astype(jnp.bfloat16)
    wp = _pad2(w_cat, Kp, 2 * lp).astype(jnp.bfloat16)
    bp = b_cat.reshape(1, 2 * lp).astype(jnp.float32)
    ep = _pad2(eps.astype(jnp.float32), Mp, lp)
    mu, lv, z = pl.pallas_call(
        functools.partial(_fc_reparam_kernel, lp=lp),
        out_shape=(jax.ShapeDtypeStruct((Mp, lp), jnp.float32),
                   jax.ShapeDtypeStruct((Mp, lp), jnp.float32),
                   jax.ShapeDtypeStruct((Mp, lp), jnp.float32)),
        grid=(Mp // tm,),
        in_specs=[pl.BlockSpec((tm, Kp), lambda i: (i, 0)),
                  pl.BlockSpec((Kp, 2 * lp), lambda i: (0, 0)),
                  pl.BlockSpec((1, 2 * lp), lambda i: (0, 0)),
                  pl.BlockSpec((tm, lp), lambda i: (i, 0))],
        out_specs=(pl.BlockSpec((tm, lp), lambda i: (i, 0)),
                   pl.BlockSpec((tm, lp), lambda i: (i, 0)),
                   pl.BlockSpec((tm, lp), lambda i: (i, 0))),
        compiler_params=_cparams(("parallel",)),
    )(xp, wp, bp, ep)
    return mu[:M, :latent_dim], lv[:M, :latent_dim], z[:M, :latent_dim]


# ---------------------------------------------------------------------------
# Conv layers (patch extraction is JAX glue; all math runs in Pallas kernels)
# ---------------------------------------------------------------------------
def _im2col(x_nhwc, k, stride, pad):
    # TODO(synk): build the k*k shifted windows inside the kernel (halo'd VMEM
    # tiles) to avoid materializing the k*k-inflated patches slab in HBM.
    B, H, W, C = x_nhwc.shape
    xp = jnp.pad(x_nhwc, ((0, 0), (pad, pad), (pad, pad), (0, 0)))
    Ho = (H + 2 * pad - k) // stride + 1
    Wo = (W + 2 * pad - k) // stride + 1
    cols = []
    for i in range(k):
        for j in range(k):
            cols.append(xp[:, i:i + stride * Ho:stride, j:j + stride * Wo:stride, :])
    patches = jnp.concatenate(cols, axis=-1).reshape(B * Ho * Wo, k * k * C)
    return patches, Ho, Wo


def conv2d_bn_act(x_nhwc, wm, b, *, k, stride, pad, act, use_bn,
                  out_dtype=jnp.float32):
    B = x_nhwc.shape[0]
    patches, Ho, Wo = _im2col(x_nhwc, k, stride, pad)
    if use_bn:
        y = matmul_bn_act(patches, wm, b, act=act, out_dtype=out_dtype)
    else:
        y = matmul_act(patches, wm, b, act=act, out_dtype=out_dtype)
    return y.reshape(B, Ho, Wo, -1)


def deconv2x_bn_act(x_nhwc, w_sub, b_sub, co, *, act="leaky_relu",
                    out_dtype=jnp.float32):
    """ConvTranspose2d(k=3, s=2, p=1, op=1) + BN + act via sub-pixel decomposition.

    Each input pixel's 2x2 neighbourhood (K = 4*Cin) maps through one matmul to
    4 phase blocks (each padded to a 128 lane multiple) which pixel-shuffle into
    the 2x upsampled output — no zero-inserted dilated input.
    """
    B, H, W, C = x_nhwc.shape
    xp = jnp.pad(x_nhwc, ((0, 0), (0, 1), (0, 1), (0, 0)))
    taps = jnp.concatenate(
        [xp[:, :H, :W, :], xp[:, :H, 1:, :], xp[:, 1:, :W, :], xp[:, 1:, 1:, :]],
        axis=-1)
    patches = taps.reshape(B * H * W, 4 * C)
    cop = w_sub.shape[1] // 4
    y = matmul_bn_act(patches, w_sub, b_sub, act=act, bn_groups=4,
                      out_dtype=out_dtype)                    # (B*H*W, 4*cop)
    y = y.reshape(B, H, W, 2, 2, cop)[..., :co]               # phases (py, px)
    y = jnp.transpose(y, (0, 1, 3, 2, 4, 5)).reshape(B, 2 * H, 2 * W, co)
    return y


# ---------------------------------------------------------------------------
# Parameters: synthetic PyTorch-layout params + one-time kernel-friendly prep
# ---------------------------------------------------------------------------
def init_params(key, *, channels, hidden_dims, latent_dim, img_size):
    h1, h2 = hidden_dims
    s = img_size // 4
    flat = h2 * s * s

    def nrm(k, shape, scale=0.05):
        return scale * jax.random.normal(k, shape, jnp.float32)

    ks = jax.random.split(key, 16)
    return {
        # encoder
        "enc1_w": nrm(ks[0], (h1, channels, 3, 3)), "enc1_b": nrm(ks[1], (h1,)),
        "enc2_w": nrm(ks[2], (h2, h1, 3, 3)), "enc2_b": nrm(ks[3], (h2,)),
        "fc_mu_w": nrm(ks[4], (flat, latent_dim)), "fc_mu_b": nrm(ks[5], (latent_dim,)),
        "fc_var_w": nrm(ks[6], (flat, latent_dim)), "fc_var_b": nrm(ks[7], (latent_dim,)),
        # decoder (hidden_dims reversed: [h2, h1])
        "dec_in_w": nrm(ks[8], (latent_dim, flat)), "dec_in_b": nrm(ks[9], (flat,)),
        "dec1_w": nrm(ks[10], (h2, h1, 3, 3)),   # ConvTranspose2d (Cin, Cout, k, k)
        "dec1_b": nrm(ks[11], (h1,)),
        "dec2_w": nrm(ks[12], (h1, h1, 3, 3)),
        "dec2_b": nrm(ks[13], (h1,)),
        "final_w": nrm(ks[14], (channels, h1, 3, 3)), "final_b": nrm(ks[15], (channels,)),
    }


def prepare_params(raw, *, hidden_dims, latent_dim, img_size):
    """One-time host-side weight transforms: conv->matmul layout, sub-pixel
    deconv weights, NHWC-order fc rows/cols, fused+padded fc_mu/fc_var."""
    h1, h2 = hidden_dims
    s = img_size // 4
    L = latent_dim
    Lp = _round_up(L, 128)

    def conv_wm(w_oihw):                                   # -> (k*k*Ci, Co)
        co, ci, k, _ = w_oihw.shape
        return jnp.transpose(w_oihw, (2, 3, 1, 0)).reshape(k * k * ci, co)

    def deconv_sub(w_iohw):                                # (Ci, Co, 3, 3)
        ci, co, k, _ = w_iohw.shape
        assert k == 3
        cop = _round_up(co, 128)
        # forward-conv equivalent, flipped: w_eq[co, ci, dy, dx] = w[ci, co, 2-dy, 2-dx]
        w_eq = jnp.transpose(w_iohw[:, :, ::-1, ::-1], (1, 0, 2, 3))
        W = jnp.zeros((4 * ci, 4 * cop), jnp.float32)

        def put(W, tap, phase, dy, dx):
            blk = jnp.transpose(w_eq[:, :, dy, dx])        # (Ci, Co)
            return W.at[tap * ci:(tap + 1) * ci,
                        phase * cop:phase * cop + co].set(blk)

        # taps: 0=(i,j) 1=(i,j+1) 2=(i+1,j) 3=(i+1,j+1); phases: 0=ee 1=eo 2=oe 3=oo
        W = put(W, 0, 0, 1, 1)
        W = put(W, 0, 1, 1, 0); W = put(W, 1, 1, 1, 2)
        W = put(W, 0, 2, 0, 1); W = put(W, 2, 2, 2, 1)
        W = put(W, 0, 3, 0, 0); W = put(W, 1, 3, 0, 2)
        W = put(W, 2, 3, 2, 0); W = put(W, 3, 3, 2, 2)
        return W, cop

    def deconv_bias(b, cop):
        co = b.shape[0]
        bp = jnp.zeros((4 * cop,), jnp.float32)
        for p in range(4):
            bp = bp.at[p * cop:p * cop + co].set(b)
        return bp

    # fc rows: NCHW-flatten order (c, y, x) -> NHWC-flatten order (y, x, c)
    def fc_rows_to_nhwc(w):
        return w.reshape(h2, s, s, -1).transpose(1, 2, 0, 3).reshape(s * s * h2, -1)

    fc_mu = fc_rows_to_nhwc(raw["fc_mu_w"])
    fc_var = fc_rows_to_nhwc(raw["fc_var_w"])
    fc_cat_w = jnp.zeros((h2 * s * s, 2 * Lp), jnp.float32)
    fc_cat_w = fc_cat_w.at[:, :L].set(fc_mu).at[:, Lp:Lp + L].set(fc_var)
    fc_cat_b = jnp.zeros((2 * Lp,), jnp.float32)
    fc_cat_b = fc_cat_b.at[:L].set(raw["fc_mu_b"]).at[Lp:Lp + L].set(raw["fc_var_b"])

    # decoder-input cols / bias: NCHW order (c, y, x) -> NHWC order (y, x, c)
    dec_in_w = raw["dec_in_w"].reshape(L, h2, s, s).transpose(0, 2, 3, 1).reshape(L, -1)
    dec_in_b = raw["dec_in_b"].reshape(h2, s, s).transpose(1, 2, 0).reshape(-1)

    dec1_wm, cop1 = deconv_sub(raw["dec1_w"])
    dec2_wm, cop2 = deconv_sub(raw["dec2_w"])

    return {
        "enc1_wm": conv_wm(raw["enc1_w"]), "enc1_b": raw["enc1_b"],
        "enc2_wm": conv_wm(raw["enc2_w"]), "enc2_b": raw["enc2_b"],
        "fc_cat_w": fc_cat_w, "fc_cat_b": fc_cat_b,
        "dec_in_w": dec_in_w, "dec_in_b": dec_in_b,
        "dec1_wm": dec1_wm, "dec1_b": deconv_bias(raw["dec1_b"], cop1),
        "dec2_wm": dec2_wm, "dec2_b": deconv_bias(raw["dec2_b"], cop2),
        "final_wm": conv_wm(raw["final_w"]), "final_b": raw["final_b"],
    }


# ---------------------------------------------------------------------------
# Full VAE forward
# ---------------------------------------------------------------------------
def vae_forward(p, x_nchw, eps, *, hidden_dims, latent_dim, img_size):
    h1, h2 = hidden_dims
    s = img_size // 4
    B = x_nchw.shape[0]

    # --- encode ---
    x = jnp.transpose(x_nchw, (0, 2, 3, 1))                   # NCHW -> NHWC boundary
    h = conv2d_bn_act(x, p["enc1_wm"], p["enc1_b"], k=3, stride=2, pad=1,
                      act="leaky_relu", use_bn=True, out_dtype=jnp.bfloat16)
    h = conv2d_bn_act(h, p["enc2_wm"], p["enc2_b"], k=3, stride=2, pad=1,
                      act="leaky_relu", use_bn=True, out_dtype=jnp.bfloat16)
    flat = h.reshape(B, -1)                                   # NHWC flatten (weights pre-permuted)
    mu, logvar, z = fc_reparameterize(flat, p["fc_cat_w"], p["fc_cat_b"], eps,
                                      latent_dim)

    # --- decode ---
    d = matmul_act(z, p["dec_in_w"], p["dec_in_b"], act="none",
                   out_dtype=jnp.bfloat16)
    d = d.reshape(B, s, s, h2)                                # NHWC (cols pre-permuted)
    d = deconv2x_bn_act(d, p["dec1_wm"], p["dec1_b"], h1,
                        act="leaky_relu", out_dtype=jnp.bfloat16)
    d = deconv2x_bn_act(d, p["dec2_wm"], p["dec2_b"], h1,
                        act="leaky_relu", out_dtype=jnp.bfloat16)
    xr = conv2d_bn_act(d, p["final_wm"], p["final_b"], k=3, stride=1, pad=1,
                       act="tanh", use_bn=False, out_dtype=jnp.float32)
    x_recon = jnp.transpose(xr, (0, 3, 1, 2))                 # NHWC -> NCHW boundary
    return x_recon, mu, logvar


# ---------------------------------------------------------------------------
if __name__ == "__main__":
    BATCH = 2
    CHANNELS = 3
    IMG_SIZE = 16
    HIDDEN_DIMS = (32, 64)
    LATENT_DIM = 16

    key = jax.random.PRNGKey(0)
    k_params, k_x, k_eps = jax.random.split(key, 3)

    raw = init_params(k_params, channels=CHANNELS, hidden_dims=HIDDEN_DIMS,
                      latent_dim=LATENT_DIM, img_size=IMG_SIZE)
    params = prepare_params(raw, hidden_dims=HIDDEN_DIMS,
                            latent_dim=LATENT_DIM, img_size=IMG_SIZE)

    x = jax.random.normal(k_x, (BATCH, CHANNELS, IMG_SIZE, IMG_SIZE), jnp.float32)
    # eps for the reparameterization trick (torch.randn_like equivalent)
    eps = jax.random.normal(k_eps, (BATCH, LATENT_DIM), jnp.float32)

    fwd = jax.jit(functools.partial(vae_forward, hidden_dims=HIDDEN_DIMS,
                                    latent_dim=LATENT_DIM, img_size=IMG_SIZE))
    x_recon, mu, logvar = fwd(params, x, eps)
    jax.block_until_ready((x_recon, mu, logvar))

    assert x_recon.shape == (BATCH, CHANNELS, IMG_SIZE, IMG_SIZE)
    assert mu.shape == (BATCH, LATENT_DIM)
    assert logvar.shape == (BATCH, LATENT_DIM)
    assert bool(jnp.all(jnp.isfinite(x_recon)))
    assert bool(jnp.all(jnp.isfinite(mu))) and bool(jnp.all(jnp.isfinite(logvar)))
    print("KERNEL_OK")
</pallas_src>

<mosaic_0001>
module attributes {stable_mosaic.version = 11 : i64} {
  func.func @_scale_shift_act_kernel(%arg0: i32, %arg1: memref<128x128xf32, #tpu.memory_space<vmem>>, %arg2: memref<1x128xf32, #tpu.memory_space<vmem>>, %arg3: memref<1x128xf32, #tpu.memory_space<vmem>>, %arg4: memref<128x128xbf16, #tpu.memory_space<vmem>>) attributes {dimension_semantics = [#tpu.dimension_semantics<parallel>], iteration_bounds = array<i64: 1>, scalar_prefetch = 0 : i64, scratch_operands = 0 : i64, tpu.core_type = #tpu.core_type<tc>, window_params = [{transform_indices = @transform_0, window_bounds = array<i64: 128, 128>}, {pipeline_mode = #tpu.pipeline_mode<synchronous>, transform_indices = @transform_1, window_bounds = array<i64: 1, 128>}, {pipeline_mode = #tpu.pipeline_mode<synchronous>, transform_indices = @transform_2, window_bounds = array<i64: 1, 128>}, {transform_indices = @transform_3, window_bounds = array<i64: 128, 128>}]} {
    %c0 = arith.constant 0 : index
    %c0_0 = arith.constant 0 : index
    %0 = vector.load %arg1[%c0, %c0_0] : memref<128x128xf32, #tpu.memory_space<vmem>>, vector<128x128xf32>
    %c0_1 = arith.constant 0 : index
    %c0_2 = arith.constant 0 : index
    %1 = vector.load %arg2[%c0_1, %c0_2] : memref<1x128xf32, #tpu.memory_space<vmem>>, vector<1x128xf32>
    %2 = vector.broadcast %1 : vector<1x128xf32> to vector<128x128xf32>
    %3 = arith.mulf %0, %2 : vector<128x128xf32>
    %c0_3 = arith.constant 0 : index
    %c0_4 = arith.constant 0 : index
    %4 = vector.load %arg3[%c0_3, %c0_4] : memref<1x128xf32, #tpu.memory_space<vmem>>, vector<1x128xf32>
    %5 = vector.broadcast %4 : vector<1x128xf32> to vector<128x128xf32>
    %6 = arith.addf %3, %5 : vector<128x128xf32>
    %cst = arith.constant 0.000000e+00 : f32
    %7 = vector.broadcast %cst : f32 to vector<128x128xf32>
    %8 = arith.cmpf ogt, %6, %7 : vector<128x128xf32>
    %cst_5 = arith.constant 0.00999999977 : f32
    %9 = vector.broadcast %cst_5 : f32 to vector<128x128xf32>
    %10 = arith.mulf %9, %6 : vector<128x128xf32>
    %11 = arith.select %8, %6, %10 : vector<128x128xi1>, vector<128x128xf32>
    %12 = arith.truncf %11 : vector<128x128xf32> to vector<128x128xbf16>
    %c0_6 = arith.constant 0 : index
    %c0_7 = arith.constant 0 : index
    %13 = vector.load %arg4[%c0_6, %c0_7] : memref<128x128xbf16, #tpu.memory_space<vmem>>, vector<128x128xbf16>
    tpu.vector_store %arg4[%c0_6, %c0_7], %12 {strides = array<i32>} : memref<128x128xbf16, #tpu.memory_space<vmem>>, vector<128x128xbf16>,
    return
  }
  func.func @transform_0(%arg0: i32) -> (i32, i32) {
    %c0_i32 = arith.constant 0 : i32
    %c0_i32_0 = arith.constant 0 : i32
    return %arg0, %c0_i32 : i32, i32
  }
  func.func @transform_1(%arg0: i32) -> (i32, i32) {
    %c0_i32 = arith.constant 0 : i32
    %c0_i32_0 = arith.constant 0 : i32
    %c0_i32_1 = arith.constant 0 : i32
    return %c0_i32, %c0_i32_0 : i32, i32
  }
  func.func @transform_2(%arg0: i32) -> (i32, i32) {
    %c0_i32 = arith.constant 0 : i32
    %c0_i32_0 = arith.constant 0 : i32
    %c0_i32_1 = arith.constant 0 : i32
    return %c0_i32, %c0_i32_0 : i32, i32
  }
  func.func @transform_3(%arg0: i32) -> (i32, i32) {
    %c0_i32 = arith.constant 0 : i32
    %c0_i32_0 = arith.constant 0 : i32
    return %arg0, %c0_i32 : i32, i32
  }
}

module attributes {stable_mosaic.version = 11 : i64} {
  func.func @_matmul_stats_kernel(%arg0: i32, %arg1: memref<128x128xbf16, #tpu.memory_space<vmem>>, %arg2: memref<128x128xbf16, #tpu.memory_space<vmem>>, %arg3: memref<1x128xf32, #tpu.memory_space<vmem>>, %arg4: memref<128x128xf32, #tpu.memory_space<vmem>>, %arg5: memref<1x128xf32, #tpu.memory_space<vmem>>, %arg6: memref<1x128xf32, #tpu.memory_space<vmem>>) attributes {dimension_semantics = [#tpu.dimension_semantics<arbitrary>], iteration_bounds = array<i64: 1>, scalar_prefetch = 0 : i64, scratch_operands = 0 : i64, tpu.core_type = #tpu.core_type<tc>, window_params = [{transform_indices = @transform_0, window_bounds = array<i64: 128, 128>}, {pipeline_mode = #tpu.pipeline_mode<synchronous>, transform_indices = @transform_1, window_bounds = array<i64: 128, 128>}, {pipeline_mode = #tpu.pipeline_mode<synchronous>, transform_indices = @transform_2, window_bounds = array<i64: 1, 128>}, {transform_indices = @transform_3, window_bounds = array<i64: 128, 128>}, {pipeline_mode = #tpu.pipeline_mode<synchronous>, transform_indices = @transform_4, window_bounds = array<i64: 1, 128>}, {pipeline_mode = #tpu.pipeline_mode<synchronous>, transform_indices = @transform_5, window_bounds = array<i64: 1, 128>}]} {
    %c0 = arith.constant 0 : index
    %c0_0 = arith.constant 0 : index
    %0 = vector.load %arg1[%c0, %c0_0] : memref<128x128xbf16, #tpu.memory_space<vmem>>, vector<128x128xbf16>
    %c0_1 = arith.constant 0 : index
    %c0_2 = arith.constant 0 : index
    %1 = vector.load %arg2[%c0_1, %c0_2] : memref<128x128xbf16, #tpu.memory_space<vmem>>, vector<128x128xbf16>
    %cst = arith.constant dense<0.000000e+00> : vector<128x128xf32>
    %2 = tpu.matmul %0, %1, %cst {dimension_numbers = #tpu.dot_dimension_numbers<[1], [0], [0], [1], [0, 0, 1, 1], [], []>} : vector<128x128xbf16>, vector<128x128xbf16>, vector<128x128xf32> -> vector<128x128xf32>
    %c0_3 = arith.constant 0 : index
    %c0_4 = arith.constant 0 : index
    %3 = vector.load %arg3[%c0_3, %c0_4] : memref<1x128xf32, #tpu.memory_space<vmem>>, vector<1x128xf32>
    %4 = vector.broadcast %3 : vector<1x128xf32> to vector<128x128xf32>
    %5 = arith.addf %2, %4 : vector<128x128xf32>
    %c0_5 = arith.constant 0 : index
    %c0_6 = arith.constant 0 : index
    %6 = vector.load %arg4[%c0_5, %c0_6] : memref<128x128xf32, #tpu.memory_space<vmem>>, vector<128x128xf32>
    tpu.vector_store %arg4[%c0_5, %c0_6], %5 {strides = array<i32>} : memref<128x128xf32, #tpu.memory_space<vmem>>, vector<128x128xf32>,
    %c0_i32 = arith.constant 0 : i32
    %7 = arith.cmpi eq, %arg0, %c0_i32 : i32
    %8 = arith.extui %7 : i1 to i32
    %c0_i32_7 = arith.constant 0 : i32
    %9 = arith.cmpi ne, %8, %c0_i32_7 : i32
    scf.if %9 {
      %cst_18 = arith.constant 0.000000e+00 : f32
      %21 = vector.broadcast %cst_18 : f32 to vector<1x128xf32>
      %c0_19 = arith.constant 0 : index
      %c0_20 = arith.constant 0 : index
      %22 = vector.load %arg5[%c0_19, %c0_20] : memref<1x128xf32, #tpu.memory_space<vmem>>, vector<1x128xf32>
      tpu.vector_store %arg5[%c0_19, %c0_20], %21 {strides = array<i32>} : memref<1x128xf32, #tpu.memory_space<vmem>>, vector<1x128xf32>,
      %cst_21 = arith.constant 0.000000e+00 : f32
      %23 = vector.broadcast %cst_21 : f32 to vector<1x128xf32>
      %c0_22 = arith.constant 0 : index
      %c0_23 = arith.constant 0 : index
      %24 = vector.load %arg6[%c0_22, %c0_23] : memref<1x128xf32, #tpu.memory_space<vmem>>, vector<1x128xf32>
      tpu.vector_store %arg6[%c0_22, %c0_23], %23 {strides = array<i32>} : memref<1x128xf32, #tpu.memory_space<vmem>>, vector<1x128xf32>,
    } else {
    }
    %c0_8 = arith.constant 0 : index
    %c0_9 = arith.constant 0 : index
    %10 = vector.load %arg5[%c0_8, %c0_9] : memref<1x128xf32, #tpu.memory_space<vmem>>, vector<1x128xf32>
    %cst_10 = arith.constant dense<0.000000e+00> : vector<128xf32>
    %11 = vector.multi_reduction <add>, %5, %cst_10 [0] : vector<128x128xf32> to vector<128xf32>
    %12 = vector.shape_cast %11 : vector<128xf32> to vector<1x128xf32>
    %13 = arith.addf %10, %12 : vector<1x128xf32>
    %c0_11 = arith.constant 0 : index
    %c0_12 = arith.constant 0 : index
    %14 = vector.load %arg5[%c0_11, %c0_12] : memref<1x128xf32, #tpu.memory_space<vmem>>, vector<1x128xf32>
    tpu.vector_store %arg5[%c0_11, %c0_12], %13 {strides = array<i32>} : memref<1x128xf32, #tpu.memory_space<vmem>>, vector<1x128xf32>,
    %c0_13 = arith.constant 0 : index
    %c0_14 = arith.constant 0 : index
    %15 = vector.load %arg6[%c0_13, %c0_14] : memref<1x128xf32, #tpu.memory_space<vmem>>, vector<1x128xf32>
    %16 = arith.mulf %5, %5 : vector<128x128xf32>
    %cst_15 = arith.constant dense<0.000000e+00> : vector<128xf32>
    %17 = vector.multi_reduction <add>, %16, %cst_15 [0] : vector<128x128xf32> to vector<128xf32>
    %18 = vector.shape_cast %17 : vector<128xf32> to vector<1x128xf32>
    %19 = arith.addf %15, %18 : vector<1x128xf32>
    %c0_16 = arith.constant 0 : index
    %c0_17 = arith.constant 0 : index
    %20 = vector.load %arg6[%c0_16, %c0_17] : memref<1x128xf32, #tpu.memory_space<vmem>>, vector<1x128xf32>
    tpu.vector_store %arg6[%c0_16, %c0_17], %19 {strides = array<i32>} : memref<1x128xf32, #tpu.memory_space<vmem>>, vector<1x128xf32>,
    return
  }
  func.func @transform_0(%arg0: i32) -> (i32, i32) {
    %c0_i32 = arith.constant 0 : i32
    %c0_i32_0 = arith.constant 0 : i32
    return %arg0, %c0_i32 : i32, i32
  }
  func.func @transform_1(%arg0: i32) -> (i32, i32) {
    %c0_i32 = arith.constant 0 : i32
    %c0_i32_0 = arith.constant 0 : i32
    %c0_i32_1 = arith.constant 0 : i32
    return %c0_i32, %c0_i32_0 : i32, i32
  }
  func.func @transform_2(%arg0: i32) -> (i32, i32) {
    %c0_i32 = arith.constant 0 : i32
    %c0_i32_0 = arith.constant 0 : i32
    %c0_i32_1 = arith.constant 0 : i32
    return %c0_i32, %c0_i32_0 : i32, i32
  }
  func.func @transform_3(%arg0: i32) -> (i32, i32) {
    %c0_i32 = arith.constant 0 : i32
    %c0_i32_0 = arith.constant 0 : i32
    return %arg0, %c0_i32 : i32, i32
  }
  func.func @transform_4(%arg0: i32) -> (i32, i32) {
    %c0_i32 = arith.constant 0 : i32
    %c0_i32_0 = arith.constant 0 : i32
    %c0_i32_1 = arith.constant 0 : i32
    return %c0_i32, %c0_i32_0 : i32, i32
  }
  func.func @transform_5(%arg0: i32) -> (i32, i32) {
    %c0_i32 = arith.constant 0 : i32
    %c0_i32_0 = arith.constant 0 : i32
    %c0_i32_1 = arith.constant 0 : i32
    return %c0_i32, %c0_i32_0 : i32, i32
  }
}

module attributes {stable_mosaic.version = 11 : i64} {
  func.func @_matmul_stats_kernel(%arg0: i32, %arg1: memref<32x384xbf16, #tpu.memory_space<vmem>>, %arg2: memref<384x128xbf16, #tpu.memory_space<vmem>>, %arg3: memref<1x128xf32, #tpu.memory_space<vmem>>, %arg4: memref<32x128xf32, #tpu.memory_space<vmem>>, %arg5: memref<1x128xf32, #tpu.memory_space<vmem>>, %arg6: memref<1x128xf32, #tpu.memory_space<vmem>>) attributes {dimension_semantics = [#tpu.dimension_semantics<arbitrary>], iteration_bounds = array<i64: 1>, scalar_prefetch = 0 : i64, scratch_operands = 0 : i64, tpu.core_type = #tpu.core_type<tc>, window_params = [{transform_indices = @transform_0, window_bounds = array<i64: 32, 384>}, {pipeline_mode = #tpu.pipeline_mode<synchronous>, transform_indices = @transform_1, window_bounds = array<i64: 384, 128>}, {pipeline_mode = #tpu.pipeline_mode<synchronous>, transform_indices = @transform_2, window_bounds = array<i64: 1, 128>}, {transform_indices = @transform_3, window_bounds = array<i64: 32, 128>}, {pipeline_mode = #tpu.pipeline_mode<synchronous>, transform_indices = @transform_4, window_bounds = array<i64: 1, 128>}, {pipeline_mode = #tpu.pipeline_mode<synchronous>, transform_indices = @transform_5, window_bounds = array<i64: 1, 128>}]} {
    %c0 = arith.constant 0 : index
    %c0_0 = arith.constant 0 : index
    %0 = vector.load %arg1[%c0, %c0_0] : memref<32x384xbf16, #tpu.memory_space<vmem>>, vector<32x384xbf16>
    %c0_1 = arith.constant 0 : index
    %c0_2 = arith.constant 0 : index
    %1 = vector.load %arg2[%c0_1, %c0_2] : memref<384x128xbf16, #tpu.memory_space<vmem>>, vector<384x128xbf16>
    %cst = arith.constant dense<0.000000e+00> : vector<32x128xf32>
    %2 = tpu.matmul %0, %1, %cst {dimension_numbers = #tpu.dot_dimension_numbers<[1], [0], [0], [1], [0, 0, 1, 1], [], []>} : vector<32x384xbf16>, vector<384x128xbf16>, vector<32x128xf32> -> vector<32x128xf32>
    %c0_3 = arith.constant 0 : index
    %c0_4 = arith.constant 0 : index
    %3 = vector.load %arg3[%c0_3, %c0_4] : memref<1x128xf32, #tpu.memory_space<vmem>>, vector<1x128xf32>
    %4 = vector.broadcast %3 : vector<1x128xf32> to vector<32x128xf32>
    %5 = arith.addf %2, %4 : vector<32x128xf32>
    %c0_5 = arith.constant 0 : index
    %c0_6 = arith.constant 0 : index
    %6 = vector.load %arg4[%c0_5, %c0_6] : memref<32x128xf32, #tpu.memory_space<vmem>>, vector<32x128xf32>
    tpu.vector_store %arg4[%c0_5, %c0_6], %5 {strides = array<i32>} : memref<32x128xf32, #tpu.memory_space<vmem>>, vector<32x128xf32>,
    %c0_i32 = arith.constant 0 : i32
    %7 = arith.cmpi eq, %arg0, %c0_i32 : i32
    %8 = arith.extui %7 : i1 to i32
    %c0_i32_7 = arith.constant 0 : i32
    %9 = arith.cmpi ne, %8, %c0_i32_7 : i32
    scf.if %9 {
      %cst_18 = arith.constant 0.000000e+00 : f32
      %21 = vector.broadcast %cst_18 : f32 to vector<1x128xf32>
      %c0_19 = arith.constant 0 : index
      %c0_20 = arith.constant 0 : index
      %22 = vector.load %arg5[%c0_19, %c0_20] : memref<1x128xf32, #tpu.memory_space<vmem>>, vector<1x128xf32>
      tpu.vector_store %arg5[%c0_19, %c0_20], %21 {strides = array<i32>} : memref<1x128xf32, #tpu.memory_space<vmem>>, vector<1x128xf32>,
      %cst_21 = arith.constant 0.000000e+00 : f32
      %23 = vector.broadcast %cst_21 : f32 to vector<1x128xf32>
      %c0_22 = arith.constant 0 : index
      %c0_23 = arith.constant 0 : index
      %24 = vector.load %arg6[%c0_22, %c0_23] : memref<1x128xf32, #tpu.memory_space<vmem>>, vector<1x128xf32>
      tpu.vector_store %arg6[%c0_22, %c0_23], %23 {strides = array<i32>} : memref<1x128xf32, #tpu.memory_space<vmem>>, vector<1x128xf32>,
    } else {
    }
    %c0_8 = arith.constant 0 : index
    %c0_9 = arith.constant 0 : index
    %10 = vector.load %arg5[%c0_8, %c0_9] : memref<1x128xf32, #tpu.memory_space<vmem>>, vector<1x128xf32>
    %cst_10 = arith.constant dense<0.000000e+00> : vector<128xf32>
    %11 = vector.multi_reduction <add>, %5, %cst_10 [0] : vector<32x128xf32> to vector<128xf32>
    %12 = vector.shape_cast %11 : vector<128xf32> to vector<1x128xf32>
    %13 = arith.addf %10, %12 : vector<1x128xf32>
    %c0_11 = arith.constant 0 : index
    %c0_12 = arith.constant 0 : index
    %14 = vector.load %arg5[%c0_11, %c0_12] : memref<1x128xf32, #tpu.memory_space<vmem>>, vector<1x128xf32>
    tpu.vector_store %arg5[%c0_11, %c0_12], %13 {strides = array<i32>} : memref<1x128xf32, #tpu.memory_space<vmem>>, vector<1x128xf32>,
    %c0_13 = arith.constant 0 : index
    %c0_14 = arith.constant 0 : index
    %15 = vector.load %arg6[%c0_13, %c0_14] : memref<1x128xf32, #tpu.memory_space<vmem>>, vector<1x128xf32>
    %16 = arith.mulf %5, %5 : vector<32x128xf32>
    %cst_15 = arith.constant dense<0.000000e+00> : vector<128xf32>
    %17 = vector.multi_reduction <add>, %16, %cst_15 [0] : vector<32x128xf32> to vector<128xf32>
    %18 = vector.shape_cast %17 : vector<128xf32> to vector<1x128xf32>
    %19 = arith.addf %15, %18 : vector<1x128xf32>
    %c0_16 = arith.constant 0 : index
    %c0_17 = arith.constant 0 : index
    %20 = vector.load %arg6[%c0_16, %c0_17] : memref<1x128xf32, #tpu.memory_space<vmem>>, vector<1x128xf32>
    tpu.vector_store %arg6[%c0_16, %c0_17], %19 {strides = array<i32>} : memref<1x128xf32, #tpu.memory_space<vmem>>, vector<1x128xf32>,
    return
  }
  func.func @transform_0(%arg0: i32) -> (i32, i32) {
    %c0_i32 = arith.constant 0 : i32
    %c0_i32_0 = arith.constant 0 : i32
    return %arg0, %c0_i32 : i32, i32
  }
  func.func @transform_1(%arg0: i32) -> (i32, i32) {
    %c0_i32 = arith.constant 0 : i32
    %c0_i32_0 = arith.constant 0 : i32
    %c0_i32_1 = arith.constant 0 : i32
    return %c0_i32, %c0_i32_0 : i32, i32
  }
  func.func @transform_2(%arg0: i32) -> (i32, i32) {
    %c0_i32 = arith.constant 0 : i32
    %c0_i32_0 = arith.constant 0 : i32
    %c0_i32_1 = arith.constant 0 : i32
    return %c0_i32, %c0_i32_0 : i32, i32
  }
  func.func @transform_3(%arg0: i32) -> (i32, i32) {
    %c0_i32 = arith.constant 0 : i32
    %c0_i32_0 = arith.constant 0 : i32
    return %arg0, %c0_i32 : i32, i32
  }
  func.func @transform_4(%arg0: i32) -> (i32, i32) {
    %c0_i32 = arith.constant 0 : i32
    %c0_i32_0 = arith.constant 0 : i32
    %c0_i32_1 = arith.constant 0 : i32
    return %c0_i32, %c0_i32_0 : i32, i32
  }
  func.func @transform_5(%arg0: i32) -> (i32, i32) {
    %c0_i32 = arith.constant 0 : i32
    %c0_i32_0 = arith.constant 0 : i32
    %c0_i32_1 = arith.constant 0 : i32
    return %c0_i32, %c0_i32_0 : i32, i32
  }
}

module attributes {stable_mosaic.version = 11 : i64} {
  func.func @_scale_shift_act_kernel(%arg0: i32, %arg1: memref<32x128xf32, #tpu.memory_space<vmem>>, %arg2: memref<1x128xf32, #tpu.memory_space<vmem>>, %arg3: memref<1x128xf32, #tpu.memory_space<vmem>>, %arg4: memref<32x128xbf16, #tpu.memory_space<vmem>>) attributes {dimension_semantics = [#tpu.dimension_semantics<parallel>], iteration_bounds = array<i64: 1>, scalar_prefetch = 0 : i64, scratch_operands = 0 : i64, tpu.core_type = #tpu.core_type<tc>, window_params = [{transform_indices = @transform_0, window_bounds = array<i64: 32, 128>}, {pipeline_mode = #tpu.pipeline_mode<synchronous>, transform_indices = @transform_1, window_bounds = array<i64: 1, 128>}, {pipeline_mode = #tpu.pipeline_mode<synchronous>, transform_indices = @transform_2, window_bounds = array<i64: 1, 128>}, {transform_indices = @transform_3, window_bounds = array<i64: 32, 128>}]} {
    %c0 = arith.constant 0 : index
    %c0_0 = arith.constant 0 : index
    %0 = vector.load %arg1[%c0, %c0_0] : memref<32x128xf32, #tpu.memory_space<vmem>>, vector<32x128xf32>
    %c0_1 = arith.constant 0 : index
    %c0_2 = arith.constant 0 : index
    %1 = vector.load %arg2[%c0_1, %c0_2] : memref<1x128xf32, #tpu.memory_space<vmem>>, vector<1x128xf32>
    %2 = vector.broadcast %1 : vector<1x128xf32> to vector<32x128xf32>
    %3 = arith.mulf %0, %2 : vector<32x128xf32>
    %c0_3 = arith.constant 0 : index
    %c0_4 = arith.constant 0 : index
    %4 = vector.load %arg3[%c0_3, %c0_4] : memref<1x128xf32, #tpu.memory_space<vmem>>, vector<1x128xf32>
    %5 = vector.broadcast %4 : vector<1x128xf32> to vector<32x128xf32>
    %6 = arith.addf %3, %5 : vector<32x128xf32>
    %cst = arith.constant 0.000000e+00 : f32
    %7 = vector.broadcast %cst : f32 to vector<32x128xf32>
    %8 = arith.cmpf ogt, %6, %7 : vector<32x128xf32>
    %cst_5 = arith.constant 0.00999999977 : f32
    %9 = vector.broadcast %cst_5 : f32 to vector<32x128xf32>
    %10 = arith.mulf %9, %6 : vector<32x128xf32>
    %11 = arith.select %8, %6, %10 : vector<32x128xi1>, vector<32x128xf32>
    %12 = arith.truncf %11 : vector<32x128xf32> to vector<32x128xbf16>
    %c0_6 = arith.constant 0 : index
    %c0_7 = arith.constant 0 : index
    %13 = vector.load %arg4[%c0_6, %c0_7] : memref<32x128xbf16, #tpu.memory_space<vmem>>, vector<32x128xbf16>
    tpu.vector_store %arg4[%c0_6, %c0_7], %12 {strides = array<i32>} : memref<32x128xbf16, #tpu.memory_space<vmem>>, vector<32x128xbf16>,
    return
  }
  func.func @transform_0(%arg0: i32) -> (i32, i32) {
    %c0_i32 = arith.constant 0 : i32
    %c0_i32_0 = arith.constant 0 : i32
    return %arg0, %c0_i32 : i32, i32
  }
  func.func @transform_1(%arg0: i32) -> (i32, i32) {
    %c0_i32 = arith.constant 0 : i32
    %c0_i32_0 = arith.constant 0 : i32
    %c0_i32_1 = arith.constant 0 : i32
    return %c0_i32, %c0_i32_0 : i32, i32
  }
  func.func @transform_2(%arg0: i32) -> (i32, i32) {
    %c0_i32 = arith.constant 0 : i32
    %c0_i32_0 = arith.constant 0 : i32
    %c0_i32_1 = arith.constant 0 : i32
    return %c0_i32, %c0_i32_0 : i32, i32
  }
  func.func @transform_3(%arg0: i32) -> (i32, i32) {
    %c0_i32 = arith.constant 0 : i32
    %c0_i32_0 = arith.constant 0 : i32
    return %arg0, %c0_i32 : i32, i32
  }
}

module attributes {stable_mosaic.version = 11 : i64} {
  func.func @_fc_reparam_kernel(%arg0: i32, %arg1: memref<8x1024xbf16, #tpu.memory_space<vmem>>, %arg2: memref<1024x256xbf16, #tpu.memory_space<vmem>>, %arg3: memref<1x256xf32, #tpu.memory_space<vmem>>, %arg4: memref<8x128xf32, #tpu.memory_space<vmem>>, %arg5: memref<8x128xf32, #tpu.memory_space<vmem>>, %arg6: memref<8x128xf32, #tpu.memory_space<vmem>>, %arg7: memref<8x128xf32, #tpu.memory_space<vmem>>) attributes {dimension_semantics = [#tpu.dimension_semantics<parallel>], iteration_bounds = array<i64: 1>, scalar_prefetch = 0 : i64, scratch_operands = 0 : i64, tpu.core_type = #tpu.core_type<tc>, window_params = [{transform_indices = @transform_0, window_bounds = array<i64: 8, 1024>}, {pipeline_mode = #tpu.pipeline_mode<synchronous>, transform_indices = @transform_1, window_bounds = array<i64: 1024, 256>}, {pipeline_mode = #tpu.pipeline_mode<synchronous>, transform_indices = @transform_2, window_bounds = array<i64: 1, 256>}, {transform_indices = @transform_3, window_bounds = array<i64: 8, 128>}, {transform_indices = @transform_4, window_bounds = array<i64: 8, 128>}, {transform_indices = @transform_5, window_bounds = array<i64: 8, 128>}, {transform_indices = @transform_6, window_bounds = array<i64: 8, 128>}]} {
    %c0 = arith.constant 0 : index
    %c0_0 = arith.constant 0 : index
    %0 = vector.load %arg1[%c0, %c0_0] : memref<8x1024xbf16, #tpu.memory_space<vmem>>, vector<8x1024xbf16>
    %c0_1 = arith.constant 0 : index
    %c0_2 = arith.constant 0 : index
    %1 = vector.load %arg2[%c0_1, %c0_2] : memref<1024x256xbf16, #tpu.memory_space<vmem>>, vector<1024x256xbf16>
    %cst = arith.constant dense<0.000000e+00> : vector<8x256xf32>
    %2 = tpu.matmul %0, %1, %cst {dimension_numbers = #tpu.dot_dimension_numbers<[1], [0], [0], [1], [0, 0, 1, 1], [], []>} : vector<8x1024xbf16>, vector<1024x256xbf16>, vector<8x256xf32> -> vector<8x256xf32>
    %c0_3 = arith.constant 0 : index
    %c0_4 = arith.constant 0 : index
    %3 = vector.load %arg3[%c0_3, %c0_4] : memref<1x256xf32, #tpu.memory_space<vmem>>, vector<1x256xf32>
    %4 = vector.broadcast %3 : vector<1x256xf32> to vector<8x256xf32>
    %5 = arith.addf %2, %4 : vector<8x256xf32>
    %6 = vector.extract_strided_slice %5 {offsets = [0, 0], sizes = [8, 128], strides = [1, 1]} : vector<8x256xf32> to vector<8x128xf32>
    %7 = vector.extract_strided_slice %5 {offsets = [0, 128], sizes = [8, 128], strides = [1, 1]} : vector<8x256xf32> to vector<8x128xf32>
    %c0_5 = arith.constant 0 : index
    %c0_6 = arith.constant 0 : index
    %8 = vector.load %arg5[%c0_5, %c0_6] : memref<8x128xf32, #tpu.memory_space<vmem>>, vector<8x128xf32>
    tpu.vector_store %arg5[%c0_5, %c0_6], %6 {strides = array<i32>} : memref<8x128xf32, #tpu.memory_space<vmem>>, vector<8x128xf32>,
    %c0_7 = arith.constant 0 : index
    %c0_8 = arith.constant 0 : index
    %9 = vector.load %arg6[%c0_7, %c0_8] : memref<8x128xf32, #tpu.memory_space<vmem>>, vector<8x128xf32>
    tpu.vector_store %arg6[%c0_7, %c0_8], %7 {strides = array<i32>} : memref<8x128xf32, #tpu.memory_space<vmem>>, vector<8x128xf32>,
    %c0_9 = arith.constant 0 : index
    %c0_10 = arith.constant 0 : index
    %10 = vector.load %arg4[%c0_9, %c0_10] : memref<8x128xf32, #tpu.memory_space<vmem>>, vector<8x128xf32>
    %cst_11 = arith.constant 5.000000e-01 : f32
    %11 = vector.broadcast %cst_11 : f32 to vector<8x128xf32>
    %12 = arith.mulf %11, %7 : vector<8x128xf32>
    %13 = math.exp %12 : vector<8x128xf32>
    %14 = arith.mulf %10, %13 : vector<8x128xf32>
    %15 = arith.addf %6, %14 : vector<8x128xf32>
    %c0_12 = arith.constant 0 : index
    %c0_13 = arith.constant 0 : index
    %16 = vector.load %arg7[%c0_12, %c0_13] : memref<8x128xf32, #tpu.memory_space<vmem>>, vector<8x128xf32>
    tpu.vector_store %arg7[%c0_12, %c0_13], %15 {strides = array<i32>} : memref<8x128xf32, #tpu.memory_space<vmem>>, vector<8x128xf32>,
    return
  }
  func.func @transform_0(%arg0: i32) -> (i32, i32) {
    %c0_i32 = arith.constant 0 : i32
    %c0_i32_0 = arith.constant 0 : i32
    return %arg0, %c0_i32 : i32, i32
  }
  func.func @transform_1(%arg0: i32) -> (i32, i32) {
    %c0_i32 = arith.constant 0 : i32
    %c0_i32_0 = arith.constant 0 : i32
    %c0_i32_1 = arith.constant 0 : i32
    return %c0_i32, %c0_i32_0 : i32, i32
  }
  func.func @transform_2(%arg0: i32) -> (i32, i32) {
    %c0_i32 = arith.constant 0 : i32
    %c0_i32_0 = arith.constant 0 : i32
    %c0_i32_1 = arith.constant 0 : i32
    return %c0_i32, %c0_i32_0 : i32, i32
  }
  func.func @transform_3(%arg0: i32) -> (i32, i32) {
    %c0_i32 = arith.constant 0 : i32
    %c0_i32_0 = arith.constant 0 : i32
    return %arg0, %c0_i32 : i32, i32
  }
  func.func @transform_4(%arg0: i32) -> (i32, i32) {
    %c0_i32 = arith.constant 0 : i32
    %c0_i32_0 = arith.constant 0 : i32
    return %arg0, %c0_i32 : i32, i32
  }
  func.func @transform_5(%arg0: i32) -> (i32, i32) {
    %c0_i32 = arith.constant 0 : i32
    %c0_i32_0 = arith.constant 0 : i32
    return %arg0, %c0_i32 : i32, i32
  }
  func.func @transform_6(%arg0: i32) -> (i32, i32) {
    %c0_i32 = arith.constant 0 : i32
    %c0_i32_0 = arith.constant 0 : i32
    return %arg0, %c0_i32 : i32, i32
  }
}

module attributes {stable_mosaic.version = 11 : i64} {
  func.func @_matmul_act_kernel(%arg0: i32, %arg1: memref<8x128xbf16, #tpu.memory_space<vmem>>, %arg2: memref<128x1024xbf16, #tpu.memory_space<vmem>>, %arg3: memref<1x1024xf32, #tpu.memory_space<vmem>>, %arg4: memref<8x1024xbf16, #tpu.memory_space<vmem>>) attributes {dimension_semantics = [#tpu.dimension_semantics<parallel>], iteration_bounds = array<i64: 1>, scalar_prefetch = 0 : i64, scratch_operands = 0 : i64, tpu.core_type = #tpu.core_type<tc>, window_params = [{transform_indices = @transform_0, window_bounds = array<i64: 8, 128>}, {pipeline_mode = #tpu.pipeline_mode<synchronous>, transform_indices = @transform_1, window_bounds = array<i64: 128, 1024>}, {pipeline_mode = #tpu.pipeline_mode<synchronous>, transform_indices = @transform_2, window_bounds = array<i64: 1, 1024>}, {transform_indices = @transform_3, window_bounds = array<i64: 8, 1024>}]} {
    %c0 = arith.constant 0 : index
    %c0_0 = arith.constant 0 : index
    %0 = vector.load %arg1[%c0, %c0_0] : memref<8x128xbf16, #tpu.memory_space<vmem>>, vector<8x128xbf16>
    %c0_1 = arith.constant 0 : index
    %c0_2 = arith.constant 0 : index
    %1 = vector.load %arg2[%c0_1, %c0_2] : memref<128x1024xbf16, #tpu.memory_space<vmem>>, vector<128x1024xbf16>
    %cst = arith.constant dense<0.000000e+00> : vector<8x1024xf32>
    %2 = tpu.matmul %0, %1, %cst {dimension_numbers = #tpu.dot_dimension_numbers<[1], [0], [0], [1], [0, 0, 1, 1], [], []>} : vector<8x128xbf16>, vector<128x1024xbf16>, vector<8x1024xf32> -> vector<8x1024xf32>
    %c0_3 = arith.constant 0 : index
    %c0_4 = arith.constant 0 : index
    %3 = vector.load %arg3[%c0_3, %c0_4] : memref<1x1024xf32, #tpu.memory_space<vmem>>, vector<1x1024xf32>
    %4 = vector.broadcast %3 : vector<1x1024xf32> to vector<8x1024xf32>
    %5 = arith.addf %2, %4 : vector<8x1024xf32>
    %6 = arith.truncf %5 : vector<8x1024xf32> to vector<8x1024xbf16>
    %c0_5 = arith.constant 0 : index
    %c0_6 = arith.constant 0 : index
    %7 = vector.load %arg4[%c0_5, %c0_6] : memref<8x1024xbf16, #tpu.memory_space<vmem>>, vector<8x1024xbf16>
    tpu.vector_store %arg4[%c0_5, %c0_6], %6 {strides = array<i32>} : memref<8x1024xbf16, #tpu.memory_space<vmem>>, vector<8x1024xbf16>,
    return
  }
  func.func @transform_0(%arg0: i32) -> (i32, i32) {
    %c0_i32 = arith.constant 0 : i32
    %c0_i32_0 = arith.constant 0 : i32
    return %arg0, %c0_i32 : i32, i32
  }
  func.func @transform_1(%arg0: i32) -> (i32, i32) {
    %c0_i32 = arith.constant 0 : i32
    %c0_i32_0 = arith.constant 0 : i32
    %c0_i32_1 = arith.constant 0 : i32
    return %c0_i32, %c0_i32_0 : i32, i32
  }
  func.func @transform_2(%arg0: i32) -> (i32, i32) {
    %c0_i32 = arith.constant 0 : i32
    %c0_i32_0 = arith.constant 0 : i32
    %c0_i32_1 = arith.constant 0 : i32
    return %c0_i32, %c0_i32_0 : i32, i32
  }
  func.func @transform_3(%arg0: i32) -> (i32, i32) {
    %c0_i32 = arith.constant 0 : i32
    %c0_i32_0 = arith.constant 0 : i32
    return %arg0, %c0_i32 : i32, i32
  }
}

module attributes {stable_mosaic.version = 11 : i64} {
  func.func @_matmul_stats_kernel(%arg0: i32, %arg1: memref<32x256xbf16, #tpu.memory_space<vmem>>, %arg2: memref<256x512xbf16, #tpu.memory_space<vmem>>, %arg3: memref<1x512xf32, #tpu.memory_space<vmem>>, %arg4: memref<32x512xf32, #tpu.memory_space<vmem>>, %arg5: memref<1x512xf32, #tpu.memory_space<vmem>>, %arg6: memref<1x512xf32, #tpu.memory_space<vmem>>) attributes {dimension_semantics = [#tpu.dimension_semantics<arbitrary>], iteration_bounds = array<i64: 1>, scalar_prefetch = 0 : i64, scratch_operands = 0 : i64, tpu.core_type = #tpu.core_type<tc>, window_params = [{transform_indices = @transform_0, window_bounds = array<i64: 32, 256>}, {pipeline_mode = #tpu.pipeline_mode<synchronous>, transform_indices = @transform_1, window_bounds = array<i64: 256, 512>}, {pipeline_mode = #tpu.pipeline_mode<synchronous>, transform_indices = @transform_2, window_bounds = array<i64: 1, 512>}, {transform_indices = @transform_3, window_bounds = array<i64: 32, 512>}, {pipeline_mode = #tpu.pipeline_mode<synchronous>, transform_indices = @transform_4, window_bounds = array<i64: 1, 512>}, {pipeline_mode = #tpu.pipeline_mode<synchronous>, transform_indices = @transform_5, window_bounds = array<i64: 1, 512>}]} {
    %c0 = arith.constant 0 : index
    %c0_0 = arith.constant 0 : index
    %0 = vector.load %arg1[%c0, %c0_0] : memref<32x256xbf16, #tpu.memory_space<vmem>>, vector<32x256xbf16>
    %c0_1 = arith.constant 0 : index
    %c0_2 = arith.constant 0 : index
    %1 = vector.load %arg2[%c0_1, %c0_2] : memref<256x512xbf16, #tpu.memory_space<vmem>>, vector<256x512xbf16>
    %cst = arith.constant dense<0.000000e+00> : vector<32x512xf32>
    %2 = tpu.matmul %0, %1, %cst {dimension_numbers = #tpu.dot_dimension_numbers<[1], [0], [0], [1], [0, 0, 1, 1], [], []>} : vector<32x256xbf16>, vector<256x512xbf16>, vector<32x512xf32> -> vector<32x512xf32>
    %c0_3 = arith.constant 0 : index
    %c0_4 = arith.constant 0 : index
    %3 = vector.load %arg3[%c0_3, %c0_4] : memref<1x512xf32, #tpu.memory_space<vmem>>, vector<1x512xf32>
    %4 = vector.broadcast %3 : vector<1x512xf32> to vector<32x512xf32>
    %5 = arith.addf %2, %4 : vector<32x512xf32>
    %c0_5 = arith.constant 0 : index
    %c0_6 = arith.constant 0 : index
    %6 = vector.load %arg4[%c0_5, %c0_6] : memref<32x512xf32, #tpu.memory_space<vmem>>, vector<32x512xf32>
    tpu.vector_store %arg4[%c0_5, %c0_6], %5 {strides = array<i32>} : memref<32x512xf32, #tpu.memory_space<vmem>>, vector<32x512xf32>,
    %c0_i32 = arith.constant 0 : i32
    %7 = arith.cmpi eq, %arg0, %c0_i32 : i32
    %8 = arith.extui %7 : i1 to i32
    %c0_i32_7 = arith.constant 0 : i32
    %9 = arith.cmpi ne, %8, %c0_i32_7 : i32
    scf.if %9 {
      %cst_18 = arith.constant 0.000000e+00 : f32
      %21 = vector.broadcast %cst_18 : f32 to vector<1x512xf32>
      %c0_19 = arith.constant 0 : index
      %c0_20 = arith.constant 0 : index
      %22 = vector.load %arg5[%c0_19, %c0_20] : memref<1x512xf32, #tpu.memory_space<vmem>>, vector<1x512xf32>
      tpu.vector_store %arg5[%c0_19, %c0_20], %21 {strides = array<i32>} : memref<1x512xf32, #tpu.memory_space<vmem>>, vector<1x512xf32>,
      %cst_21 = arith.constant 0.000000e+00 : f32
      %23 = vector.broadcast %cst_21 : f32 to vector<1x512xf32>
      %c0_22 = arith.constant 0 : index
      %c0_23 = arith.constant 0 : index
      %24 = vector.load %arg6[%c0_22, %c0_23] : memref<1x512xf32, #tpu.memory_space<vmem>>, vector<1x512xf32>
      tpu.vector_store %arg6[%c0_22, %c0_23], %23 {strides = array<i32>} : memref<1x512xf32, #tpu.memory_space<vmem>>, vector<1x512xf32>,
    } else {
    }
    %c0_8 = arith.constant 0 : index
    %c0_9 = arith.constant 0 : index
    %10 = vector.load %arg5[%c0_8, %c0_9] : memref<1x512xf32, #tpu.memory_space<vmem>>, vector<1x512xf32>
    %cst_10 = arith.constant dense<0.000000e+00> : vector<512xf32>
    %11 = vector.multi_reduction <add>, %5, %cst_10 [0] : vector<32x512xf32> to vector<512xf32>
    %12 = vector.shape_cast %11 : vector<512xf32> to vector<1x512xf32>
    %13 = arith.addf %10, %12 : vector<1x512xf32>
    %c0_11 = arith.constant 0 : index
    %c0_12 = arith.constant 0 : index
    %14 = vector.load %arg5[%c0_11, %c0_12] : memref<1x512xf32, #tpu.memory_space<vmem>>, vector<1x512xf32>
    tpu.vector_store %arg5[%c0_11, %c0_12], %13 {strides = array<i32>} : memref<1x512xf32, #tpu.memory_space<vmem>>, vector<1x512xf32>,
    %c0_13 = arith.constant 0 : index
    %c0_14 = arith.constant 0 : index
    %15 = vector.load %arg6[%c0_13, %c0_14] : memref<1x512xf32, #tpu.memory_space<vmem>>, vector<1x512xf32>
    %16 = arith.mulf %5, %5 : vector<32x512xf32>
    %cst_15 = arith.constant dense<0.000000e+00> : vector<512xf32>
    %17 = vector.multi_reduction <add>, %16, %cst_15 [0] : vector<32x512xf32> to vector<512xf32>
    %18 = vector.shape_cast %17 : vector<512xf32> to vector<1x512xf32>
    %19 = arith.addf %15, %18 : vector<1x512xf32>
    %c0_16 = arith.constant 0 : index
    %c0_17 = arith.constant 0 : index
    %20 = vector.load %arg6[%c0_16, %c0_17] : memref<1x512xf32, #tpu.memory_space<vmem>>, vector<1x512xf32>
    tpu.vector_store %arg6[%c0_16, %c0_17], %19 {strides = array<i32>} : memref<1x512xf32, #tpu.memory_space<vmem>>, vector<1x512xf32>,
    return
  }
  func.func @transform_0(%arg0: i32) -> (i32, i32) {
    %c0_i32 = arith.constant 0 : i32
    %c0_i32_0 = arith.constant 0 : i32
    return %arg0, %c0_i32 : i32, i32
  }
  func.func @transform_1(%arg0: i32) -> (i32, i32) {
    %c0_i32 = arith.constant 0 : i32
    %c0_i32_0 = arith.constant 0 : i32
    %c0_i32_1 = arith.constant 0 : i32
    return %c0_i32, %c0_i32_0 : i32, i32
  }
  func.func @transform_2(%arg0: i32) -> (i32, i32) {
    %c0_i32 = arith.constant 0 : i32
    %c0_i32_0 = arith.constant 0 : i32
    %c0_i32_1 = arith.constant 0 : i32
    return %c0_i32, %c0_i32_0 : i32, i32
  }
  func.func @transform_3(%arg0: i32) -> (i32, i32) {
    %c0_i32 = arith.constant 0 : i32
    %c0_i32_0 = arith.constant 0 : i32
    return %arg0, %c0_i32 : i32, i32
  }
  func.func @transform_4(%arg0: i32) -> (i32, i32) {
    %c0_i32 = arith.constant 0 : i32
    %c0_i32_0 = arith.constant 0 : i32
    %c0_i32_1 = arith.constant 0 : i32
    return %c0_i32, %c0_i32_0 : i32, i32
  }
  func.func @transform_5(%arg0: i32) -> (i32, i32) {
    %c0_i32 = arith.constant 0 : i32
    %c0_i32_0 = arith.constant 0 : i32
    %c0_i32_1 = arith.constant 0 : i32
    return %c0_i32, %c0_i32_0 : i32, i32
  }
}

module attributes {stable_mosaic.version = 11 : i64} {
  func.func @_scale_shift_act_kernel(%arg0: i32, %arg1: memref<32x512xf32, #tpu.memory_space<vmem>>, %arg2: memref<1x512xf32, #tpu.memory_space<vmem>>, %arg3: memref<1x512xf32, #tpu.memory_space<vmem>>, %arg4: memref<32x512xbf16, #tpu.memory_space<vmem>>) attributes {dimension_semantics = [#tpu.dimension_semantics<parallel>], iteration_bounds = array<i64: 1>, scalar_prefetch = 0 : i64, scratch_operands = 0 : i64, tpu.core_type = #tpu.core_type<tc>, window_params = [{transform_indices = @transform_0, window_bounds = array<i64: 32, 512>}, {pipeline_mode = #tpu.pipeline_mode<synchronous>, transform_indices = @transform_1, window_bounds = array<i64: 1, 512>}, {pipeline_mode = #tpu.pipeline_mode<synchronous>, transform_indices = @transform_2, window_bounds = array<i64: 1, 512>}, {transform_indices = @transform_3, window_bounds = array<i64: 32, 512>}]} {
    %c0 = arith.constant 0 : index
    %c0_0 = arith.constant 0 : index
    %0 = vector.load %arg1[%c0, %c0_0] : memref<32x512xf32, #tpu.memory_space<vmem>>, vector<32x512xf32>
    %c0_1 = arith.constant 0 : index
    %c0_2 = arith.constant 0 : index
    %1 = vector.load %arg2[%c0_1, %c0_2] : memref<1x512xf32, #tpu.memory_space<vmem>>, vector<1x512xf32>
    %2 = vector.broadcast %1 : vector<1x512xf32> to vector<32x512xf32>
    %3 = arith.mulf %0, %2 : vector<32x512xf32>
    %c0_3 = arith.constant 0 : index
    %c0_4 = arith.constant 0 : index
    %4 = vector.load %arg3[%c0_3, %c0_4] : memref<1x512xf32, #tpu.memory_space<vmem>>, vector<1x512xf32>
    %5 = vector.broadcast %4 : vector<1x512xf32> to vector<32x512xf32>
    %6 = arith.addf %3, %5 : vector<32x512xf32>
    %cst = arith.constant 0.000000e+00 : f32
    %7 = vector.broadcast %cst : f32 to vector<32x512xf32>
    %8 = arith.cmpf ogt, %6, %7 : vector<32x512xf32>
    %cst_5 = arith.constant 0.00999999977 : f32
    %9 = vector.broadcast %cst_5 : f32 to vector<32x512xf32>
    %10 = arith.mulf %9, %6 : vector<32x512xf32>
    %11 = arith.select %8, %6, %10 : vector<32x512xi1>, vector<32x512xf32>
    %12 = arith.truncf %11 : vector<32x512xf32> to vector<32x512xbf16>
    %c0_6 = arith.constant 0 : index
    %c0_7 = arith.constant 0 : index
    %13 = vector.load %arg4[%c0_6, %c0_7] : memref<32x512xbf16, #tpu.memory_space<vmem>>, vector<32x512xbf16>
    tpu.vector_store %arg4[%c0_6, %c0_7], %12 {strides = array<i32>} : memref<32x512xbf16, #tpu.memory_space<vmem>>, vector<32x512xbf16>,
    return
  }
  func.func @transform_0(%arg0: i32) -> (i32, i32) {
    %c0_i32 = arith.constant 0 : i32
    %c0_i32_0 = arith.constant 0 : i32
    return %arg0, %c0_i32 : i32, i32
  }
  func.func @transform_1(%arg0: i32) -> (i32, i32) {
    %c0_i32 = arith.constant 0 : i32
    %c0_i32_0 = arith.constant 0 : i32
    %c0_i32_1 = arith.constant 0 : i32
    return %c0_i32, %c0_i32_0 : i32, i32
  }
  func.func @transform_2(%arg0: i32) -> (i32, i32) {
    %c0_i32 = arith.constant 0 : i32
    %c0_i32_0 = arith.constant 0 : i32
    %c0_i32_1 = arith.constant 0 : i32
    return %c0_i32, %c0_i32_0 : i32, i32
  }
  func.func @transform_3(%arg0: i32) -> (i32, i32) {
    %c0_i32 = arith.constant 0 : i32
    %c0_i32_0 = arith.constant 0 : i32
    return %arg0, %c0_i32 : i32, i32
  }
}

module attributes {stable_mosaic.version = 11 : i64} {
  func.func @_scale_shift_act_kernel(%arg0: i32, %arg1: memref<128x512xf32, #tpu.memory_space<vmem>>, %arg2: memref<1x512xf32, #tpu.memory_space<vmem>>, %arg3: memref<1x512xf32, #tpu.memory_space<vmem>>, %arg4: memref<128x512xbf16, #tpu.memory_space<vmem>>) attributes {dimension_semantics = [#tpu.dimension_semantics<parallel>], iteration_bounds = array<i64: 1>, scalar_prefetch = 0 : i64, scratch_operands = 0 : i64, tpu.core_type = #tpu.core_type<tc>, window_params = [{transform_indices = @transform_0, window_bounds = array<i64: 128, 512>}, {pipeline_mode = #tpu.pipeline_mode<synchronous>, transform_indices = @transform_1, window_bounds = array<i64: 1, 512>}, {pipeline_mode = #tpu.pipeline_mode<synchronous>, transform_indices = @transform_2, window_bounds = array<i64: 1, 512>}, {transform_indices = @transform_3, window_bounds = array<i64: 128, 512>}]} {
    %c0 = arith.constant 0 : index
    %c0_0 = arith.constant 0 : index
    %0 = vector.load %arg1[%c0, %c0_0] : memref<128x512xf32, #tpu.memory_space<vmem>>, vector<128x512xf32>
    %c0_1 = arith.constant 0 : index
    %c0_2 = arith.constant 0 : index
    %1 = vector.load %arg2[%c0_1, %c0_2] : memref<1x512xf32, #tpu.memory_space<vmem>>, vector<1x512xf32>
    %2 = vector.broadcast %1 : vector<1x512xf32> to vector<128x512xf32>
    %3 = arith.mulf %0, %2 : vector<128x512xf32>
    %c0_3 = arith.constant 0 : index
    %c0_4 = arith.constant 0 : index
    %4 = vector.load %arg3[%c0_3, %c0_4] : memref<1x512xf32, #tpu.memory_space<vmem>>, vector<1x512xf32>
    %5 = vector.broadcast %4 : vector<1x512xf32> to vector<128x512xf32>
    %6 = arith.addf %3, %5 : vector<128x512xf32>
    %cst = arith.constant 0.000000e+00 : f32
    %7 = vector.broadcast %cst : f32 to vector<128x512xf32>
    %8 = arith.cmpf ogt, %6, %7 : vector<128x512xf32>
    %cst_5 = arith.constant 0.00999999977 : f32
    %9 = vector.broadcast %cst_5 : f32 to vector<128x512xf32>
    %10 = arith.mulf %9, %6 : vector<128x512xf32>
    %11 = arith.select %8, %6, %10 : vector<128x512xi1>, vector<128x512xf32>
    %12 = arith.truncf %11 : vector<128x512xf32> to vector<128x512xbf16>
    %c0_6 = arith.constant 0 : index
    %c0_7 = arith.constant 0 : index
    %13 = vector.load %arg4[%c0_6, %c0_7] : memref<128x512xbf16, #tpu.memory_space<vmem>>, vector<128x512xbf16>
    tpu.vector_store %arg4[%c0_6, %c0_7], %12 {strides = array<i32>} : memref<128x512xbf16, #tpu.memory_space<vmem>>, vector<128x512xbf16>,
    return
  }
  func.func @transform_0(%arg0: i32) -> (i32, i32) {
    %c0_i32 = arith.constant 0 : i32
    %c0_i32_0 = arith.constant 0 : i32
    return %arg0, %c0_i32 : i32, i32
  }
  func.func @transform_1(%arg0: i32) -> (i32, i32) {
    %c0_i32 = arith.constant 0 : i32
    %c0_i32_0 = arith.constant 0 : i32
    %c0_i32_1 = arith.constant 0 : i32
    return %c0_i32, %c0_i32_0 : i32, i32
  }
  func.func @transform_2(%arg0: i32) -> (i32, i32) {
    %c0_i32 = arith.constant 0 : i32
    %c0_i32_0 = arith.constant 0 : i32
    %c0_i32_1 = arith.constant 0 : i32
    return %c0_i32, %c0_i32_0 : i32, i32
  }
  func.func @transform_3(%arg0: i32) -> (i32, i32) {
    %c0_i32 = arith.constant 0 : i32
    %c0_i32_0 = arith.constant 0 : i32
    return %arg0, %c0_i32 : i32, i32
  }
}

module attributes {stable_mosaic.version = 11 : i64} {
  func.func @_matmul_stats_kernel(%arg0: i32, %arg1: memref<128x128xbf16, #tpu.memory_space<vmem>>, %arg2: memref<128x512xbf16, #tpu.memory_space<vmem>>, %arg3: memref<1x512xf32, #tpu.memory_space<vmem>>, %arg4: memref<128x512xf32, #tpu.memory_space<vmem>>, %arg5: memref<1x512xf32, #tpu.memory_space<vmem>>, %arg6: memref<1x512xf32, #tpu.memory_space<vmem>>) attributes {dimension_semantics = [#tpu.dimension_semantics<arbitrary>], iteration_bounds = array<i64: 1>, scalar_prefetch = 0 : i64, scratch_operands = 0 : i64, tpu.core_type = #tpu.core_type<tc>, window_params = [{transform_indices = @transform_0, window_bounds = array<i64: 128, 128>}, {pipeline_mode = #tpu.pipeline_mode<synchronous>, transform_indices = @transform_1, window_bounds = array<i64: 128, 512>}, {pipeline_mode = #tpu.pipeline_mode<synchronous>, transform_indices = @transform_2, window_bounds = array<i64: 1, 512>}, {transform_indices = @transform_3, window_bounds = array<i64: 128, 512>}, {pipeline_mode = #tpu.pipeline_mode<synchronous>, transform_indices = @transform_4, window_bounds = array<i64: 1, 512>}, {pipeline_mode = #tpu.pipeline_mode<synchronous>, transform_indices = @transform_5, window_bounds = array<i64: 1, 512>}]} {
    %c0 = arith.constant 0 : index
    %c0_0 = arith.constant 0 : index
    %0 = vector.load %arg1[%c0, %c0_0] : memref<128x128xbf16, #tpu.memory_space<vmem>>, vector<128x128xbf16>
    %c0_1 = arith.constant 0 : index
    %c0_2 = arith.constant 0 : index
    %1 = vector.load %arg2[%c0_1, %c0_2] : memref<128x512xbf16, #tpu.memory_space<vmem>>, vector<128x512xbf16>
    %cst = arith.constant dense<0.000000e+00> : vector<128x512xf32>
    %2 = tpu.matmul %0, %1, %cst {dimension_numbers = #tpu.dot_dimension_numbers<[1], [0], [0], [1], [0, 0, 1, 1], [], []>} : vector<128x128xbf16>, vector<128x512xbf16>, vector<128x512xf32> -> vector<128x512xf32>
    %c0_3 = arith.constant 0 : index
    %c0_4 = arith.constant 0 : index
    %3 = vector.load %arg3[%c0_3, %c0_4] : memref<1x512xf32, #tpu.memory_space<vmem>>, vector<1x512xf32>
    %4 = vector.broadcast %3 : vector<1x512xf32> to vector<128x512xf32>
    %5 = arith.addf %2, %4 : vector<128x512xf32>
    %c0_5 = arith.constant 0 : index
    %c0_6 = arith.constant 0 : index
    %6 = vector.load %arg4[%c0_5, %c0_6] : memref<128x512xf32, #tpu.memory_space<vmem>>, vector<128x512xf32>
    tpu.vector_store %arg4[%c0_5, %c0_6], %5 {strides = array<i32>} : memref<128x512xf32, #tpu.memory_space<vmem>>, vector<128x512xf32>,
    %c0_i32 = arith.constant 0 : i32
    %7 = arith.cmpi eq, %arg0, %c0_i32 : i32
    %8 = arith.extui %7 : i1 to i32
    %c0_i32_7 = arith.constant 0 : i32
    %9 = arith.cmpi ne, %8, %c0_i32_7 : i32
    scf.if %9 {
      %cst_18 = arith.constant 0.000000e+00 : f32
      %21 = vector.broadcast %cst_18 : f32 to vector<1x512xf32>
      %c0_19 = arith.constant 0 : index
      %c0_20 = arith.constant 0 : index
      %22 = vector.load %arg5[%c0_19, %c0_20] : memref<1x512xf32, #tpu.memory_space<vmem>>, vector<1x512xf32>
      tpu.vector_store %arg5[%c0_19, %c0_20], %21 {strides = array<i32>} : memref<1x512xf32, #tpu.memory_space<vmem>>, vector<1x512xf32>,
      %cst_21 = arith.constant 0.000000e+00 : f32
      %23 = vector.broadcast %cst_21 : f32 to vector<1x512xf32>
      %c0_22 = arith.constant 0 : index
      %c0_23 = arith.constant 0 : index
      %24 = vector.load %arg6[%c0_22, %c0_23] : memref<1x512xf32, #tpu.memory_space<vmem>>, vector<1x512xf32>
      tpu.vector_store %arg6[%c0_22, %c0_23], %23 {strides = array<i32>} : memref<1x512xf32, #tpu.memory_space<vmem>>, vector<1x512xf32>,
    } else {
    }
    %c0_8 = arith.constant 0 : index
    %c0_9 = arith.constant 0 : index
    %10 = vector.load %arg5[%c0_8, %c0_9] : memref<1x512xf32, #tpu.memory_space<vmem>>, vector<1x512xf32>
    %cst_10 = arith.constant dense<0.000000e+00> : vector<512xf32>
    %11 = vector.multi_reduction <add>, %5, %cst_10 [0] : vector<128x512xf32> to vector<512xf32>
    %12 = vector.shape_cast %11 : vector<512xf32> to vector<1x512xf32>
    %13 = arith.addf %10, %12 : vector<1x512xf32>
    %c0_11 = arith.constant 0 : index
    %c0_12 = arith.constant 0 : index
    %14 = vector.load %arg5[%c0_11, %c0_12] : memref<1x512xf32, #tpu.memory_space<vmem>>, vector<1x512xf32>
    tpu.vector_store %arg5[%c0_11, %c0_12], %13 {strides = array<i32>} : memref<1x512xf32, #tpu.memory_space<vmem>>, vector<1x512xf32>,
    %c0_13 = arith.constant 0 : index
    %c0_14 = arith.constant 0 : index
    %15 = vector.load %arg6[%c0_13, %c0_14] : memref<1x512xf32, #tpu.memory_space<vmem>>, vector<1x512xf32>
    %16 = arith.mulf %5, %5 : vector<128x512xf32>
    %cst_15 = arith.constant dense<0.000000e+00> : vector<512xf32>
    %17 = vector.multi_reduction <add>, %16, %cst_15 [0] : vector<128x512xf32> to vector<512xf32>
    %18 = vector.shape_cast %17 : vector<512xf32> to vector<1x512xf32>
    %19 = arith.addf %15, %18 : vector<1x512xf32>
    %c0_16 = arith.constant 0 : index
    %c0_17 = arith.constant 0 : index
    %20 = vector.load %arg6[%c0_16, %c0_17] : memref<1x512xf32, #tpu.memory_space<vmem>>, vector<1x512xf32>
    tpu.vector_store %arg6[%c0_16, %c0_17], %19 {strides = array<i32>} : memref<1x512xf32, #tpu.memory_space<vmem>>, vector<1x512xf32>,
    return
  }
  func.func @transform_0(%arg0: i32) -> (i32, i32) {
    %c0_i32 = arith.constant 0 : i32
    %c0_i32_0 = arith.constant 0 : i32
    return %arg0, %c0_i32 : i32, i32
  }
  func.func @transform_1(%arg0: i32) -> (i32, i32) {
    %c0_i32 = arith.constant 0 : i32
    %c0_i32_0 = arith.constant 0 : i32
    %c0_i32_1 = arith.constant 0 : i32
    return %c0_i32, %c0_i32_0 : i32, i32
  }
  func.func @transform_2(%arg0: i32) -> (i32, i32) {
    %c0_i32 = arith.constant 0 : i32
    %c0_i32_0 = arith.constant 0 : i32
    %c0_i32_1 = arith.constant 0 : i32
    return %c0_i32, %c0_i32_0 : i32, i32
  }
  func.func @transform_3(%arg0: i32) -> (i32, i32) {
    %c0_i32 = arith.constant 0 : i32
    %c0_i32_0 = arith.constant 0 : i32
    return %arg0, %c0_i32 : i32, i32
  }
  func.func @transform_4(%arg0: i32) -> (i32, i32) {
    %c0_i32 = arith.constant 0 : i32
    %c0_i32_0 = arith.constant 0 : i32
    %c0_i32_1 = arith.constant 0 : i32
    return %c0_i32, %c0_i32_0 : i32, i32
  }
  func.func @transform_5(%arg0: i32) -> (i32, i32) {
    %c0_i32 = arith.constant 0 : i32
    %c0_i32_0 = arith.constant 0 : i32
    %c0_i32_1 = arith.constant 0 : i32
    return %c0_i32, %c0_i32_0 : i32, i32
  }
}

module attributes {stable_mosaic.version = 11 : i64} {
  func.func @_matmul_act_kernel(%arg0: i32, %arg1: memref<256x384xbf16, #tpu.memory_space<vmem>>, %arg2: memref<384x128xbf16, #tpu.memory_space<vmem>>, %arg3: memref<1x128xf32, #tpu.memory_space<vmem>>, %arg4: memref<256x128xf32, #tpu.memory_space<vmem>>) attributes {dimension_semantics = [#tpu.dimension_semantics<parallel>], iteration_bounds = array<i64: 2>, scalar_prefetch = 0 : i64, scratch_operands = 0 : i64, tpu.core_type = #tpu.core_type<tc>, window_params = [{transform_indices = @transform_0, window_bounds = array<i64: 256, 384>}, {pipeline_mode = #tpu.pipeline_mode<synchronous>, transform_indices = @transform_1, window_bounds = array<i64: 384, 128>}, {pipeline_mode = #tpu.pipeline_mode<synchronous>, transform_indices = @transform_2, window_bounds = array<i64: 1, 128>}, {transform_indices = @transform_3, window_bounds = array<i64: 256, 128>}]} {
    %c0 = arith.constant 0 : index
    %c0_0 = arith.constant 0 : index
    %0 = vector.load %arg1[%c0, %c0_0] : memref<256x384xbf16, #tpu.memory_space<vmem>>, vector<256x384xbf16>
    %c0_1 = arith.constant 0 : index
    %c0_2 = arith.constant 0 : index
    %1 = vector.load %arg2[%c0_1, %c0_2] : memref<384x128xbf16, #tpu.memory_space<vmem>>, vector<384x128xbf16>
    %cst = arith.constant dense<0.000000e+00> : vector<256x128xf32>
    %2 = tpu.matmul %0, %1, %cst {dimension_numbers = #tpu.dot_dimension_numbers<[1], [0], [0], [1], [0, 0, 1, 1], [], []>} : vector<256x384xbf16>, vector<384x128xbf16>, vector<256x128xf32> -> vector<256x128xf32>
    %c0_3 = arith.constant 0 : index
    %c0_4 = arith.constant 0 : index
    %3 = vector.load %arg3[%c0_3, %c0_4] : memref<1x128xf32, #tpu.memory_space<vmem>>, vector<1x128xf32>
    %4 = vector.broadcast %3 : vector<1x128xf32> to vector<256x128xf32>
    %5 = arith.addf %2, %4 : vector<256x128xf32>
    %6 = math.tanh %5 : vector<256x128xf32>
    %c0_5 = arith.constant 0 : index
    %c0_6 = arith.constant 0 : index
    %7 = vector.load %arg4[%c0_5, %c0_6] : memref<256x128xf32, #tpu.memory_space<vmem>>, vector<256x128xf32>
    tpu.vector_store %arg4[%c0_5, %c0_6], %6 {strides = array<i32>} : memref<256x128xf32, #tpu.memory_space<vmem>>, vector<256x128xf32>,
    return
  }
  func.func @transform_0(%arg0: i32) -> (i32, i32) {
    %c0_i32 = arith.constant 0 : i32
    %c0_i32_0 = arith.constant 0 : i32
    return %arg0, %c0_i32 : i32, i32
  }
  func.func @transform_1(%arg0: i32) -> (i32, i32) {
    %c0_i32 = arith.constant 0 : i32
    %c0_i32_0 = arith.constant 0 : i32
    %c0_i32_1 = arith.constant 0 : i32
    return %c0_i32, %c0_i32_0 : i32, i32
  }
  func.func @transform_2(%arg0: i32) -> (i32, i32) {
    %c0_i32 = arith.constant 0 : i32
    %c0_i32_0 = arith.constant 0 : i32
    %c0_i32_1 = arith.constant 0 : i32
    return %c0_i32, %c0_i32_0 : i32, i32
  }
  func.func @transform_3(%arg0: i32) -> (i32, i32) {
    %c0_i32 = arith.constant 0 : i32
    %c0_i32_0 = arith.constant 0 : i32
    return %arg0, %c0_i32 : i32, i32
  }
}

</mosaic_0001>

<llo_original>
// kernel: vae_forward.12
$region0: #{vae_forward.12}
  #allocation0 [shape = 'u32[]', space=smem, size = 0x4, offset = 0x4, fixed_abs, tag = 'smem constant byte address 0x4 - core index']
  #allocation1 [shape = 'u32[72,128]{1,0:T(1,128)}', space=vmem, size = 0x9000, scoped, tag = 'internal scratch']
  %s0 = inlined_call_operand.vmem [shape: f32[128,128], index: 0, kind: input, shape index: {}]
  %s1 = inlined_call_operand.vmem [shape: f32[1,128], index: 1, kind: input, shape index: {}]
  %s2 = inlined_call_operand.vmem [shape: f32[1,128], index: 2, kind: input, shape index: {}]
  %s3 = inlined_call_operand.vmem [shape: bf16[128,128], index: 3, kind: output, shape index: {}]
  %s4 = sld [smem:[#allocation0]]
  $region22: #{vae_forward.12} parent=0
    _
  %s6 = ssub.s32 1, %s4
  %s7 = scalar_select 0, %s6, %s4
  // Predicated region
  $region2: #{vae_forward.12} parent=0 // pred_check
    _
  $region3: #{vae_forward.12} parent=0 // pred_check_branch
    %9 = sbr.rel (0) target = $region5
  $region4: #{vae_forward.12} parent=0 // pred_region
    _
  $region5: #{vae_forward.12} parent=0 // pred_fallthru
    _
  // Predicated region
  $region6: #{vae_forward.12} parent=0 // pred_check
    _
  $region7: #{vae_forward.12} parent=0 // pred_check_branch
    %11 = sbr.rel (0) target = $region9
  $region8: #{vae_forward.12} parent=0 // pred_region
    _
  $region9: #{vae_forward.12} parent=0 // pred_fallthru
    _
  // Predicated region
  $region10: #{vae_forward.12} parent=0 // pred_check
    _
  $region11: #{vae_forward.12} parent=0 // pred_check_branch
    %13 = sbr.rel (0) target = $region13
  $region12: #{vae_forward.12} parent=0 // pred_region
    _
  $region13: #{vae_forward.12} parent=0 // pred_fallthru
    _
  %v14 = vld [vmem:[%s0] sm:$0xff]
  %v15 = vld [vmem:[%s0 + $0x8] sm:$0xff]
  %v16 = vld [vmem:[%s0 + $0x10] sm:$0xff]
  %v17 = vld [vmem:[%s0 + $0x18] sm:$0xff]
  %v18 = vld [vmem:[%s0 + $0x20] sm:$0xff]
  %v19 = vld [vmem:[%s0 + $0x28] sm:$0xff]
  %v20 = vld [vmem:[%s0 + $0x30] sm:$0xff]
  %v21 = vld [vmem:[%s0 + $0x38] sm:$0xff]
  %v22 = vld [vmem:[%s0 + $0x40] sm:$0xff]
  %v23 = vld [vmem:[%s0 + $0x48] sm:$0xff]
  %v24 = vld [vmem:[%s0 + $0x50] sm:$0xff]
  %v25 = vld [vmem:[%s0 + $0x58] sm:$0xff]
  %v26 = vld [vmem:[%s0 + $0x60] sm:$0xff]
  %v27 = vld [vmem:[%s0 + $0x68] sm:$0xff]
  %v28 = vld [vmem:[%s0 + $0x70] sm:$0xff]
  %v29 = vld [vmem:[%s0 + $0x78] sm:$0xff]
  %v30 = vld [vmem:[%s1] sm:$0x1]
  %v32 = vperm.slane %v30, 0
  %v34 = vmul.f32 %v14, %v32
  %v35 = vmul.f32 %v15, %v32
  %v36 = vmul.f32 %v16, %v32
  %v37 = vmul.f32 %v17, %v32
  %v38 = vmul.f32 %v18, %v32
  %v39 = vmul.f32 %v19, %v32
  %v40 = vmul.f32 %v20, %v32
  %v41 = vmul.f32 %v21, %v32
  %v42 = vmul.f32 %v22, %v32
  %v43 = vmul.f32 %v23, %v32
  %v44 = vmul.f32 %v24, %v32
  %v45 = vmul.f32 %v25, %v32
  %v46 = vmul.f32 %v26, %v32
  %v47 = vmul.f32 %v27, %v32
  %v48 = vmul.f32 %v28, %v32
  %v49 = vmul.f32 %v29, %v32
  %v50 = vld [vmem:[%s2] sm:$0x1]
  %v52 = vperm.slane %v50, 0
  %v54 = vadd.f32 %v34, %v52
  %v55 = vadd.f32 %v35, %v52
  %v56 = vadd.f32 %v36, %v52
  %v57 = vadd.f32 %v37, %v52
  %v58 = vadd.f32 %v38, %v52
  %v59 = vadd.f32 %v39, %v52
  %v60 = vadd.f32 %v40, %v52
  %v61 = vadd.f32 %v41, %v52
  %v62 = vadd.f32 %v42, %v52
  %v63 = vadd.f32 %v43, %v52
  %v64 = vadd.f32 %v44, %v52
  %v65 = vadd.f32 %v45, %v52
  %v66 = vadd.f32 %v46, %v52
  %v67 = vadd.f32 %v47, %v52
  %v68 = vadd.f32 %v48, %v52
  %v69 = vadd.f32 %v49, %v52
  %vm70 = vcmp.gt.f32.partialorder %v54, 0.0
  %vm71 = vcmp.gt.f32.partialorder %v55, 0.0
  %vm72 = vcmp.gt.f32.partialorder %v56, 0.0
  %vm73 = vcmp.gt.f32.partialorder %v57, 0.0
  %vm74 = vcmp.gt.f32.partialorder %v58, 0.0
  %vm75 = vcmp.gt.f32.partialorder %v59, 0.0
  %vm76 = vcmp.gt.f32.partialorder %v60, 0.0
  %vm77 = vcmp.gt.f32.partialorder %v61, 0.0
  %vm78 = vcmp.gt.f32.partialorder %v62, 0.0
  %vm79 = vcmp.gt.f32.partialorder %v63, 0.0
  %vm80 = vcmp.gt.f32.partialorder %v64, 0.0
  %vm81 = vcmp.gt.f32.partialorder %v65, 0.0
  %vm82 = vcmp.gt.f32.partialorder %v66, 0.0
  %vm83 = vcmp.gt.f32.partialorder %v67, 0.0
  %vm84 = vcmp.gt.f32.partialorder %v68, 0.0
  %vm85 = vcmp.gt.f32.partialorder %v69, 0.0
  %v86 = vmul.f32 %v54, 0.01
  %v87 = vmul.f32 %v55, 0.01
  %v88 = vmul.f32 %v56, 0.01
  %v89 = vmul.f32 %v57, 0.01
  %v90 = vmul.f32 %v58, 0.01
  %v91 = vmul.f32 %v59, 0.01
  %v92 = vmul.f32 %v60, 0.01
  %v93 = vmul.f32 %v61, 0.01
  %v94 = vmul.f32 %v62, 0.01
  %v95 = vmul.f32 %v63, 0.01
  %v96 = vmul.f32 %v64, 0.01
  %v97 = vmul.f32 %v65, 0.01
  %v98 = vmul.f32 %v66, 0.01
  %v99 = vmul.f32 %v67, 0.01
  %v100 = vmul.f32 %v68, 0.01
  %v101 = vmul.f32 %v69, 0.01
  %v102 = vsel %vm70, %v54, %v86
  %v103 = vsel %vm71, %v55, %v87
  %v104 = vsel %vm72, %v56, %v88
  %v105 = vsel %vm73, %v57, %v89
  %v106 = vsel %vm74, %v58, %v90
  %v107 = vsel %vm75, %v59, %v91
  %v108 = vsel %vm76, %v60, %v92
  %v109 = vsel %vm77, %v61, %v93
  %v110 = vsel %vm78, %v62, %v94
  %v111 = vsel %vm79, %v63, %v95
  %v112 = vsel %vm80, %v64, %v96
  %v113 = vsel %vm81, %v65, %v97
  %v114 = vsel %vm82, %v66, %v98
  %v115 = vsel %vm83, %v67, %v99
  %v116 = vsel %vm84, %v68, %v100
  %v117 = vsel %vm85, %v69, %v101
  %v118 = vpack.c.bf16 %v102, %v102
  %v119 = vpack.c.bf16 %v103, %v103
  %v120 = vpack.c.bf16 %v104, %v104
  %v121 = vpack.c.bf16 %v105, %v105
  %v122 = vpack.c.bf16 %v106, %v106
  %v123 = vpack.c.bf16 %v107, %v107
  %v124 = vpack.c.bf16 %v108, %v108
  %v125 = vpack.c.bf16 %v109, %v109
  %v126 = vpack.c.bf16 %v110, %v110
  %v127 = vpack.c.bf16 %v111, %v111
  %v128 = vpack.c.bf16 %v112, %v112
  %v129 = vpack.c.bf16 %v113, %v113
  %v130 = vpack.c.bf16 %v114, %v114
  %v131 = vpack.c.bf16 %v115, %v115
  %v132 = vpack.c.bf16 %v116, %v116
  %v133 = vpack.c.bf16 %v117, %v117
  %134 = vst [vmem:[%s3] sm:$0xf] %v118
  %135 = vst [vmem:[%s3 + $0x4] sm:$0xf] %v119
  %136 = vst [vmem:[%s3 + $0x8] sm:$0xf] %v120
  %137 = vst [vmem:[%s3 + $0xc] sm:$0xf] %v121
  %138 = vst [vmem:[%s3 + $0x10] sm:$0xf] %v122
  %139 = vst [vmem:[%s3 + $0x14] sm:$0xf] %v123
  %140 = vst [vmem:[%s3 + $0x18] sm:$0xf] %v124
  %141 = vst [vmem:[%s3 + $0x1c] sm:$0xf] %v125
  %142 = vst [vmem:[%s3 + $0x20] sm:$0xf] %v126
  %143 = vst [vmem:[%s3 + $0x24] sm:$0xf] %v127
  %144 = vst [vmem:[%s3 + $0x28] sm:$0xf] %v128
  %145 = vst [vmem:[%s3 + $0x2c] sm:$0xf] %v129
  %146 = vst [vmem:[%s3 + $0x30] sm:$0xf] %v130
  %147 = vst [vmem:[%s3 + $0x34] sm:$0xf] %v131
  %148 = vst [vmem:[%s3 + $0x38] sm:$0xf] %v132
  %149 = vst [vmem:[%s3 + $0x3c] sm:$0xf] %v133
  // Predicated region
  $region14: #{vae_forward.12} parent=0 // pred_check
    _
  $region15: #{vae_forward.12} parent=0 // pred_check_branch
    %151 = sbr.rel (0) target = $region17
  $region16: #{vae_forward.12} parent=0 // pred_region
    _
  $region17: #{vae_forward.12} parent=0 // pred_fallthru
    _
  // Predicated region
  $region18: #{vae_forward.12} parent=0 // pred_check
    _
  $region19: #{vae_forward.12} parent=0 // pred_check_branch
    %153 = sbr.rel (0) target = $region21
  $region20: #{vae_forward.12} parent=0 // pred_region
    _
  $region21: #{vae_forward.12} parent=0 // pred_fallthru
    _

// kernel: vae_forward.11
$region0: #{vae_forward.11}
  #allocation0 [shape = 'u32[]', space=smem, size = 0x4, offset = 0x4, fixed_abs, tag = 'smem constant byte address 0x4 - core index']
  #allocation1 [shape = 'u32[72,128]{1,0:T(1,128)}', space=vmem, size = 0x9000, scoped, tag = 'internal scratch']
  %s0 = inlined_call_operand.vmem [shape: bf16[128,128], index: 0, kind: input, shape index: {}]
  %s1 = inlined_call_operand.vmem [shape: bf16[128,128], index: 1, kind: input, shape index: {}]
  %s2 = inlined_call_operand.vmem [shape: f32[1,128], index: 2, kind: input, shape index: {}]
  %s3 = inlined_call_operand.vmem [shape: f32[128,128], index: 3, kind: output, shape index: {0}]
  %s4 = inlined_call_operand.vmem [shape: f32[1,128], index: 4, kind: output, shape index: {1}]
  %s5 = inlined_call_operand.vmem [shape: f32[1,128], index: 5, kind: output, shape index: {2}]
  %6 = xla_tuple %s3, %s4, %s5
  %s7 = sld [smem:[#allocation0]]
  $region42: #{vae_forward.11} parent=0
    _
  %s9 = ssub.s32 1, %s7
  %s10 = scalar_select 0, %s9, %s7
  // Predicated region
  $region2: #{vae_forward.11} parent=0 // pred_check
    _
  $region3: #{vae_forward.11} parent=0 // pred_check_branch
    %12 = sbr.rel (0) target = $region5
  $region4: #{vae_forward.11} parent=0 // pred_region
    _
  $region5: #{vae_forward.11} parent=0 // pred_fallthru
    _
  // Predicated region
  $region6: #{vae_forward.11} parent=0 // pred_check
    _
  $region7: #{vae_forward.11} parent=0 // pred_check_branch
    %14 = sbr.rel (0) target = $region9
  $region8: #{vae_forward.11} parent=0 // pred_region
    _
  $region9: #{vae_forward.11} parent=0 // pred_fallthru
    _
  // Predicated region
  $region10: #{vae_forward.11} parent=0 // pred_check
    _
  $region11: #{vae_forward.11} parent=0 // pred_check_branch
    %16 = sbr.rel (0) target = $region13
  $region12: #{vae_forward.11} parent=0 // pred_region
    _
  $region13: #{vae_forward.11} parent=0 // pred_fallthru
    _
  %v17 = vld [vmem:[%s0] sm:$0xf]
  %v18 = vld [vmem:[%s0 + $0x4] sm:$0xf]
  %v19 = vld [vmem:[%s0 + $0x8] sm:$0xf]
  %v20 = vld [vmem:[%s0 + $0xc] sm:$0xf]
  %v21 = vld [vmem:[%s0 + $0x10] sm:$0xf]
  %v22 = vld [vmem:[%s0 + $0x14] sm:$0xf]
  %v23 = vld [vmem:[%s0 + $0x18] sm:$0xf]
  %v24 = vld [vmem:[%s0 + $0x1c] sm:$0xf]
  %v25 = vld [vmem:[%s0 + $0x20] sm:$0xf]
  %v26 = vld [vmem:[%s0 + $0x24] sm:$0xf]
  %v27 = vld [vmem:[%s0 + $0x28] sm:$0xf]
  %v28 = vld [vmem:[%s0 + $0x2c] sm:$0xf]
  %v29 = vld [vmem:[%s0 + $0x30] sm:$0xf]
  %v30 = vld [vmem:[%s0 + $0x34] sm:$0xf]
  %v31 = vld [vmem:[%s0 + $0x38] sm:$0xf]
  %v32 = vld [vmem:[%s0 + $0x3c] sm:$0xf]
  %v33 = vld [vmem:[%s1] sm:$0xf]
  %v34 = vld [vmem:[%s1 + $0x4] sm:$0xf]
  %v35 = vld [vmem:[%s1 + $0x8] sm:$0xf]
  %v36 = vld [vmem:[%s1 + $0xc] sm:$0xf]
  %v37 = vld [vmem:[%s1 + $0x10] sm:$0xf]
  %v38 = vld [vmem:[%s1 + $0x14] sm:$0xf]
  %v39 = vld [vmem:[%s1 + $0x18] sm:$0xf]
  %v40 = vld [vmem:[%s1 + $0x1c] sm:$0xf]
  %v41 = vld [vmem:[%s1 + $0x20] sm:$0xf]
  %v42 = vld [vmem:[%s1 + $0x24] sm:$0xf]
  %v43 = vld [vmem:[%s1 + $0x28] sm:$0xf]
  %v44 = vld [vmem:[%s1 + $0x2c] sm:$0xf]
  %v45 = vld [vmem:[%s1 + $0x30] sm:$0xf]
  %v46 = vld [vmem:[%s1 + $0x34] sm:$0xf]
  %v47 = vld [vmem:[%s1 + $0x38] sm:$0xf]
  %v48 = vld [vmem:[%s1 + $0x3c] sm:$0xf]
  %v49 = vld [vmem:[%s2] sm:$0x1]
  %v51 = vperm.slane %v49, 0
  %v69 = vunpack.c.l.b16 %v17
  %v70 = vunpack.c.l.b16 %v18
  %v71 = vunpack.c.l.b16 %v19
  %v72 = vunpack.c.l.b16 %v20
  %v73 = vunpack.c.l.b16 %v21
  %v74 = vunpack.c.l.b16 %v22
  %v75 = vunpack.c.l.b16 %v23
  %v76 = vunpack.c.l.b16 %v24
  %v77 = vunpack.c.l.b16 %v25
  %v78 = vunpack.c.l.b16 %v26
  %v79 = vunpack.c.l.b16 %v27
  %v80 = vunpack.c.l.b16 %v28
  %v81 = vunpack.c.l.b16 %v29
  %v82 = vunpack.c.l.b16 %v30
  %v83 = vunpack.c.l.b16 %v31
  %v84 = vunpack.c.l.b16 %v32
  %v85 = vpack.c.b16 %v70, %v69
  %v86 = vpack.c.b16 %v72, %v71
  %v87 = vpack.c.b16 %v74, %v73
  %v88 = vpack.c.b16 %v76, %v75
  %v89 = vpack.c.b16 %v78, %v77
  %v90 = vpack.c.b16 %v80, %v79
  %v91 = vpack.c.b16 %v82, %v81
  %v92 = vpack.c.b16 %v84, %v83
  %v117 = vunpack.c.l.b16 %v33
  %v118 = vunpack.c.l.b16 %v34
  %v119 = vunpack.c.l.b16 %v35
  %v120 = vunpack.c.l.b16 %v36
  %v121 = vunpack.c.l.b16 %v37
  %v122 = vunpack.c.l.b16 %v38
  %v123 = vunpack.c.l.b16 %v39
  %v124 = vunpack.c.l.b16 %v40
  %v125 = vunpack.c.l.b16 %v41
  %v126 = vunpack.c.l.b16 %v42
  %v127 = vunpack.c.l.b16 %v43
  %v128 = vunpack.c.l.b16 %v44
  %v129 = vunpack.c.l.b16 %v45
  %v130 = vunpack.c.l.b16 %v46
  %v131 = vunpack.c.l.b16 %v47
  %v132 = vunpack.c.l.b16 %v48
  %v133 = vpack.c.b16 %v118, %v117
  %v134 = vpack.c.b16 %v120, %v119
  %v135 = vpack.c.b16 %v122, %v121
  %v136 = vpack.c.b16 %v124, %v123
  %v137 = vpack.c.b16 %v126, %v125
  %v138 = vpack.c.b16 %v128, %v127
  %v139 = vpack.c.b16 %v130, %v129
  %v140 = vpack.c.b16 %v132, %v131
  %149 = vmatpush.bf16.msra.mxu0 %v140
  %150 = vmatpush.bf16.msra.mxu0 %v139
  %151 = vmatpush.bf16.msra.mxu0 %v138
  %152 = vmatpush.bf16.msra.mxu0 %v137
  %153 = vmatpush.bf16.msra.mxu0 %v136
  %154 = vmatpush.bf16.msra.mxu0 %v135
  %155 = vmatpush.bf16.msra.mxu0 %v134
  %156 = vmatpush.bf16.msra.mxu0 %v133
  %157 = vmatmul.bf16.gmra.mxu0 %v85
  %v158 = vpop.f32.mrf.mxu0
  %v159 = vadd.f32 %v51, %v158
  %v160 = vpop.f32.mrf.mxu0
  %v161 = vadd.f32 %v51, %v160
  %162 = vmatmul.bf16.gmra.mxu0 %v86
  %v163 = vpop.f32.mrf.mxu0
  %v164 = vadd.f32 %v51, %v163
  %v165 = vpop.f32.mrf.mxu0
  %v166 = vadd.f32 %v51, %v165
  %167 = vmatmul.bf16.gmra.mxu0 %v87
  %v168 = vpop.f32.mrf.mxu0
  %v169 = vadd.f32 %v51, %v168
  %v170 = vpop.f32.mrf.mxu0
  %v171 = vadd.f32 %v51, %v170
  %172 = vmatmul.bf16.gmra.mxu0 %v88
  %v173 = vpop.f32.mrf.mxu0
  %v174 = vadd.f32 %v51, %v173
  %v175 = vpop.f32.mrf.mxu0
  %v176 = vadd.f32 %v51, %v175
  %177 = vmatmul.bf16.gmra.mxu0 %v89
  %v178 = vpop.f32.mrf.mxu0
  %v179 = vadd.f32 %v51, %v178
  %v180 = vpop.f32.mrf.mxu0
  %v181 = vadd.f32 %v51, %v180
  %182 = vmatmul.bf16.gmra.mxu0 %v90
  %v183 = vpop.f32.mrf.mxu0
  %v184 = vadd.f32 %v51, %v183
  %v185 = vpop.f32.mrf.mxu0
  %v186 = vadd.f32 %v51, %v185
  %187 = vmatmul.bf16.gmra.mxu0 %v91
  %v188 = vpop.f32.mrf.mxu0
  %v189 = vadd.f32 %v51, %v188
  %v190 = vpop.f32.mrf.mxu0
  %v191 = vadd.f32 %v51, %v190
  %192 = vmatmul.bf16.gmra.mxu0 %v92
  %v193 = vpop.f32.mrf.mxu0
  %v194 = vadd.f32 %v51, %v193
  %v195 = vpop.f32.mrf.mxu0
  %v196 = vadd.f32 %v51, %v195
  %197 = vdwg.mxu0
  %198 = vst [vmem:[%s3] sm:$0xff] %v159
  %199 = vst [vmem:[%s3 + $0x8] sm:$0xff] %v161
  %200 = vst [vmem:[%s3 + $0x10] sm:$0xff] %v164
  %201 = vst [vmem:[%s3 + $0x18] sm:$0xff] %v166
  %202 = vst [vmem:[%s3 + $0x20] sm:$0xff] %v169
  %203 = vst [vmem:[%s3 + $0x28] sm:$0xff] %v171
  %204 = vst [vmem:[%s3 + $0x30] sm:$0xff] %v174
  %205 = vst [vmem:[%s3 + $0x38] sm:$0xff] %v176
  %206 = vst [vmem:[%s3 + $0x40] sm:$0xff] %v179
  %207 = vst [vmem:[%s3 + $0x48] sm:$0xff] %v181
  %208 = vst [vmem:[%s3 + $0x50] sm:$0xff] %v184
  %209 = vst [vmem:[%s3 + $0x58] sm:$0xff] %v186
  %210 = vst [vmem:[%s3 + $0x60] sm:$0xff] %v189
  %211 = vst [vmem:[%s3 + $0x68] sm:$0xff] %v191
  %212 = vst [vmem:[%s3 + $0x70] sm:$0xff] %v194
  %213 = vst [vmem:[%s3 + $0x78] sm:$0xff] %v196
  %p214 = scmp.eq.s32.totalorder 0, 0
  // Predicated region
  $region14: #{vae_forward.11} parent=0 // pred_check
    %p215 = pneg %p214
  $region15: #{vae_forward.11} parent=0 // pred_check_branch
    %217 = sbr.rel (%p215) target = $region17
  $region16: #{vae_forward.11} parent=0 // pred_region
    %218 = vst [vmem:[%s4] sm:$0x1] 0.0
    %219 = vst [vmem:[%s5] sm:$0x1] 0.0
  $region17: #{vae_forward.11} parent=0 // pred_fallthru
    _
  %v220 = vld [vmem:[%s4] sm:$0x1]
  %v221 = vadd.f32 %v159, %v161
  %v222 = vadd.f32 %v221, %v164
  %v223 = vadd.f32 %v222, %v166
  %v224 = vadd.f32 %v223, %v169
  %v225 = vadd.f32 %v224, %v171
  %v226 = vadd.f32 %v225, %v174
  %v227 = vadd.f32 %v226, %v176
  %v228 = vadd.f32 %v227, %v179
  %v229 = vadd.f32 %v228, %v181
  %v230 = vadd.f32 %v229, %v184
  %v231 = vadd.f32 %v230, %v186
  %v232 = vadd.f32 %v231, %v189
  %v233 = vadd.f32 %v232, %v191
  %v234 = vadd.f32 %v233, %v194
  %v235 = vadd.f32 %v234, %v196
  %v236 = vrot.slane %v235, 4
  %v237 = vadd.f32 %v235, %v236
  %v238 = vrot.slane %v237, 2
  %v239 = vadd.f32 %v237, %v238
  %v240 = vrot.slane %v239, 1
  %v241 = vadd.f32 %v239, %v240
  %v242 = vadd.f32 %v220, %v241
  %243 = vst [vmem:[%s4] sm:$0x1] %v242
  %v244 = vld [vmem:[%s5] sm:$0x1]
  %v245 = vmul.f32 %v159, %v159
  %v246 = vmul.f32 %v161, %v161
  %v247 = vmul.f32 %v164, %v164
  %v248 = vmul.f32 %v166, %v166
  %v249 = vmul.f32 %v169, %v169
  %v250 = vmul.f32 %v171, %v171
  %v251 = vmul.f32 %v174, %v174
  %v252 = vmul.f32 %v176, %v176
  %v253 = vmul.f32 %v179, %v179
  %v254 = vmul.f32 %v181, %v181
  %v255 = vmul.f32 %v184, %v184
  %v256 = vmul.f32 %v186, %v186
  %v257 = vmul.f32 %v189, %v189
  %v258 = vmul.f32 %v191, %v191
  %v259 = vmul.f32 %v194, %v194
  %v260 = vmul.f32 %v196, %v196
  %v261 = vadd.f32 %v245, %v246
  %v262 = vadd.f32 %v261, %v247
  %v263 = vadd.f32 %v262, %v248
  %v264 = vadd.f32 %v263, %v249
  %v265 = vadd.f32 %v264, %v250
  %v266 = vadd.f32 %v265, %v251
  %v267 = vadd.f32 %v266, %v252
  %v268 = vadd.f32 %v267, %v253
  %v269 = vadd.f32 %v268, %v254
  %v270 = vadd.f32 %v269, %v255
  %v271 = vadd.f32 %v270, %v256
  %v272 = vadd.f32 %v271, %v257
  %v273 = vadd.f32 %v272, %v258
  %v274 = vadd.f32 %v273, %v259
  %v275 = vadd.f32 %v274, %v260
  %v276 = vrot.slane %v275, 4
  %v277 = vadd.f32 %v275, %v276
  %v278 = vrot.slane %v277, 2
  %v279 = vadd.f32 %v277, %v278
  %v280 = vrot.slane %v279, 1
  %v281 = vadd.f32 %v279, %v280
  %v282 = vadd.f32 %v244, %v281
  %283 = vst [vmem:[%s5] sm:$0x1] %v282
  // Predicated region
  $region18: #{vae_forward.11} parent=0 // pred_check
    _
  $region19: #{vae_forward.11} parent=0 // pred_check_branch
    %285 = sbr.rel (0) target = $region21
  $region20: #{vae_forward.11} parent=0 // pred_region
    _
  $region21: #{vae_forward.11} parent=0 // pred_fallthru
    _
  // Predicated region
  $region22: #{vae_forward.11} parent=0 // pred_check
    _
  $region23: #{vae_forward.11} parent=0 // pred_check_branch
    %287 = sbr.rel (0) target = $region25
  $region24: #{vae_forward.11} parent=0 // pred_region
    _
  $region25: #{vae_forward.11} parent=0 // pred_fallthru
    _
  // Predicated region
  $region26: #{vae_forward.11} parent=0 // pred_check
    _
  $region27: #{vae_forward.11} parent=0 // pred_check_branch
    %289 = sbr.rel (0) target = $region29
  $region28: #{vae_forward.11} parent=0 // pred_region
    _
  $region29: #{vae_forward.11} parent=0 // pred_fallthru
    _
  // Predicated region
  $region30: #{vae_forward.11} parent=0 // pred_check
    _
  $region31: #{vae_forward.11} parent=0 // pred_check_branch
    %291 = sbr.rel (0) target = $region33
  $region32: #{vae_forward.11} parent=0 // pred_region
    _
  $region33: #{vae_forward.11} parent=0 // pred_fallthru
    _
  // Predicated region
  $region34: #{vae_forward.11} parent=0 // pred_check
    _
  $region35: #{vae_forward.11} parent=0 // pred_check_branch
    %293 = sbr.rel (0) target = $region37
  $region36: #{vae_forward.11} parent=0 // pred_region
    _
  $region37: #{vae_forward.11} parent=0 // pred_fallthru
    _
  // Predicated region
  $region38: #{vae_forward.11} parent=0 // pred_check
    _
  $region39: #{vae_forward.11} parent=0 // pred_check_branch
    %295 = sbr.rel (0) target = $region41
  $region40: #{vae_forward.11} parent=0 // pred_region
    _
  $region41: #{vae_forward.11} parent=0 // pred_fallthru
    _

// kernel: vae_forward.14
$region0: #{vae_forward.14}
  #allocation0 [shape = 'u32[]', space=smem, size = 0x4, offset = 0x4, fixed_abs, tag = 'smem constant byte address 0x4 - core index']
  #allocation1 [shape = 'u32[72,128]{1,0:T(1,128)}', space=vmem, size = 0x9000, scoped, tag = 'internal scratch']
  %s0 = inlined_call_operand.vmem [shape: f32[32,128], index: 0, kind: input, shape index: {}]
  %s1 = inlined_call_operand.vmem [shape: f32[1,128], index: 1, kind: input, shape index: {}]
  %s2 = inlined_call_operand.vmem [shape: f32[1,128], index: 2, kind: input, shape index: {}]
  %s3 = inlined_call_operand.vmem [shape: bf16[32,128], index: 3, kind: output, shape index: {}]
  %s4 = sld [smem:[#allocation0]]
  $region22: #{vae_forward.14} parent=0
    _
  %s6 = ssub.s32 1, %s4
  %s7 = scalar_select 0, %s6, %s4
  // Predicated region
  $region2: #{vae_forward.14} parent=0 // pred_check
    _
  $region3: #{vae_forward.14} parent=0 // pred_check_branch
    %9 = sbr.rel (0) target = $region5
  $region4: #{vae_forward.14} parent=0 // pred_region
    _
  $region5: #{vae_forward.14} parent=0 // pred_fallthru
    _
  // Predicated region
  $region6: #{vae_forward.14} parent=0 // pred_check
    _
  $region7: #{vae_forward.14} parent=0 // pred_check_branch
    %11 = sbr.rel (0) target = $region9
  $region8: #{vae_forward.14} parent=0 // pred_region
    _
  $region9: #{vae_forward.14} parent=0 // pred_fallthru
    _
  // Predicated region
  $region10: #{vae_forward.14} parent=0 // pred_check
    _
  $region11: #{vae_forward.14} parent=0 // pred_check_branch
    %13 = sbr.rel (0) target = $region13
  $region12: #{vae_forward.14} parent=0 // pred_region
    _
  $region13: #{vae_forward.14} parent=0 // pred_fallthru
    _
  %v14 = vld [vmem:[%s0] sm:$0xff]
  %v15 = vld [vmem:[%s0 + $0x8] sm:$0xff]
  %v16 = vld [vmem:[%s0 + $0x10] sm:$0xff]
  %v17 = vld [vmem:[%s0 + $0x18] sm:$0xff]
  %v18 = vld [vmem:[%s1] sm:$0x1]
  %v20 = vperm.slane %v18, 0
  %v22 = vmul.f32 %v14, %v20
  %v23 = vmul.f32 %v15, %v20
  %v24 = vmul.f32 %v16, %v20
  %v25 = vmul.f32 %v17, %v20
  %v26 = vld [vmem:[%s2] sm:$0x1]
  %v28 = vperm.slane %v26, 0
  %v30 = vadd.f32 %v22, %v28
  %v31 = vadd.f32 %v23, %v28
  %v32 = vadd.f32 %v24, %v28
  %v33 = vadd.f32 %v25, %v28
  %vm34 = vcmp.gt.f32.partialorder %v30, 0.0
  %vm35 = vcmp.gt.f32.partialorder %v31, 0.0
  %vm36 = vcmp.gt.f32.partialorder %v32, 0.0
  %vm37 = vcmp.gt.f32.partialorder %v33, 0.0
  %v38 = vmul.f32 %v30, 0.01
  %v39 = vmul.f32 %v31, 0.01
  %v40 = vmul.f32 %v32, 0.01
  %v41 = vmul.f32 %v33, 0.01
  %v42 = vsel %vm34, %v30, %v38
  %v43 = vsel %vm35, %v31, %v39
  %v44 = vsel %vm36, %v32, %v40
  %v45 = vsel %vm37, %v33, %v41
  %v46 = vpack.c.bf16 %v42, %v42
  %v47 = vpack.c.bf16 %v43, %v43
  %v48 = vpack.c.bf16 %v44, %v44
  %v49 = vpack.c.bf16 %v45, %v45
  %50 = vst [vmem:[%s3] sm:$0xf] %v46
  %51 = vst [vmem:[%s3 + $0x4] sm:$0xf] %v47
  %52 = vst [vmem:[%s3 + $0x8] sm:$0xf] %v48
  %53 = vst [vmem:[%s3 + $0xc] sm:$0xf] %v49
  // Predicated region
  $region14: #{vae_forward.14} parent=0 // pred_check
    _
  $region15: #{vae_forward.14} parent=0 // pred_check_branch
    %55 = sbr.rel (0) target = $region17
  $region16: #{vae_forward.14} parent=0 // pred_region
    _
  $region17: #{vae_forward.14} parent=0 // pred_fallthru
    _
  // Predicated region
  $region18: #{vae_forward.14} parent=0 // pred_check
    _
  $region19: #{vae_forward.14} parent=0 // pred_check_branch
    %57 = sbr.rel (0) target = $region21
  $region20: #{vae_forward.14} parent=0 // pred_region
    _
  $region21: #{vae_forward.14} parent=0 // pred_fallthru
    _

// kernel: vae_forward.13
$region0: #{vae_forward.13}
  #allocation0 [shape = 'u32[]', space=smem, size = 0x4, offset = 0x4, fixed_abs, tag = 'smem constant byte address 0x4 - core index']
  #allocation1 [shape = 'u32[72,128]{1,0:T(1,128)}', space=vmem, size = 0x9000, scoped, tag = 'internal scratch']
  %s0 = inlined_call_operand.vmem [shape: bf16[32,384], index: 0, kind: input, shape index: {}]
  %s1 = inlined_call_operand.vmem [shape: bf16[384,128], index: 1, kind: input, shape index: {}]
  %s2 = inlined_call_operand.vmem [shape: f32[1,128], index: 2, kind: input, shape index: {}]
  %s3 = inlined_call_operand.vmem [shape: f32[32,128], index: 3, kind: output, shape index: {0}]
  %s4 = inlined_call_operand.vmem [shape: f32[1,128], index: 4, kind: output, shape index: {1}]
  %s5 = inlined_call_operand.vmem [shape: f32[1,128], index: 5, kind: output, shape index: {2}]
  %6 = xla_tuple %s3, %s4, %s5
  %s7 = sld [smem:[#allocation0]]
  $region42: #{vae_forward.13} parent=0
    _
  %s9 = ssub.s32 1, %s7
  %s10 = scalar_select 0, %s9, %s7
  // Predicated region
  $region2: #{vae_forward.13} parent=0 // pred_check
    _
  $region3: #{vae_forward.13} parent=0 // pred_check_branch
    %12 = sbr.rel (0) target = $region5
  $region4: #{vae_forward.13} parent=0 // pred_region
    _
  $region5: #{vae_forward.13} parent=0 // pred_fallthru
    _
  // Predicated region
  $region6: #{vae_forward.13} parent=0 // pred_check
    _
  $region7: #{vae_forward.13} parent=0 // pred_check_branch
    %14 = sbr.rel (0) target = $region9
  $region8: #{vae_forward.13} parent=0 // pred_region
    _
  $region9: #{vae_forward.13} parent=0 // pred_fallthru
    _
  // Predicated region
  $region10: #{vae_forward.13} parent=0 // pred_check
    _
  $region11: #{vae_forward.13} parent=0 // pred_check_branch
    %16 = sbr.rel (0) target = $region13
  $region12: #{vae_forward.13} parent=0 // pred_region
    _
  $region13: #{vae_forward.13} parent=0 // pred_fallthru
    _
  %v17 = vld [vmem:[%s0] sm:$0xff]
  %v18 = vld [vmem:[%s0 + $0x8] sm:$0xf]
  %v19 = vld [vmem:[%s0 + $0xc] sm:$0xff]
  %v20 = vld [vmem:[%s0 + $0x14] sm:$0xf]
  %v21 = vld [vmem:[%s0 + $0x18] sm:$0xff]
  %v22 = vld [vmem:[%s0 + $0x20] sm:$0xf]
  %v23 = vld [vmem:[%s0 + $0x24] sm:$0xff]
  %v24 = vld [vmem:[%s0 + $0x2c] sm:$0xf]
  %v25 = vld [vmem:[%s1] sm:$0xf]
  %v26 = vld [vmem:[%s1 + $0x4] sm:$0xf]
  %v27 = vld [vmem:[%s1 + $0x8] sm:$0xf]
  %v28 = vld [vmem:[%s1 + $0xc] sm:$0xf]
  %v29 = vld [vmem:[%s1 + $0x10] sm:$0xf]
  %v30 = vld [vmem:[%s1 + $0x14] sm:$0xf]
  %v31 = vld [vmem:[%s1 + $0x18] sm:$0xf]
  %v32 = vld [vmem:[%s1 + $0x1c] sm:$0xf]
  %v33 = vld [vmem:[%s1 + $0x20] sm:$0xf]
  %v34 = vld [vmem:[%s1 + $0x24] sm:$0xf]
  %v35 = vld [vmem:[%s1 + $0x28] sm:$0xf]
  %v36 = vld [vmem:[%s1 + $0x2c] sm:$0xf]
  %v37 = vld [vmem:[%s1 + $0x30] sm:$0xf]
  %v38 = vld [vmem:[%s1 + $0x34] sm:$0xf]
  %v39 = vld [vmem:[%s1 + $0x38] sm:$0xf]
  %v40 = vld [vmem:[%s1 + $0x3c] sm:$0xf]
  %v41 = vld [vmem:[%s1 + $0x40] sm:$0xf]
  %v42 = vld [vmem:[%s1 + $0x44] sm:$0xf]
  %v43 = vld [vmem:[%s1 + $0x48] sm:$0xf]
  %v44 = vld [vmem:[%s1 + $0x4c] sm:$0xf]
  %v45 = vld [vmem:[%s1 + $0x50] sm:$0xf]
  %v46 = vld [vmem:[%s1 + $0x54] sm:$0xf]
  %v47 = vld [vmem:[%s1 + $0x58] sm:$0xf]
  %v48 = vld [vmem:[%s1 + $0x5c] sm:$0xf]
  %v49 = vld [vmem:[%s1 + $0x60] sm:$0xf]
  %v50 = vld [vmem:[%s1 + $0x64] sm:$0xf]
  %v51 = vld [vmem:[%s1 + $0x68] sm:$0xf]
  %v52 = vld [vmem:[%s1 + $0x6c] sm:$0xf]
  %v53 = vld [vmem:[%s1 + $0x70] sm:$0xf]
  %v54 = vld [vmem:[%s1 + $0x74] sm:$0xf]
  %v55 = vld [vmem:[%s1 + $0x78] sm:$0xf]
  %v56 = vld [vmem:[%s1 + $0x7c] sm:$0xf]
  %v57 = vld [vmem:[%s1 + $0x80] sm:$0xf]
  %v58 = vld [vmem:[%s1 + $0x84] sm:$0xf]
  %v59 = vld [vmem:[%s1 + $0x88] sm:$0xf]
  %v60 = vld [vmem:[%s1 + $0x8c] sm:$0xf]
  %v61 = vld [vmem:[%s1 + $0x90] sm:$0xf]
  %v62 = vld [vmem:[%s1 + $0x94] sm:$0xf]
  %v63 = vld [vmem:[%s1 + $0x98] sm:$0xf]
  %v64 = vld [vmem:[%s1 + $0x9c] sm:$0xf]
  %v65 = vld [vmem:[%s1 + $0xa0] sm:$0xf]
  %v66 = vld [vmem:[%s1 + $0xa4] sm:$0xf]
  %v67 = vld [vmem:[%s1 + $0xa8] sm:$0xf]
  %v68 = vld [vmem:[%s1 + $0xac] sm:$0xf]
  %v69 = vld [vmem:[%s1 + $0xb0] sm:$0xf]
  %v70 = vld [vmem:[%s1 + $0xb4] sm:$0xf]
  %v71 = vld [vmem:[%s1 + $0xb8] sm:$0xf]
  %v72 = vld [vmem:[%s1 + $0xbc] sm:$0xf]
  %v73 = vld [vmem:[%s2] sm:$0x1]
  %v75 = vperm.slane %v73, 0
  %v85 = vunpack.c.l.b16 %v17
  %v86 = vunpack.c.h.b16 %v17
  %v87 = vunpack.c.l.b16 %v18
  %v88 = vunpack.c.l.b16 %v19
  %v89 = vunpack.c.h.b16 %v19
  %v90 = vunpack.c.l.b16 %v20
  %v91 = vunpack.c.l.b16 %v21
  %v92 = vunpack.c.h.b16 %v21
  %v93 = vunpack.c.l.b16 %v22
  %v94 = vunpack.c.l.b16 %v23
  %v95 = vunpack.c.h.b16 %v23
  %v96 = vunpack.c.l.b16 %v24
  %v97 = vpack.c.b16 %v88, %v85
  %v98 = vpack.c.b16 %v89, %v86
  %v99 = vpack.c.b16 %v90, %v87
  %v100 = vpack.c.b16 %v94, %v91
  %v101 = vpack.c.b16 %v95, %v92
  %v102 = vpack.c.b16 %v96, %v93
  %v157 = vunpack.c.l.b16 %v25
  %v158 = vunpack.c.l.b16 %v26
  %v159 = vunpack.c.l.b16 %v27
  %v160 = vunpack.c.l.b16 %v28
  %v161 = vunpack.c.l.b16 %v29
  %v162 = vunpack.c.l.b16 %v30
  %v163 = vunpack.c.l.b16 %v31
  %v164 = vunpack.c.l.b16 %v32
  %v165 = vunpack.c.l.b16 %v33
  %v166 = vunpack.c.l.b16 %v34
  %v167 = vunpack.c.l.b16 %v35
  %v168 = vunpack.c.l.b16 %v36
  %v169 = vunpack.c.l.b16 %v37
  %v170 = vunpack.c.l.b16 %v38
  %v171 = vunpack.c.l.b16 %v39
  %v172 = vunpack.c.l.b16 %v40
  %v173 = vunpack.c.l.b16 %v41
  %v174 = vunpack.c.l.b16 %v42
  %v175 = vunpack.c.l.b16 %v43
  %v176 = vunpack.c.l.b16 %v44
  %v177 = vunpack.c.l.b16 %v45
  %v178 = vunpack.c.l.b16 %v46
  %v179 = vunpack.c.l.b16 %v47
  %v180 = vunpack.c.l.b16 %v48
  %v181 = vunpack.c.l.b16 %v49
  %v182 = vunpack.c.l.b16 %v50
  %v183 = vunpack.c.l.b16 %v51
  %v184 = vunpack.c.l.b16 %v52
  %v185 = vunpack.c.l.b16 %v53
  %v186 = vunpack.c.l.b16 %v54
  %v187 = vunpack.c.l.b16 %v55
  %v188 = vunpack.c.l.b16 %v56
  %v189 = vunpack.c.l.b16 %v57
  %v190 = vunpack.c.l.b16 %v58
  %v191 = vunpack.c.l.b16 %v59
  %v192 = vunpack.c.l.b16 %v60
  %v193 = vunpack.c.l.b16 %v61
  %v194 = vunpack.c.l.b16 %v62
  %v195 = vunpack.c.l.b16 %v63
  %v196 = vunpack.c.l.b16 %v64
  %v197 = vunpack.c.l.b16 %v65
  %v198 = vunpack.c.l.b16 %v66
  %v199 = vunpack.c.l.b16 %v67
  %v200 = vunpack.c.l.b16 %v68
  %v201 = vunpack.c.l.b16 %v69
  %v202 = vunpack.c.l.b16 %v70
  %v203 = vunpack.c.l.b16 %v71
  %v204 = vunpack.c.l.b16 %v72
  %v205 = vpack.c.b16 %v158, %v157
  %v206 = vpack.c.b16 %v160, %v159
  %v207 = vpack.c.b16 %v162, %v161
  %v208 = vpack.c.b16 %v164, %v163
  %v209 = vpack.c.b16 %v166, %v165
  %v210 = vpack.c.b16 %v168, %v167
  %v211 = vpack.c.b16 %v170, %v169
  %v212 = vpack.c.b16 %v172, %v171
  %v213 = vpack.c.b16 %v174, %v173
  %v214 = vpack.c.b16 %v176, %v175
  %v215 = vpack.c.b16 %v178, %v177
  %v216 = vpack.c.b16 %v180, %v179
  %v217 = vpack.c.b16 %v182, %v181
  %v218 = vpack.c.b16 %v184, %v183
  %v219 = vpack.c.b16 %v186, %v185
  %v220 = vpack.c.b16 %v188, %v187
  %v221 = vpack.c.b16 %v190, %v189
  %v222 = vpack.c.b16 %v192, %v191
  %v223 = vpack.c.b16 %v194, %v193
  %v224 = vpack.c.b16 %v196, %v195
  %v225 = vpack.c.b16 %v198, %v197
  %v226 = vpack.c.b16 %v200, %v199
  %v227 = vpack.c.b16 %v202, %v201
  %v228 = vpack.c.b16 %v204, %v203
  %253 = vmatpush.bf16.msra.mxu0 %v212
  %254 = vmatpush.bf16.msra.mxu0 %v211
  %255 = vmatpush.bf16.msra.mxu0 %v210
  %256 = vmatpush.bf16.msra.mxu0 %v209
  %257 = vmatpush.bf16.msra.mxu0 %v208
  %258 = vmatpush.bf16.msra.mxu0 %v207
  %259 = vmatpush.bf16.msra.mxu0 %v206
  %260 = vmatpush.bf16.msra.mxu0 %v205
  %261 = vmatmul.bf16.gmra.mxu0 %v97
  %v262 = vpop.f32.mrf.mxu0
  %v263 = vadd.f32 %v75, %v262
  %v264 = vpop.f32.mrf.mxu0
  %v265 = vadd.f32 %v75, %v264
  %266 = vmatmul.bf16.gmra.mxu0 %v100
  %v267 = vpop.f32.mrf.mxu0
  %v268 = vadd.f32 %v75, %v267
  %v269 = vpop.f32.mrf.mxu0
  %v270 = vadd.f32 %v75, %v269
  %271 = vdwg.mxu0
  %272 = vmatpush.bf16.msra.mxu0 %v220
  %273 = vmatpush.bf16.msra.mxu0 %v219
  %274 = vmatpush.bf16.msra.mxu0 %v218
  %275 = vmatpush.bf16.msra.mxu0 %v217
  %276 = vmatpush.bf16.msra.mxu0 %v216
  %277 = vmatpush.bf16.msra.mxu0 %v215
  %278 = vmatpush.bf16.msra.mxu0 %v214
  %279 = vmatpush.bf16.msra.mxu0 %v213
  %280 = vmatmul.bf16.gmra.mxu0 %v98
  %v281 = vpop.f32.mrf.mxu0
  %v282 = vadd.f32 %v263, %v281
  %v283 = vpop.f32.mrf.mxu0
  %v284 = vadd.f32 %v265, %v283
  %285 = vmatmul.bf16.gmra.mxu0 %v101
  %v286 = vpop.f32.mrf.mxu0
  %v287 = vadd.f32 %v268, %v286
  %v288 = vpop.f32.mrf.mxu0
  %v289 = vadd.f32 %v270, %v288
  %290 = vdwg.mxu0
  %291 = vmatpush.bf16.msra.mxu0 %v228
  %292 = vmatpush.bf16.msra.mxu0 %v227
  %293 = vmatpush.bf16.msra.mxu0 %v226
  %294 = vmatpush.bf16.msra.mxu0 %v225
  %295 = vmatpush.bf16.msra.mxu0 %v224
  %296 = vmatpush.bf16.msra.mxu0 %v223
  %297 = vmatpush.bf16.msra.mxu0 %v222
  %298 = vmatpush.bf16.msra.mxu0 %v221
  %299 = vmatmul.bf16.gmra.mxu0 %v99
  %v300 = vpop.f32.mrf.mxu0
  %v301 = vadd.f32 %v282, %v300
  %v302 = vpop.f32.mrf.mxu0
  %v303 = vadd.f32 %v284, %v302
  %304 = vmatmul.bf16.gmra.mxu0 %v102
  %v305 = vpop.f32.mrf.mxu0
  %v306 = vadd.f32 %v287, %v305
  %v307 = vpop.f32.mrf.mxu0
  %v308 = vadd.f32 %v289, %v307
  %309 = vdwg.mxu0
  %310 = vst [vmem:[%s3] sm:$0xff] %v301
  %311 = vst [vmem:[%s3 + $0x8] sm:$0xff] %v303
  %312 = vst [vmem:[%s3 + $0x10] sm:$0xff] %v306
  %313 = vst [vmem:[%s3 + $0x18] sm:$0xff] %v308
  %p314 = scmp.eq.s32.totalorder 0, 0
  // Predicated region
  $region14: #{vae_forward.13} parent=0 // pred_check
    %p315 = pneg %p314
  $region15: #{vae_forward.13} parent=0 // pred_check_branch
    %317 = sbr.rel (%p315) target = $region17
  $region16: #{vae_forward.13} parent=0 // pred_region
    %318 = vst [vmem:[%s4] sm:$0x1] 0.0
    %319 = vst [vmem:[%s5] sm:$0x1] 0.0
  $region17: #{vae_forward.13} parent=0 // pred_fallthru
    _
  %v320 = vld [vmem:[%s4] sm:$0x1]
  %v321 = vadd.f32 %v301, %v303
  %v322 = vadd.f32 %v321, %v306
  %v323 = vadd.f32 %v322, %v308
  %v324 = vrot.slane %v323, 4
  %v325 = vadd.f32 %v323, %v324
  %v326 = vrot.slane %v325, 2
  %v327 = vadd.f32 %v325, %v326
  %v328 = vrot.slane %v327, 1
  %v329 = vadd.f32 %v327, %v328
  %v330 = vadd.f32 %v320, %v329
  %331 = vst [vmem:[%s4] sm:$0x1] %v330
  %v332 = vld [vmem:[%s5] sm:$0x1]
  %v333 = vmul.f32 %v301, %v301
  %v334 = vmul.f32 %v303, %v303
  %v335 = vmul.f32 %v306, %v306
  %v336 = vmul.f32 %v308, %v308
  %v337 = vadd.f32 %v333, %v334
  %v338 = vadd.f32 %v337, %v335
  %v339 = vadd.f32 %v338, %v336
  %v340 = vrot.slane %v339, 4
  %v341 = vadd.f32 %v339, %v340
  %v342 = vrot.slane %v341, 2
  %v343 = vadd.f32 %v341, %v342
  %v344 = vrot.slane %v343, 1
  %v345 = vadd.f32 %v343, %v344
  %v346 = vadd.f32 %v332, %v345
  %347 = vst [vmem:[%s5] sm:$0x1] %v346
  // Predicated region
  $region18: #{vae_forward.13} parent=0 // pred_check
    _
  $region19: #{vae_forward.13} parent=0 // pred_check_branch
    %349 = sbr.rel (0) target = $region21
  $region20: #{vae_forward.13} parent=0 // pred_region
    _
  $region21: #{vae_forward.13} parent=0 // pred_fallthru
    _
  // Predicated region
  $region22: #{vae_forward.13} parent=0 // pred_check
    _
  $region23: #{vae_forward.13} parent=0 // pred_check_branch
    %351 = sbr.rel (0) target = $region25
  $region24: #{vae_forward.13} parent=0 // pred_region
    _
  $region25: #{vae_forward.13} parent=0 // pred_fallthru
    _
  // Predicated region
  $region26: #{vae_forward.13} parent=0 // pred_check
    _
  $region27: #{vae_forward.13} parent=0 // pred_check_branch
    %353 = sbr.rel (0) target = $region29
  $region28: #{vae_forward.13} parent=0 // pred_region
    _
  $region29: #{vae_forward.13} parent=0 // pred_fallthru
    _
  // Predicated region
  $region30: #{vae_forward.13} parent=0 // pred_check
    _
  $region31: #{vae_forward.13} parent=0 // pred_check_branch
    %355 = sbr.rel (0) target = $region33
  $region32: #{vae_forward.13} parent=0 // pred_region
    _
  $region33: #{vae_forward.13} parent=0 // pred_fallthru
    _
  // Predicated region
  $region34: #{vae_forward.13} parent=0 // pred_check
    _
  $region35: #{vae_forward.13} parent=0 // pred_check_branch
    %357 = sbr.rel (0) target = $region37
  $region36: #{vae_forward.13} parent=0 // pred_region
    _
  $region37: #{vae_forward.13} parent=0 // pred_fallthru
    _
  // Predicated region
  $region38: #{vae_forward.13} parent=0 // pred_check
    _
  $region39: #{vae_forward.13} parent=0 // pred_check_branch
    %359 = sbr.rel (0) target = $region41
  $region40: #{vae_forward.13} parent=0 // pred_region
    _
  $region41: #{vae_forward.13} parent=0 // pred_fallthru
    _

// kernel: tile.31
$region0: #{tile.31}
  #allocation0 [shape = 's32[1]{0}', space=sflag, size = 0x4, scoped, tag = 'scoped memory for tile.31']
  %s0 = inlined_call_operand.vmem [shape: f32[128], index: 0, kind: input, shape index: {}]
  %s1 = inlined_call_operand.vmem [shape: f32[4,128], index: 1, kind: output, shape index: {}]
  // Predicated region
  $region2: #{tile.31} parent=0 // pred_check
    _
  $region3: #{tile.31} parent=0 // pred_check_branch
    %3 = sbr.rel (0) target = $region5
  $region4: #{tile.31} parent=0 // pred_region
    _
  $region5: #{tile.31} parent=0 // pred_fallthru
    _
  %v4 = vld [vmem:[%s0] ss:$0 sm:$0xff]
  %5 = vst [vmem:[%s1] sm:$0xf] %v4

// kernel: vae_forward.15
$region0: #{vae_forward.15}
  #allocation0 [shape = 'u32[]', space=smem, size = 0x4, offset = 0x4, fixed_abs, tag = 'smem constant byte address 0x4 - core index']
  #allocation1 [shape = 'u32[72,128]{1,0:T(1,128)}', space=vmem, size = 0x9000, scoped, tag = 'internal scratch']
  %s0 = inlined_call_operand.vmem [shape: bf16[8,1024], index: 0, kind: input, shape index: {}]
  %s1 = inlined_call_operand.vmem [shape: bf16[1024,256], index: 1, kind: input, shape index: {}]
  %s2 = inlined_call_operand.vmem [shape: f32[1,256], index: 2, kind: input, shape index: {}]
  %s3 = inlined_call_operand.vmem [shape: f32[8,128], index: 3, kind: input, shape index: {}]
  %s4 = inlined_call_operand.vmem [shape: f32[8,128], index: 4, kind: output, shape index: {0}]
  %s5 = inlined_call_operand.vmem [shape: f32[8,128], index: 5, kind: output, shape index: {1}]
  %s6 = inlined_call_operand.vmem [shape: f32[8,128], index: 6, kind: output, shape index: {2}]
  %7 = xla_tuple %s4, %s5, %s6
  %s8 = sld [smem:[#allocation0]]
  $region42: #{vae_forward.15} parent=0
    _
  %s10 = ssub.s32 1, %s8
  %s11 = scalar_select 0, %s10, %s8
  // Predicated region
  $region2: #{vae_forward.15} parent=0 // pred_check
    _
  $region3: #{vae_forward.15} parent=0 // pred_check_branch
    %13 = sbr.rel (0) target = $region5
  $region4: #{vae_forward.15} parent=0 // pred_region
    _
  $region5: #{vae_forward.15} parent=0 // pred_fallthru
    _
  // Predicated region
  $region6: #{vae_forward.15} parent=0 // pred_check
    _
  $region7: #{vae_forward.15} parent=0 // pred_check_branch
    %15 = sbr.rel (0) target = $region9
  $region8: #{vae_forward.15} parent=0 // pred_region
    _
  $region9: #{vae_forward.15} parent=0 // pred_fallthru
    _
  // Predicated region
  $region10: #{vae_forward.15} parent=0 // pred_check
    _
  $region11: #{vae_forward.15} parent=0 // pred_check_branch
    %17 = sbr.rel (0) target = $region13
  $region12: #{vae_forward.15} parent=0 // pred_region
    _
  $region13: #{vae_forward.15} parent=0 // pred_fallthru
    _
  // Predicated region
  $region14: #{vae_forward.15} parent=0 // pred_check
    _
  $region15: #{vae_forward.15} parent=0 // pred_check_branch
    %19 = sbr.rel (0) target = $region17
  $region16: #{vae_forward.15} parent=0 // pred_region
    _
  $region17: #{vae_forward.15} parent=0 // pred_fallthru
    _
  %v20 = vld [vmem:[%s0] sm:$0xff]
  %v21 = vld [vmem:[%s0 + $0x8] sm:$0xff]
  %v22 = vld [vmem:[%s0 + $0x10] sm:$0xff]
  %v23 = vld [vmem:[%s0 + $0x18] sm:$0xff]
  %v24 = vld [vmem:[%s1] sm:$0xff]
  %v25 = vld [vmem:[%s1 + $0x8] sm:$0xff]
  %v26 = vld [vmem:[%s1 + $0x10] sm:$0xff]
  %v27 = vld [vmem:[%s1 + $0x18] sm:$0xff]
  %v28 = vld [vmem:[%s1 + $0x20] sm:$0xff]
  %v29 = vld [vmem:[%s1 + $0x28] sm:$0xff]
  %v30 = vld [vmem:[%s1 + $0x30] sm:$0xff]
  %v31 = vld [vmem:[%s1 + $0x38] sm:$0xff]
  %v32 = vld [vmem:[%s1 + $0x40] sm:$0xff]
  %v33 = vld [vmem:[%s1 + $0x48] sm:$0xff]
  %v34 = vld [vmem:[%s1 + $0x50] sm:$0xff]
  %v35 = vld [vmem:[%s1 + $0x58] sm:$0xff]
  %v36 = vld [vmem:[%s1 + $0x60] sm:$0xff]
  %v37 = vld [vmem:[%s1 + $0x68] sm:$0xff]
  %v38 = vld [vmem:[%s1 + $0x70] sm:$0xff]
  %v39 = vld [vmem:[%s1 + $0x78] sm:$0xff]
  %v40 = vld [vmem:[%s1 + $0x80] sm:$0xff]
  %v41 = vld [vmem:[%s1 + $0x88] sm:$0xff]
  %v42 = vld [vmem:[%s1 + $0x90] sm:$0xff]
  %v43 = vld [vmem:[%s1 + $0x98] sm:$0xff]
  %v44 = vld [vmem:[%s1 + $0xa0] sm:$0xff]
  %v45 = vld [vmem:[%s1 + $0xa8] sm:$0xff]
  %v46 = vld [vmem:[%s1 + $0xb0] sm:$0xff]
  %v47 = vld [vmem:[%s1 + $0xb8] sm:$0xff]
  %v48 = vld [vmem:[%s1 + $0xc0] sm:$0xff]
  %v49 = vld [vmem:[%s1 + $0xc8] sm:$0xff]
  %v50 = vld [vmem:[%s1 + $0xd0] sm:$0xff]
  %v51 = vld [vmem:[%s1 + $0xd8] sm:$0xff]
  %v52 = vld [vmem:[%s1 + $0xe0] sm:$0xff]
  %v53 = vld [vmem:[%s1 + $0xe8] sm:$0xff]
  %v54 = vld [vmem:[%s1 + $0xf0] sm:$0xff]
  %v55 = vld [vmem:[%s1 + $0xf8] sm:$0xff]
  %v56 = vld [vmem:[%s1 + $0x100] sm:$0xff]
  %v57 = vld [vmem:[%s1 + $0x108] sm:$0xff]
  %v58 = vld [vmem:[%s1 + $0x110] sm:$0xff]
  %v59 = vld [vmem:[%s1 + $0x118] sm:$0xff]
  %v60 = vld [vmem:[%s1 + $0x120] sm:$0xff]
  %v61 = vld [vmem:[%s1 + $0x128] sm:$0xff]
  %v62 = vld [vmem:[%s1 + $0x130] sm:$0xff]
  %v63 = vld [vmem:[%s1 + $0x138] sm:$0xff]
  %v64 = vld [vmem:[%s1 + $0x140] sm:$0xff]
  %v65 = vld [vmem:[%s1 + $0x148] sm:$0xff]
  %v66 = vld [vmem:[%s1 + $0x150] sm:$0xff]
  %v67 = vld [vmem:[%s1 + $0x158] sm:$0xff]
  %v68 = vld [vmem:[%s1 + $0x160] sm:$0xff]
  %v69 = vld [vmem:[%s1 + $0x168] sm:$0xff]
  %v70 = vld [vmem:[%s1 + $0x170] sm:$0xff]
  %v71 = vld [vmem:[%s1 + $0x178] sm:$0xff]
  %v72 = vld [vmem:[%s1 + $0x180] sm:$0xff]
  %v73 = vld [vmem:[%s1 + $0x188] sm:$0xff]
  %v74 = vld [vmem:[%s1 + $0x190] sm:$0xff]
  %v75 = vld [vmem:[%s1 + $0x198] sm:$0xff]
  %v76 = vld [vmem:[%s1 + $0x1a0] sm:$0xff]
  %v77 = vld [vmem:[%s1 + $0x1a8] sm:$0xff]
  %v78 = vld [vmem:[%s1 + $0x1b0] sm:$0xff]
  %v79 = vld [vmem:[%s1 + $0x1b8] sm:$0xff]
  %v80 = vld [vmem:[%s1 + $0x1c0] sm:$0xff]
  %v81 = vld [vmem:[%s1 + $0x1c8] sm:$0xff]
  %v82 = vld [vmem:[%s1 + $0x1d0] sm:$0xff]
  %v83 = vld [vmem:[%s1 + $0x1d8] sm:$0xff]
  %v84 = vld [vmem:[%s1 + $0x1e0] sm:$0xff]
  %v85 = vld [vmem:[%s1 + $0x1e8] sm:$0xff]
  %v86 = vld [vmem:[%s1 + $0x1f0] sm:$0xff]
  %v87 = vld [vmem:[%s1 + $0x1f8] sm:$0xff]
  %v88 = vld [vmem:[%s1 + $0x200] sm:$0xff]
  %v89 = vld [vmem:[%s1 + $0x208] sm:$0xff]
  %v90 = vld [vmem:[%s1 + $0x210] sm:$0xff]
  %v91 = vld [vmem:[%s1 + $0x218] sm:$0xff]
  %v92 = vld [vmem:[%s1 + $0x220] sm:$0xff]
  %v93 = vld [vmem:[%s1 + $0x228] sm:$0xff]
  %v94 = vld [vmem:[%s1 + $0x230] sm:$0xff]
  %v95 = vld [vmem:[%s1 + $0x238] sm:$0xff]
  %v96 = vld [vmem:[%s1 + $0x240] sm:$0xff]
  %v97 = vld [vmem:[%s1 + $0x248] sm:$0xff]
  %v98 = vld [vmem:[%s1 + $0x250] sm:$0xff]
  %v99 = vld [vmem:[%s1 + $0x258] sm:$0xff]
  %v100 = vld [vmem:[%s1 + $0x260] sm:$0xff]
  %v101 = vld [vmem:[%s1 + $0x268] sm:$0xff]
  %v102 = vld [vmem:[%s1 + $0x270] sm:$0xff]
  %v103 = vld [vmem:[%s1 + $0x278] sm:$0xff]
  %v104 = vld [vmem:[%s1 + $0x280] sm:$0xff]
  %v105 = vld [vmem:[%s1 + $0x288] sm:$0xff]
  %v106 = vld [vmem:[%s1 + $0x290] sm:$0xff]
  %v107 = vld [vmem:[%s1 + $0x298] sm:$0xff]
  %v108 = vld [vmem:[%s1 + $0x2a0] sm:$0xff]
  %v109 = vld [vmem:[%s1 + $0x2a8] sm:$0xff]
  %v110 = vld [vmem:[%s1 + $0x2b0] sm:$0xff]
  %v111 = vld [vmem:[%s1 + $0x2b8] sm:$0xff]
  %v112 = vld [vmem:[%s1 + $0x2c0] sm:$0xff]
  %v113 = vld [vmem:[%s1 + $0x2c8] sm:$0xff]
  %v114 = vld [vmem:[%s1 + $0x2d0] sm:$0xff]
  %v115 = vld [vmem:[%s1 + $0x2d8] sm:$0xff]
  %v116 = vld [vmem:[%s1 + $0x2e0] sm:$0xff]
  %v117 = vld [vmem:[%s1 + $0x2e8] sm:$0xff]
  %v118 = vld [vmem:[%s1 + $0x2f0] sm:$0xff]
  %v119 = vld [vmem:[%s1 + $0x2f8] sm:$0xff]
  %v120 = vld [vmem:[%s1 + $0x300] sm:$0xff]
  %v121 = vld [vmem:[%s1 + $0x308] sm:$0xff]
  %v122 = vld [vmem:[%s1 + $0x310] sm:$0xff]
  %v123 = vld [vmem:[%s1 + $0x318] sm:$0xff]
  %v124 = vld [vmem:[%s1 + $0x320] sm:$0xff]
  %v125 = vld [vmem:[%s1 + $0x328] sm:$0xff]
  %v126 = vld [vmem:[%s1 + $0x330] sm:$0xff]
  %v127 = vld [vmem:[%s1 + $0x338] sm:$0xff]
  %v128 = vld [vmem:[%s1 + $0x340] sm:$0xff]
  %v129 = vld [vmem:[%s1 + $0x348] sm:$0xff]
  %v130 = vld [vmem:[%s1 + $0x350] sm:$0xff]
  %v131 = vld [vmem:[%s1 + $0x358] sm:$0xff]
  %v132 = vld [vmem:[%s1 + $0x360] sm:$0xff]
  %v133 = vld [vmem:[%s1 + $0x368] sm:$0xff]
  %v134 = vld [vmem:[%s1 + $0x370] sm:$0xff]
  %v135 = vld [vmem:[%s1 + $0x378] sm:$0xff]
  %v136 = vld [vmem:[%s1 + $0x380] sm:$0xff]
  %v137 = vld [vmem:[%s1 + $0x388] sm:$0xff]
  %v138 = vld [vmem:[%s1 + $0x390] sm:$0xff]
  %v139 = vld [vmem:[%s1 + $0x398] sm:$0xff]
  %v140 = vld [vmem:[%s1 + $0x3a0] sm:$0xff]
  %v141 = vld [vmem:[%s1 + $0x3a8] sm:$0xff]
  %v142 = vld [vmem:[%s1 + $0x3b0] sm:$0xff]
  %v143 = vld [vmem:[%s1 + $0x3b8] sm:$0xff]
  %v144 = vld [vmem:[%s1 + $0x3c0] sm:$0xff]
  %v145 = vld [vmem:[%s1 + $0x3c8] sm:$0xff]
  %v146 = vld [vmem:[%s1 + $0x3d0] sm:$0xff]
  %v147 = vld [vmem:[%s1 + $0x3d8] sm:$0xff]
  %v148 = vld [vmem:[%s1 + $0x3e0] sm:$0xff]
  %v149 = vld [vmem:[%s1 + $0x3e8] sm:$0xff]
  %v150 = vld [vmem:[%s1 + $0x3f0] sm:$0xff]
  %v151 = vld [vmem:[%s1 + $0x3f8] sm:$0xff]
  %v152 = vld [vmem:[%s2] sm:$0x3]
  %v154 = vperm.slane %v152, 0
  %v155 = vperm.slane %v152, 1
  %v162 = vunpack.c.l.b16 %v20
  %v163 = vunpack.c.h.b16 %v20
  %v164 = vunpack.c.l.b16 %v21
  %v165 = vunpack.c.h.b16 %v21
  %v166 = vunpack.c.l.b16 %v22
  %v167 = vunpack.c.h.b16 %v22
  %v168 = vunpack.c.l.b16 %v23
  %v169 = vunpack.c.h.b16 %v23
  %v170 = vpack.c.b16 %v162, %v162
  %v171 = vpack.c.b16 %v163, %v163
  %v172 = vpack.c.b16 %v164, %v164
  %v173 = vpack.c.b16 %v165, %v165
  %v174 = vpack.c.b16 %v166, %v166
  %v175 = vpack.c.b16 %v167, %v167
  %v176 = vpack.c.b16 %v168, %v168
  %v177 = vpack.c.b16 %v169, %v169
  %v314 = vunpack.c.l.b16 %v24
  %v315 = vunpack.c.h.b16 %v24
  %v316 = vunpack.c.l.b16 %v25
  %v317 = vunpack.c.h.b16 %v25
  %v318 = vunpack.c.l.b16 %v26
  %v319 = vunpack.c.h.b16 %v26
  %v320 = vunpack.c.l.b16 %v27
  %v321 = vunpack.c.h.b16 %v27
  %v322 = vunpack.c.l.b16 %v28
  %v323 = vunpack.c.h.b16 %v28
  %v324 = vunpack.c.l.b16 %v29
  %v325 = vunpack.c.h.b16 %v29
  %v326 = vunpack.c.l.b16 %v30
  %v327 = vunpack.c.h.b16 %v30
  %v328 = vunpack.c.l.b16 %v31
  %v329 = vunpack.c.h.b16 %v31
  %v330 = vunpack.c.l.b16 %v32
  %v331 = vunpack.c.h.b16 %v32
  %v332 = vunpack.c.l.b16 %v33
  %v333 = vunpack.c.h.b16 %v33
  %v334 = vunpack.c.l.b16 %v34
  %v335 = vunpack.c.h.b16 %v34
  %v336 = vunpack.c.l.b16 %v35
  %v337 = vunpack.c.h.b16 %v35
  %v338 = vunpack.c.l.b16 %v36
  %v339 = vunpack.c.h.b16 %v36
  %v340 = vunpack.c.l.b16 %v37
  %v341 = vunpack.c.h.b16 %v37
  %v342 = vunpack.c.l.b16 %v38
  %v343 = vunpack.c.h.b16 %v38
  %v344 = vunpack.c.l.b16 %v39
  %v345 = vunpack.c.h.b16 %v39
  %v346 = vunpack.c.l.b16 %v40
  %v347 = vunpack.c.h.b16 %v40
  %v348 = vunpack.c.l.b16 %v41
  %v349 = vunpack.c.h.b16 %v41
  %v350 = vunpack.c.l.b16 %v42
  %v351 = vunpack.c.h.b16 %v42
  %v352 = vunpack.c.l.b16 %v43
  %v353 = vunpack.c.h.b16 %v43
  %v354 = vunpack.c.l.b16 %v44
  %v355 = vunpack.c.h.b16 %v44
  %v356 = vunpack.c.l.b16 %v45
  %v357 = vunpack.c.h.b16 %v45
  %v358 = vunpack.c.l.b16 %v46
  %v359 = vunpack.c.h.b16 %v46
  %v360 = vunpack.c.l.b16 %v47
  %v361 = vunpack.c.h.b16 %v47
  %v362 = vunpack.c.l.b16 %v48
  %v363 = vunpack.c.h.b16 %v48
  %v364 = vunpack.c.l.b16 %v49
  %v365 = vunpack.c.h.b16 %v49
  %v366 = vunpack.c.l.b16 %v50
  %v367 = vunpack.c.h.b16 %v50
  %v368 = vunpack.c.l.b16 %v51
  %v369 = vunpack.c.h.b16 %v51
  %v370 = vunpack.c.l.b16 %v52
  %v371 = vunpack.c.h.b16 %v52
  %v372 = vunpack.c.l.b16 %v53
  %v373 = vunpack.c.h.b16 %v53
  %v374 = vunpack.c.l.b16 %v54
  %v375 = vunpack.c.h.b16 %v54
  %v376 = vunpack.c.l.b16 %v55
  %v377 = vunpack.c.h.b16 %v55
  %v378 = vunpack.c.l.b16 %v56
  %v379 = vunpack.c.h.b16 %v56
  %v380 = vunpack.c.l.b16 %v57
  %v381 = vunpack.c.h.b16 %v57
  %v382 = vunpack.c.l.b16 %v58
  %v383 = vunpack.c.h.b16 %v58
  %v384 = vunpack.c.l.b16 %v59
  %v385 = vunpack.c.h.b16 %v59
  %v386 = vunpack.c.l.b16 %v60
  %v387 = vunpack.c.h.b16 %v60
  %v388 = vunpack.c.l.b16 %v61
  %v389 = vunpack.c.h.b16 %v61
  %v390 = vunpack.c.l.b16 %v62
  %v391 = vunpack.c.h.b16 %v62
  %v392 = vunpack.c.l.b16 %v63
  %v393 = vunpack.c.h.b16 %v63
  %v394 = vunpack.c.l.b16 %v64
  %v395 = vunpack.c.h.b16 %v64
  %v396 = vunpack.c.l.b16 %v65
  %v397 = vunpack.c.h.b16 %v65
  %v398 = vunpack.c.l.b16 %v66
  %v399 = vunpack.c.h.b16 %v66
  %v400 = vunpack.c.l.b16 %v67
  %v401 = vunpack.c.h.b16 %v67
  %v402 = vunpack.c.l.b16 %v68
  %v403 = vunpack.c.h.b16 %v68
  %v404 = vunpack.c.l.b16 %v69
  %v405 = vunpack.c.h.b16 %v69
  %v406 = vunpack.c.l.b16 %v70
  %v407 = vunpack.c.h.b16 %v70
  %v408 = vunpack.c.l.b16 %v71
  %v409 = vunpack.c.h.b16 %v71
  %v410 = vunpack.c.l.b16 %v72
  %v411 = vunpack.c.h.b16 %v72
  %v412 = vunpack.c.l.b16 %v73
  %v413 = vunpack.c.h.b16 %v73
  %v414 = vunpack.c.l.b16 %v74
  %v415 = vunpack.c.h.b16 %v74
  %v416 = vunpack.c.l.b16 %v75
  %v417 = vunpack.c.h.b16 %v75
  %v418 = vunpack.c.l.b16 %v76
  %v419 = vunpack.c.h.b16 %v76
  %v420 = vunpack.c.l.b16 %v77
  %v421 = vunpack.c.h.b16 %v77
  %v422 = vunpack.c.l.b16 %v78
  %v423 = vunpack.c.h.b16 %v78
  %v424 = vunpack.c.l.b16 %v79
  %v425 = vunpack.c.h.b16 %v79
  %v426 = vunpack.c.l.b16 %v80
  %v427 = vunpack.c.h.b16 %v80
  %v428 = vunpack.c.l.b16 %v81
  %v429 = vunpack.c.h.b16 %v81
  %v430 = vunpack.c.l.b16 %v82
  %v431 = vunpack.c.h.b16 %v82
  %v432 = vunpack.c.l.b16 %v83
  %v433 = vunpack.c.h.b16 %v83
  %v434 = vunpack.c.l.b16 %v84
  %v435 = vunpack.c.h.b16 %v84
  %v436 = vunpack.c.l.b16 %v85
  %v437 = vunpack.c.h.b16 %v85
  %v438 = vunpack.c.l.b16 %v86
  %v439 = vunpack.c.h.b16 %v86
  %v440 = vunpack.c.l.b16 %v87
  %v441 = vunpack.c.h.b16 %v87
  %v442 = vunpack.c.l.b16 %v88
  %v443 = vunpack.c.h.b16 %v88
  %v444 = vunpack.c.l.b16 %v89
  %v445 = vunpack.c.h.b16 %v89
  %v446 = vunpack.c.l.b16 %v90
  %v447 = vunpack.c.h.b16 %v90
  %v448 = vunpack.c.l.b16 %v91
  %v449 = vunpack.c.h.b16 %v91
  %v450 = vunpack.c.l.b16 %v92
  %v451 = vunpack.c.h.b16 %v92
  %v452 = vunpack.c.l.b16 %v93
  %v453 = vunpack.c.h.b16 %v93
  %v454 = vunpack.c.l.b16 %v94
  %v455 = vunpack.c.h.b16 %v94
  %v456 = vunpack.c.l.b16 %v95
  %v457 = vunpack.c.h.b16 %v95
  %v458 = vunpack.c.l.b16 %v96
  %v459 = vunpack.c.h.b16 %v96
  %v460 = vunpack.c.l.b16 %v97
  %v461 = vunpack.c.h.b16 %v97
  %v462 = vunpack.c.l.b16 %v98
  %v463 = vunpack.c.h.b16 %v98
  %v464 = vunpack.c.l.b16 %v99
  %v465 = vunpack.c.h.b16 %v99
  %v466 = vunpack.c.l.b16 %v100
  %v467 = vunpack.c.h.b16 %v100
  %v468 = vunpack.c.l.b16 %v101
  %v469 = vunpack.c.h.b16 %v101
  %v470 = vunpack.c.l.b16 %v102
  %v471 = vunpack.c.h.b16 %v102
  %v472 = vunpack.c.l.b16 %v103
  %v473 = vunpack.c.h.b16 %v103
  %v474 = vunpack.c.l.b16 %v104
  %v475 = vunpack.c.h.b16 %v104
  %v476 = vunpack.c.l.b16 %v105
  %v477 = vunpack.c.h.b16 %v105
  %v478 = vunpack.c.l.b16 %v106
  %v479 = vunpack.c.h.b16 %v106
  %v480 = vunpack.c.l.b16 %v107
  %v481 = vunpack.c.h.b16 %v107
  %v482 = vunpack.c.l.b16 %v108
  %v483 = vunpack.c.h.b16 %v108
  %v484 = vunpack.c.l.b16 %v109
  %v485 = vunpack.c.h.b16 %v109
  %v486 = vunpack.c.l.b16 %v110
  %v487 = vunpack.c.h.b16 %v110
  %v488 = vunpack.c.l.b16 %v111
  %v489 = vunpack.c.h.b16 %v111
  %v490 = vunpack.c.l.b16 %v112
  %v491 = vunpack.c.h.b16 %v112
  %v492 = vunpack.c.l.b16 %v113
  %v493 = vunpack.c.h.b16 %v113
  %v494 = vunpack.c.l.b16 %v114
  %v495 = vunpack.c.h.b16 %v114
  %v496 = vunpack.c.l.b16 %v115
  %v497 = vunpack.c.h.b16 %v115
  %v498 = vunpack.c.l.b16 %v116
  %v499 = vunpack.c.h.b16 %v116
  %v500 = vunpack.c.l.b16 %v117
  %v501 = vunpack.c.h.b16 %v117
  %v502 = vunpack.c.l.b16 %v118
  %v503 = vunpack.c.h.b16 %v118
  %v504 = vunpack.c.l.b16 %v119
  %v505 = vunpack.c.h.b16 %v119
  %v506 = vunpack.c.l.b16 %v120
  %v507 = vunpack.c.h.b16 %v120
  %v508 = vunpack.c.l.b16 %v121
  %v509 = vunpack.c.h.b16 %v121
  %v510 = vunpack.c.l.b16 %v122
  %v511 = vunpack.c.h.b16 %v122
  %v512 = vunpack.c.l.b16 %v123
  %v513 = vunpack.c.h.b16 %v123
  %v514 = vunpack.c.l.b16 %v124
  %v515 = vunpack.c.h.b16 %v124
  %v516 = vunpack.c.l.b16 %v125
  %v517 = vunpack.c.h.b16 %v125
  %v518 = vunpack.c.l.b16 %v126
  %v519 = vunpack.c.h.b16 %v126
  %v520 = vunpack.c.l.b16 %v127
  %v521 = vunpack.c.h.b16 %v127
  %v522 = vunpack.c.l.b16 %v128
  %v523 = vunpack.c.h.b16 %v128
  %v524 = vunpack.c.l.b16 %v129
  %v525 = vunpack.c.h.b16 %v129
  %v526 = vunpack.c.l.b16 %v130
  %v527 = vunpack.c.h.b16 %v130
  %v528 = vunpack.c.l.b16 %v131
  %v529 = vunpack.c.h.b16 %v131
  %v530 = vunpack.c.l.b16 %v132
  %v531 = vunpack.c.h.b16 %v132
  %v532 = vunpack.c.l.b16 %v133
  %v533 = vunpack.c.h.b16 %v133
  %v534 = vunpack.c.l.b16 %v134
  %v535 = vunpack.c.h.b16 %v134
  %v536 = vunpack.c.l.b16 %v135
  %v537 = vunpack.c.h.b16 %v135
  %v538 = vunpack.c.l.b16 %v136
  %v539 = vunpack.c.h.b16 %v136
  %v540 = vunpack.c.l.b16 %v137
  %v541 = vunpack.c.h.b16 %v137
  %v542 = vunpack.c.l.b16 %v138
  %v543 = vunpack.c.h.b16 %v138
  %v544 = vunpack.c.l.b16 %v139
  %v545 = vunpack.c.h.b16 %v139
  %v546 = vunpack.c.l.b16 %v140
  %v547 = vunpack.c.h.b16 %v140
  %v548 = vunpack.c.l.b16 %v141
  %v549 = vunpack.c.h.b16 %v141
  %v550 = vunpack.c.l.b16 %v142
  %v551 = vunpack.c.h.b16 %v142
  %v552 = vunpack.c.l.b16 %v143
  %v553 = vunpack.c.h.b16 %v143
  %v554 = vunpack.c.l.b16 %v144
  %v555 = vunpack.c.h.b16 %v144
  %v556 = vunpack.c.l.b16 %v145
  %v557 = vunpack.c.h.b16 %v145
  %v558 = vunpack.c.l.b16 %v146
  %v559 = vunpack.c.h.b16 %v146
  %v560 = vunpack.c.l.b16 %v147
  %v561 = vunpack.c.h.b16 %v147
  %v562 = vunpack.c.l.b16 %v148
  %v563 = vunpack.c.h.b16 %v148
  %v564 = vunpack.c.l.b16 %v149
  %v565 = vunpack.c.h.b16 %v149
  %v566 = vunpack.c.l.b16 %v150
  %v567 = vunpack.c.h.b16 %v150
  %v568 = vunpack.c.l.b16 %v151
  %v569 = vunpack.c.h.b16 %v151
  %v570 = vpack.c.b16 %v316, %v314
  %v571 = vpack.c.b16 %v317, %v315
  %v572 = vpack.c.b16 %v320, %v318
  %v573 = vpack.c.b16 %v321, %v319
  %v574 = vpack.c.b16 %v324, %v322
  %v575 = vpack.c.b16 %v325, %v323
  %v576 = vpack.c.b16 %v328, %v326
  %v577 = vpack.c.b16 %v329, %v327
  %v578 = vpack.c.b16 %v332, %v330
  %v579 = vpack.c.b16 %v333, %v331
  %v580 = vpack.c.b16 %v336, %v334
  %v581 = vpack.c.b16 %v337, %v335
  %v582 = vpack.c.b16 %v340, %v338
  %v583 = vpack.c.b16 %v341, %v339
  %v584 = vpack.c.b16 %v344, %v342
  %v585 = vpack.c.b16 %v345, %v343
  %v586 = vpack.c.b16 %v348, %v346
  %v587 = vpack.c.b16 %v349, %v347
  %v588 = vpack.c.b16 %v352, %v350
  %v589 = vpack.c.b16 %v353, %v351
  %v590 = vpack.c.b16 %v356, %v354
  %v591 = vpack.c.b16 %v357, %v355
  %v592 = vpack.c.b16 %v360, %v358
  %v593 = vpack.c.b16 %v361, %v359
  %v594 = vpack.c.b16 %v364, %v362
  %v595 = vpack.c.b16 %v365, %v363
  %v596 = vpack.c.b16 %v368, %v366
  %v597 = vpack.c.b16 %v369, %v367
  %v598 = vpack.c.b16 %v372, %v370
  %v599 = vpack.c.b16 %v373, %v371
  %v600 = vpack.c.b16 %v376, %v374
  %v601 = vpack.c.b16 %v377, %v375
  %v602 = vpack.c.b16 %v380, %v378
  %v603 = vpack.c.b16 %v381, %v379
  %v604 = vpack.c.b16 %v384, %v382
  %v605 = vpack.c.b16 %v385, %v383
  %v606 = vpack.c.b16 %v388, %v386
  %v607 = vpack.c.b16 %v389, %v387
  %v608 = vpack.c.b16 %v392, %v390
  %v609 = vpack.c.b16 %v393, %v391
  %v610 = vpack.c.b16 %v396, %v394
  %v611 = vpack.c.b16 %v397, %v395
  %v612 = vpack.c.b16 %v400, %v398
  %v613 = vpack.c.b16 %v401, %v399
  %v614 = vpack.c.b16 %v404, %v402
  %v615 = vpack.c.b16 %v405, %v403
  %v616 = vpack.c.b16 %v408, %v406
  %v617 = vpack.c.b16 %v409, %v407
  %v618 = vpack.c.b16 %v412, %v410
  %v619 = vpack.c.b16 %v413, %v411
  %v620 = vpack.c.b16 %v416, %v414
  %v621 = vpack.c.b16 %v417, %v415
  %v622 = vpack.c.b16 %v420, %v418
  %v623 = vpack.c.b16 %v421, %v419
  %v624 = vpack.c.b16 %v424, %v422
  %v625 = vpack.c.b16 %v425, %v423
  %v626 = vpack.c.b16 %v428, %v426
  %v627 = vpack.c.b16 %v429, %v427
  %v628 = vpack.c.b16 %v432, %v430
  %v629 = vpack.c.b16 %v433, %v431
  %v630 = vpack.c.b16 %v436, %v434
  %v631 = vpack.c.b16 %v437, %v435
  %v632 = vpack.c.b16 %v440, %v438
  %v633 = vpack.c.b16 %v441, %v439
  %v634 = vpack.c.b16 %v444, %v442
  %v635 = vpack.c.b16 %v445, %v443
  %v636 = vpack.c.b16 %v448, %v446
  %v637 = vpack.c.b16 %v449, %v447
  %v638 = vpack.c.b16 %v452, %v450
  %v639 = vpack.c.b16 %v453, %v451
  %v640 = vpack.c.b16 %v456, %v454
  %v641 = vpack.c.b16 %v457, %v455
  %v642 = vpack.c.b16 %v460, %v458
  %v643 = vpack.c.b16 %v461, %v459
  %v644 = vpack.c.b16 %v464, %v462
  %v645 = vpack.c.b16 %v465, %v463
  %v646 = vpack.c.b16 %v468, %v466
  %v647 = vpack.c.b16 %v469, %v467
  %v648 = vpack.c.b16 %v472, %v470
  %v649 = vpack.c.b16 %v473, %v471
  %v650 = vpack.c.b16 %v476, %v474
  %v651 = vpack.c.b16 %v477, %v475
  %v652 = vpack.c.b16 %v480, %v478
  %v653 = vpack.c.b16 %v481, %v479
  %v654 = vpack.c.b16 %v484, %v482
  %v655 = vpack.c.b16 %v485, %v483
  %v656 = vpack.c.b16 %v488, %v486
  %v657 = vpack.c.b16 %v489, %v487
  %v658 = vpack.c.b16 %v492, %v490
  %v659 = vpack.c.b16 %v493, %v491
  %v660 = vpack.c.b16 %v496, %v494
  %v661 = vpack.c.b16 %v497, %v495
  %v662 = vpack.c.b16 %v500, %v498
  %v663 = vpack.c.b16 %v501, %v499
  %v664 = vpack.c.b16 %v504, %v502
  %v665 = vpack.c.b16 %v505, %v503
  %v666 = vpack.c.b16 %v508, %v506
  %v667 = vpack.c.b16 %v509, %v507
  %v668 = vpack.c.b16 %v512, %v510
  %v669 = vpack.c.b16 %v513, %v511
  %v670 = vpack.c.b16 %v516, %v514
  %v671 = vpack.c.b16 %v517, %v515
  %v672 = vpack.c.b16 %v520, %v518
  %v673 = vpack.c.b16 %v521, %v519
  %v674 = vpack.c.b16 %v524, %v522
  %v675 = vpack.c.b16 %v525, %v523
  %v676 = vpack.c.b16 %v528, %v526
  %v677 = vpack.c.b16 %v529, %v527
  %v678 = vpack.c.b16 %v532, %v530
  %v679 = vpack.c.b16 %v533, %v531
  %v680 = vpack.c.b16 %v536, %v534
  %v681 = vpack.c.b16 %v537, %v535
  %v682 = vpack.c.b16 %v540, %v538
  %v683 = vpack.c.b16 %v541, %v539
  %v684 = vpack.c.b16 %v544, %v542
  %v685 = vpack.c.b16 %v545, %v543
  %v686 = vpack.c.b16 %v548, %v546
  %v687 = vpack.c.b16 %v549, %v547
  %v688 = vpack.c.b16 %v552, %v550
  %v689 = vpack.c.b16 %v553, %v551
  %v690 = vpack.c.b16 %v556, %v554
  %v691 = vpack.c.b16 %v557, %v555
  %v692 = vpack.c.b16 %v560, %v558
  %v693 = vpack.c.b16 %v561, %v559
  %v694 = vpack.c.b16 %v564, %v562
  %v695 = vpack.c.b16 %v565, %v563
  %v696 = vpack.c.b16 %v568, %v566
  %v697 = vpack.c.b16 %v569, %v567
  %826 = vmatpush.bf16.msra.mxu0 %v584
  %827 = vmatpush.bf16.msra.mxu0 %v582
  %828 = vmatpush.bf16.msra.mxu0 %v580
  %829 = vmatpush.bf16.msra.mxu0 %v578
  %830 = vmatpush.bf16.msra.mxu0 %v576
  %831 = vmatpush.bf16.msra.mxu0 %v574
  %832 = vmatpush.bf16.msra.mxu0 %v572
  %833 = vmatpush.bf16.msra.mxu0 %v570
  %834 = vmatmul.bf16.gmra.mxu0 %v170
  %v835 = vpop.f32.mrf.mxu0
  %v836 = vadd.f32 %v154, %v835
  %v837 = vpop.f32.mrf.mxu0
  %838 = vdwg.mxu0
  %839 = vmatpush.bf16.msra.mxu0 %v600
  %840 = vmatpush.bf16.msra.mxu0 %v598
  %841 = vmatpush.bf16.msra.mxu0 %v596
  %842 = vmatpush.bf16.msra.mxu0 %v594
  %843 = vmatpush.bf16.msra.mxu0 %v592
  %844 = vmatpush.bf16.msra.mxu0 %v590
  %845 = vmatpush.bf16.msra.mxu0 %v588
  %846 = vmatpush.bf16.msra.mxu0 %v586
  %847 = vmatmul.bf16.gmra.mxu0 %v171
  %v848 = vpop.f32.mrf.mxu0
  %v849 = vadd.f32 %v836, %v848
  %v850 = vpop.f32.mrf.mxu0
  %851 = vdwg.mxu0
  %852 = vmatpush.bf16.msra.mxu0 %v616
  %853 = vmatpush.bf16.msra.mxu0 %v614
  %854 = vmatpush.bf16.msra.mxu0 %v612
  %855 = vmatpush.bf16.msra.mxu0 %v610
  %856 = vmatpush.bf16.msra.mxu0 %v608
  %857 = vmatpush.bf16.msra.mxu0 %v606
  %858 = vmatpush.bf16.msra.mxu0 %v604
  %859 = vmatpush.bf16.msra.mxu0 %v602
  %860 = vmatmul.bf16.gmra.mxu0 %v172
  %v861 = vpop.f32.mrf.mxu0
  %v862 = vadd.f32 %v849, %v861
  %v863 = vpop.f32.mrf.mxu0
  %864 = vdwg.mxu0
  %865 = vmatpush.bf16.msra.mxu0 %v632
  %866 = vmatpush.bf16.msra.mxu0 %v630
  %867 = vmatpush.bf16.msra.mxu0 %v628
  %868 = vmatpush.bf16.msra.mxu0 %v626
  %869 = vmatpush.bf16.msra.mxu0 %v624
  %870 = vmatpush.bf16.msra.mxu0 %v622
  %871 = vmatpush.bf16.msra.mxu0 %v620
  %872 = vmatpush.bf16.msra.mxu0 %v618
  %873 = vmatmul.bf16.gmra.mxu0 %v173
  %v874 = vpop.f32.mrf.mxu0
  %v875 = vadd.f32 %v862, %v874
  %v876 = vpop.f32.mrf.mxu0
  %877 = vdwg.mxu0
  %878 = vmatpush.bf16.msra.mxu0 %v648
  %879 = vmatpush.bf16.msra.mxu0 %v646
  %880 = vmatpush.bf16.msra.mxu0 %v644
  %881 = vmatpush.bf16.msra.mxu0 %v642
  %882 = vmatpush.bf16.msra.mxu0 %v640
  %883 = vmatpush.bf16.msra.mxu0 %v638
  %884 = vmatpush.bf16.msra.mxu0 %v636
  %885 = vmatpush.bf16.msra.mxu0 %v634
  %886 = vmatmul.bf16.gmra.mxu0 %v174
  %v887 = vpop.f32.mrf.mxu0
  %v888 = vadd.f32 %v875, %v887
  %v889 = vpop.f32.mrf.mxu0
  %890 = vdwg.mxu0
  %891 = vmatpush.bf16.msra.mxu0 %v664
  %892 = vmatpush.bf16.msra.mxu0 %v662
  %893 = vmatpush.bf16.msra.mxu0 %v660
  %894 = vmatpush.bf16.msra.mxu0 %v658
  %895 = vmatpush.bf16.msra.mxu0 %v656
  %896 = vmatpush.bf16.msra.mxu0 %v654
  %897 = vmatpush.bf16.msra.mxu0 %v652
  %898 = vmatpush.bf16.msra.mxu0 %v650
  %899 = vmatmul.bf16.gmra.mxu0 %v175
  %v900 = vpop.f32.mrf.mxu0
  %v901 = vadd.f32 %v888, %v900
  %v902 = vpop.f32.mrf.mxu0
  %903 = vdwg.mxu0
  %904 = vmatpush.bf16.msra.mxu0 %v680
  %905 = vmatpush.bf16.msra.mxu0 %v678
  %906 = vmatpush.bf16.msra.mxu0 %v676
  %907 = vmatpush.bf16.msra.mxu0 %v674
  %908 = vmatpush.bf16.msra.mxu0 %v672
  %909 = vmatpush.bf16.msra.mxu0 %v670
  %910 = vmatpush.bf16.msra.mxu0 %v668
  %911 = vmatpush.bf16.msra.mxu0 %v666
  %912 = vmatmul.bf16.gmra.mxu0 %v176
  %v913 = vpop.f32.mrf.mxu0
  %v914 = vadd.f32 %v901, %v913
  %v915 = vpop.f32.mrf.mxu0
  %916 = vdwg.mxu0
  %917 = vmatpush.bf16.msra.mxu0 %v696
  %918 = vmatpush.bf16.msra.mxu0 %v694
  %919 = vmatpush.bf16.msra.mxu0 %v692
  %920 = vmatpush.bf16.msra.mxu0 %v690
  %921 = vmatpush.bf16.msra.mxu0 %v688
  %922 = vmatpush.bf16.msra.mxu0 %v686
  %923 = vmatpush.bf16.msra.mxu0 %v684
  %924 = vmatpush.bf16.msra.mxu0 %v682
  %925 = vmatmul.bf16.gmra.mxu0 %v177
  %v926 = vpop.f32.mrf.mxu0
  %v927 = vadd.f32 %v914, %v926
  %v928 = vpop.f32.mrf.mxu0
  %929 = vdwg.mxu0
  %930 = vmatpush.bf16.msra.mxu0 %v585
  %931 = vmatpush.bf16.msra.mxu0 %v583
  %932 = vmatpush.bf16.msra.mxu0 %v581
  %933 = vmatpush.bf16.msra.mxu0 %v579
  %934 = vmatpush.bf16.msra.mxu0 %v577
  %935 = vmatpush.bf16.msra.mxu0 %v575
  %936 = vmatpush.bf16.msra.mxu0 %v573
  %937 = vmatpush.bf16.msra.mxu0 %v571
  %938 = vmatmul.bf16.gmra.mxu0 %v170
  %v939 = vpop.f32.mrf.mxu0
  %v940 = vadd.f32 %v155, %v939
  %v941 = vpop.f32.mrf.mxu0
  %942 = vdwg.mxu0
  %943 = vmatpush.bf16.msra.mxu0 %v601
  %944 = vmatpush.bf16.msra.mxu0 %v599
  %945 = vmatpush.bf16.msra.mxu0 %v597
  %946 = vmatpush.bf16.msra.mxu0 %v595
  %947 = vmatpush.bf16.msra.mxu0 %v593
  %948 = vmatpush.bf16.msra.mxu0 %v591
  %949 = vmatpush.bf16.msra.mxu0 %v589
  %950 = vmatpush.bf16.msra.mxu0 %v587
  %951 = vmatmul.bf16.gmra.mxu0 %v171
  %v952 = vpop.f32.mrf.mxu0
  %v953 = vadd.f32 %v940, %v952
  %v954 = vpop.f32.mrf.mxu0
  %955 = vdwg.mxu0
  %956 = vmatpush.bf16.msra.mxu0 %v617
  %957 = vmatpush.bf16.msra.mxu0 %v615
  %958 = vmatpush.bf16.msra.mxu0 %v613
  %959 = vmatpush.bf16.msra.mxu0 %v611
  %960 = vmatpush.bf16.msra.mxu0 %v609
  %961 = vmatpush.bf16.msra.mxu0 %v607
  %962 = vmatpush.bf16.msra.mxu0 %v605
  %963 = vmatpush.bf16.msra.mxu0 %v603
  %964 = vmatmul.bf16.gmra.mxu0 %v172
  %v965 = vpop.f32.mrf.mxu0
  %v966 = vadd.f32 %v953, %v965
  %v967 = vpop.f32.mrf.mxu0
  %968 = vdwg.mxu0
  %969 = vmatpush.bf16.msra.mxu0 %v633
  %970 = vmatpush.bf16.msra.mxu0 %v631
  %971 = vmatpush.bf16.msra.mxu0 %v629
  %972 = vmatpush.bf16.msra.mxu0 %v627
  %973 = vmatpush.bf16.msra.mxu0 %v625
  %974 = vmatpush.bf16.msra.mxu0 %v623
  %975 = vmatpush.bf16.msra.mxu0 %v621
  %976 = vmatpush.bf16.msra.mxu0 %v619
  %977 = vmatmul.bf16.gmra.mxu0 %v173
  %v978 = vpop.f32.mrf.mxu0
  %v979 = vadd.f32 %v966, %v978
  %v980 = vpop.f32.mrf.mxu0
  %981 = vdwg.mxu0
  %982 = vmatpush.bf16.msra.mxu0 %v649
  %983 = vmatpush.bf16.msra.mxu0 %v647
  %984 = vmatpush.bf16.msra.mxu0 %v645
  %985 = vmatpush.bf16.msra.mxu0 %v643
  %986 = vmatpush.bf16.msra.mxu0 %v641
  %987 = vmatpush.bf16.msra.mxu0 %v639
  %988 = vmatpush.bf16.msra.mxu0 %v637
  %989 = vmatpush.bf16.msra.mxu0 %v635
  %990 = vmatmul.bf16.gmra.mxu0 %v174
  %v991 = vpop.f32.mrf.mxu0
  %v992 = vadd.f32 %v979, %v991
  %v993 = vpop.f32.mrf.mxu0
  %994 = vdwg.mxu0
  %995 = vmatpush.bf16.msra.mxu0 %v665
  %996 = vmatpush.bf16.msra.mxu0 %v663
  %997 = vmatpush.bf16.msra.mxu0 %v661
  %998 = vmatpush.bf16.msra.mxu0 %v659
  %999 = vmatpush.bf16.msra.mxu0 %v657
  %1000 = vmatpush.bf16.msra.mxu0 %v655
  %1001 = vmatpush.bf16.msra.mxu0 %v653
  %1002 = vmatpush.bf16.msra.mxu0 %v651
  %1003 = vmatmul.bf16.gmra.mxu0 %v175
  %v1004 = vpop.f32.mrf.mxu0
  %v1005 = vadd.f32 %v992, %v1004
  %v1006 = vpop.f32.mrf.mxu0
  %1007 = vdwg.mxu0
  %1008 = vmatpush.bf16.msra.mxu0 %v681
  %1009 = vmatpush.bf16.msra.mxu0 %v679
  %1010 = vmatpush.bf16.msra.mxu0 %v677
  %1011 = vmatpush.bf16.msra.mxu0 %v675
  %1012 = vmatpush.bf16.msra.mxu0 %v673
  %1013 = vmatpush.bf16.msra.mxu0 %v671
  %1014 = vmatpush.bf16.msra.mxu0 %v669
  %1015 = vmatpush.bf16.msra.mxu0 %v667
  %1016 = vmatmul.bf16.gmra.mxu0 %v176
  %v1017 = vpop.f32.mrf.mxu0
  %v1018 = vadd.f32 %v1005, %v1017
  %v1019 = vpop.f32.mrf.mxu0
  %1020 = vdwg.mxu0
  %1021 = vmatpush.bf16.msra.mxu0 %v697
  %1022 = vmatpush.bf16.msra.mxu0 %v695
  %1023 = vmatpush.bf16.msra.mxu0 %v693
  %1024 = vmatpush.bf16.msra.mxu0 %v691
  %1025 = vmatpush.bf16.msra.mxu0 %v689
  %1026 = vmatpush.bf16.msra.mxu0 %v687
  %1027 = vmatpush.bf16.msra.mxu0 %v685
  %1028 = vmatpush.bf16.msra.mxu0 %v683
  %1029 = vmatmul.bf16.gmra.mxu0 %v177
  %v1030 = vpop.f32.mrf.mxu0
  %v1031 = vadd.f32 %v1018, %v1030
  %v1032 = vpop.f32.mrf.mxu0
  %1033 = vdwg.mxu0
  %1034 = vst [vmem:[%s4] sm:$0xff] %v927
  %1035 = vst [vmem:[%s5] sm:$0xff] %v1031
  %v1036 = vld [vmem:[%s3] sm:$0xff]
  %v1037 = vmul.f32 %v1031, 0.5
  %v1038 = vmul.f32 %v1037, 1.442695
  %v1039 = vpow.pop %v1038
  %v1040 = vmul.f32 %v1036, %v1039
  %v1041 = vadd.f32 %v927, %v1040
  %1042 = vst [vmem:[%s6] sm:$0xff] %v1041
  // Predicated region
  $region18: #{vae_forward.15} parent=0 // pred_check
    _
  $region19: #{vae_forward.15} parent=0 // pred_check_branch
    %1044 = sbr.rel (0) target = $region21
  $region20: #{vae_forward.15} parent=0 // pred_region
    _
  $region21: #{vae_forward.15} parent=0 // pred_fallthru
    _
  // Predicated region
  $region22: #{vae_forward.15} parent=0 // pred_check
    _
  $region23: #{vae_forward.15} parent=0 // pred_check_branch
    %1046 = sbr.rel (0) target = $region25
  $region24: #{vae_forward.15} parent=0 // pred_region
    _
  $region25: #{vae_forward.15} parent=0 // pred_fallthru
    _
  // Predicated region
  $region26: #{vae_forward.15} parent=0 // pred_check
    _
  $region27: #{vae_forward.15} parent=0 // pred_check_branch
    %1048 = sbr.rel (0) target = $region29
  $region28: #{vae_forward.15} parent=0 // pred_region
    _
  $region29: #{vae_forward.15} parent=0 // pred_fallthru
    _
  // Predicated region
  $region30: #{vae_forward.15} parent=0 // pred_check
    _
  $region31: #{vae_forward.15} parent=0 // pred_check_branch
    %1050 = sbr.rel (0) target = $region33
  $region32: #{vae_forward.15} parent=0 // pred_region
    _
  $region33: #{vae_forward.15} parent=0 // pred_fallthru
    _
  // Predicated region
  $region34: #{vae_forward.15} parent=0 // pred_check
    _
  $region35: #{vae_forward.15} parent=0 // pred_check_branch
    %1052 = sbr.rel (0) target = $region37
  $region36: #{vae_forward.15} parent=0 // pred_region
    _
  $region37: #{vae_forward.15} parent=0 // pred_fallthru
    _
  // Predicated region
  $region38: #{vae_forward.15} parent=0 // pred_check
    _
  $region39: #{vae_forward.15} parent=0 // pred_check_branch
    %1054 = sbr.rel (0) target = $region41
  $region40: #{vae_forward.15} parent=0 // pred_region
    _
  $region41: #{vae_forward.15} parent=0 // pred_fallthru
    _

// kernel: vae_forward.16
$region0: #{vae_forward.16}
  #allocation0 [shape = 'u32[]', space=smem, size = 0x4, offset = 0x4, fixed_abs, tag = 'smem constant byte address 0x4 - core index']
  #allocation1 [shape = 'u32[72,128]{1,0:T(1,128)}', space=vmem, size = 0x9000, scoped, tag = 'internal scratch']
  %s0 = inlined_call_operand.vmem [shape: bf16[8,128], index: 0, kind: input, shape index: {}]
  %s1 = inlined_call_operand.vmem [shape: bf16[128,1024], index: 1, kind: input, shape index: {}]
  %s2 = inlined_call_operand.vmem [shape: f32[1,1024], index: 2, kind: input, shape index: {}]
  %s3 = inlined_call_operand.vmem [shape: bf16[8,1024], index: 3, kind: output, shape index: {}]
  %s4 = sld [smem:[#allocation0]]
  $region22: #{vae_forward.16} parent=0
    _
  %s6 = ssub.s32 1, %s4
  %s7 = scalar_select 0, %s6, %s4
  // Predicated region
  $region2: #{vae_forward.16} parent=0 // pred_check
    _
  $region3: #{vae_forward.16} parent=0 // pred_check_branch
    %9 = sbr.rel (0) target = $region5
  $region4: #{vae_forward.16} parent=0 // pred_region
    _
  $region5: #{vae_forward.16} parent=0 // pred_fallthru
    _
  // Predicated region
  $region6: #{vae_forward.16} parent=0 // pred_check
    _
  $region7: #{vae_forward.16} parent=0 // pred_check_branch
    %11 = sbr.rel (0) target = $region9
  $region8: #{vae_forward.16} parent=0 // pred_region
    _
  $region9: #{vae_forward.16} parent=0 // pred_fallthru
    _
  // Predicated region
  $region10: #{vae_forward.16} parent=0 // pred_check
    _
  $region11: #{vae_forward.16} parent=0 // pred_check_branch
    %13 = sbr.rel (0) target = $region13
  $region12: #{vae_forward.16} parent=0 // pred_region
    _
  $region13: #{vae_forward.16} parent=0 // pred_fallthru
    _
  %v14 = vld [vmem:[%s0] sm:$0xf]
  %v15 = vld [vmem:[%s1] sm:$0xff]
  %v16 = vld [vmem:[%s1 + $0x8] sm:$0xff]
  %v17 = vld [vmem:[%s1 + $0x10] sm:$0xff]
  %v18 = vld [vmem:[%s1 + $0x18] sm:$0xff]
  %v19 = vld [vmem:[%s1 + $0x20] sm:$0xff]
  %v20 = vld [vmem:[%s1 + $0x28] sm:$0xff]
  %v21 = vld [vmem:[%s1 + $0x30] sm:$0xff]
  %v22 = vld [vmem:[%s1 + $0x38] sm:$0xff]
  %v23 = vld [vmem:[%s1 + $0x40] sm:$0xff]
  %v24 = vld [vmem:[%s1 + $0x48] sm:$0xff]
  %v25 = vld [vmem:[%s1 + $0x50] sm:$0xff]
  %v26 = vld [vmem:[%s1 + $0x58] sm:$0xff]
  %v27 = vld [vmem:[%s1 + $0x60] sm:$0xff]
  %v28 = vld [vmem:[%s1 + $0x68] sm:$0xff]
  %v29 = vld [vmem:[%s1 + $0x70] sm:$0xff]
  %v30 = vld [vmem:[%s1 + $0x78] sm:$0xff]
  %v31 = vld [vmem:[%s1 + $0x80] sm:$0xff]
  %v32 = vld [vmem:[%s1 + $0x88] sm:$0xff]
  %v33 = vld [vmem:[%s1 + $0x90] sm:$0xff]
  %v34 = vld [vmem:[%s1 + $0x98] sm:$0xff]
  %v35 = vld [vmem:[%s1 + $0xa0] sm:$0xff]
  %v36 = vld [vmem:[%s1 + $0xa8] sm:$0xff]
  %v37 = vld [vmem:[%s1 + $0xb0] sm:$0xff]
  %v38 = vld [vmem:[%s1 + $0xb8] sm:$0xff]
  %v39 = vld [vmem:[%s1 + $0xc0] sm:$0xff]
  %v40 = vld [vmem:[%s1 + $0xc8] sm:$0xff]
  %v41 = vld [vmem:[%s1 + $0xd0] sm:$0xff]
  %v42 = vld [vmem:[%s1 + $0xd8] sm:$0xff]
  %v43 = vld [vmem:[%s1 + $0xe0] sm:$0xff]
  %v44 = vld [vmem:[%s1 + $0xe8] sm:$0xff]
  %v45 = vld [vmem:[%s1 + $0xf0] sm:$0xff]
  %v46 = vld [vmem:[%s1 + $0xf8] sm:$0xff]
  %v47 = vld [vmem:[%s1 + $0x100] sm:$0xff]
  %v48 = vld [vmem:[%s1 + $0x108] sm:$0xff]
  %v49 = vld [vmem:[%s1 + $0x110] sm:$0xff]
  %v50 = vld [vmem:[%s1 + $0x118] sm:$0xff]
  %v51 = vld [vmem:[%s1 + $0x120] sm:$0xff]
  %v52 = vld [vmem:[%s1 + $0x128] sm:$0xff]
  %v53 = vld [vmem:[%s1 + $0x130] sm:$0xff]
  %v54 = vld [vmem:[%s1 + $0x138] sm:$0xff]
  %v55 = vld [vmem:[%s1 + $0x140] sm:$0xff]
  %v56 = vld [vmem:[%s1 + $0x148] sm:$0xff]
  %v57 = vld [vmem:[%s1 + $0x150] sm:$0xff]
  %v58 = vld [vmem:[%s1 + $0x158] sm:$0xff]
  %v59 = vld [vmem:[%s1 + $0x160] sm:$0xff]
  %v60 = vld [vmem:[%s1 + $0x168] sm:$0xff]
  %v61 = vld [vmem:[%s1 + $0x170] sm:$0xff]
  %v62 = vld [vmem:[%s1 + $0x178] sm:$0xff]
  %v63 = vld [vmem:[%s1 + $0x180] sm:$0xff]
  %v64 = vld [vmem:[%s1 + $0x188] sm:$0xff]
  %v65 = vld [vmem:[%s1 + $0x190] sm:$0xff]
  %v66 = vld [vmem:[%s1 + $0x198] sm:$0xff]
  %v67 = vld [vmem:[%s1 + $0x1a0] sm:$0xff]
  %v68 = vld [vmem:[%s1 + $0x1a8] sm:$0xff]
  %v69 = vld [vmem:[%s1 + $0x1b0] sm:$0xff]
  %v70 = vld [vmem:[%s1 + $0x1b8] sm:$0xff]
  %v71 = vld [vmem:[%s1 + $0x1c0] sm:$0xff]
  %v72 = vld [vmem:[%s1 + $0x1c8] sm:$0xff]
  %v73 = vld [vmem:[%s1 + $0x1d0] sm:$0xff]
  %v74 = vld [vmem:[%s1 + $0x1d8] sm:$0xff]
  %v75 = vld [vmem:[%s1 + $0x1e0] sm:$0xff]
  %v76 = vld [vmem:[%s1 + $0x1e8] sm:$0xff]
  %v77 = vld [vmem:[%s1 + $0x1f0] sm:$0xff]
  %v78 = vld [vmem:[%s1 + $0x1f8] sm:$0xff]
  %v79 = vld [vmem:[%s2] sm:$0xff]
  %v81 = vperm.slane %v79, 0
  %v82 = vperm.slane %v79, 1
  %v83 = vperm.slane %v79, 2
  %v84 = vperm.slane %v79, 3
  %v85 = vperm.slane %v79, 4
  %v86 = vperm.slane %v79, 5
  %v87 = vperm.slane %v79, 6
  %v88 = vperm.slane %v79, 7
  %v161 = vunpack.c.l.b16 %v15
  %v162 = vunpack.c.h.b16 %v15
  %v163 = vunpack.c.l.b16 %v16
  %v164 = vunpack.c.h.b16 %v16
  %v165 = vunpack.c.l.b16 %v17
  %v166 = vunpack.c.h.b16 %v17
  %v167 = vunpack.c.l.b16 %v18
  %v168 = vunpack.c.h.b16 %v18
  %v169 = vunpack.c.l.b16 %v19
  %v170 = vunpack.c.h.b16 %v19
  %v171 = vunpack.c.l.b16 %v20
  %v172 = vunpack.c.h.b16 %v20
  %v173 = vunpack.c.l.b16 %v21
  %v174 = vunpack.c.h.b16 %v21
  %v175 = vunpack.c.l.b16 %v22
  %v176 = vunpack.c.h.b16 %v22
  %v177 = vunpack.c.l.b16 %v23
  %v178 = vunpack.c.h.b16 %v23
  %v179 = vunpack.c.l.b16 %v24
  %v180 = vunpack.c.h.b16 %v24
  %v181 = vunpack.c.l.b16 %v25
  %v182 = vunpack.c.h.b16 %v25
  %v183 = vunpack.c.l.b16 %v26
  %v184 = vunpack.c.h.b16 %v26
  %v185 = vunpack.c.l.b16 %v27
  %v186 = vunpack.c.h.b16 %v27
  %v187 = vunpack.c.l.b16 %v28
  %v188 = vunpack.c.h.b16 %v28
  %v189 = vunpack.c.l.b16 %v29
  %v190 = vunpack.c.h.b16 %v29
  %v191 = vunpack.c.l.b16 %v30
  %v192 = vunpack.c.h.b16 %v30
  %v193 = vunpack.c.l.b16 %v31
  %v194 = vunpack.c.h.b16 %v31
  %v195 = vunpack.c.l.b16 %v32
  %v196 = vunpack.c.h.b16 %v32
  %v197 = vunpack.c.l.b16 %v33
  %v198 = vunpack.c.h.b16 %v33
  %v199 = vunpack.c.l.b16 %v34
  %v200 = vunpack.c.h.b16 %v34
  %v201 = vunpack.c.l.b16 %v35
  %v202 = vunpack.c.h.b16 %v35
  %v203 = vunpack.c.l.b16 %v36
  %v204 = vunpack.c.h.b16 %v36
  %v205 = vunpack.c.l.b16 %v37
  %v206 = vunpack.c.h.b16 %v37
  %v207 = vunpack.c.l.b16 %v38
  %v208 = vunpack.c.h.b16 %v38
  %v209 = vunpack.c.l.b16 %v39
  %v210 = vunpack.c.h.b16 %v39
  %v211 = vunpack.c.l.b16 %v40
  %v212 = vunpack.c.h.b16 %v40
  %v213 = vunpack.c.l.b16 %v41
  %v214 = vunpack.c.h.b16 %v41
  %v215 = vunpack.c.l.b16 %v42
  %v216 = vunpack.c.h.b16 %v42
  %v217 = vunpack.c.l.b16 %v43
  %v218 = vunpack.c.h.b16 %v43
  %v219 = vunpack.c.l.b16 %v44
  %v220 = vunpack.c.h.b16 %v44
  %v221 = vunpack.c.l.b16 %v45
  %v222 = vunpack.c.h.b16 %v45
  %v223 = vunpack.c.l.b16 %v46
  %v224 = vunpack.c.h.b16 %v46
  %v225 = vunpack.c.l.b16 %v47
  %v226 = vunpack.c.h.b16 %v47
  %v227 = vunpack.c.l.b16 %v48
  %v228 = vunpack.c.h.b16 %v48
  %v229 = vunpack.c.l.b16 %v49
  %v230 = vunpack.c.h.b16 %v49
  %v231 = vunpack.c.l.b16 %v50
  %v232 = vunpack.c.h.b16 %v50
  %v233 = vunpack.c.l.b16 %v51
  %v234 = vunpack.c.h.b16 %v51
  %v235 = vunpack.c.l.b16 %v52
  %v236 = vunpack.c.h.b16 %v52
  %v237 = vunpack.c.l.b16 %v53
  %v238 = vunpack.c.h.b16 %v53
  %v239 = vunpack.c.l.b16 %v54
  %v240 = vunpack.c.h.b16 %v54
  %v241 = vunpack.c.l.b16 %v55
  %v242 = vunpack.c.h.b16 %v55
  %v243 = vunpack.c.l.b16 %v56
  %v244 = vunpack.c.h.b16 %v56
  %v245 = vunpack.c.l.b16 %v57
  %v246 = vunpack.c.h.b16 %v57
  %v247 = vunpack.c.l.b16 %v58
  %v248 = vunpack.c.h.b16 %v58
  %v249 = vunpack.c.l.b16 %v59
  %v250 = vunpack.c.h.b16 %v59
  %v251 = vunpack.c.l.b16 %v60
  %v252 = vunpack.c.h.b16 %v60
  %v253 = vunpack.c.l.b16 %v61
  %v254 = vunpack.c.h.b16 %v61
  %v255 = vunpack.c.l.b16 %v62
  %v256 = vunpack.c.h.b16 %v62
  %v257 = vunpack.c.l.b16 %v63
  %v258 = vunpack.c.h.b16 %v63
  %v259 = vunpack.c.l.b16 %v64
  %v260 = vunpack.c.h.b16 %v64
  %v261 = vunpack.c.l.b16 %v65
  %v262 = vunpack.c.h.b16 %v65
  %v263 = vunpack.c.l.b16 %v66
  %v264 = vunpack.c.h.b16 %v66
  %v265 = vunpack.c.l.b16 %v67
  %v266 = vunpack.c.h.b16 %v67
  %v267 = vunpack.c.l.b16 %v68
  %v268 = vunpack.c.h.b16 %v68
  %v269 = vunpack.c.l.b16 %v69
  %v270 = vunpack.c.h.b16 %v69
  %v271 = vunpack.c.l.b16 %v70
  %v272 = vunpack.c.h.b16 %v70
  %v273 = vunpack.c.l.b16 %v71
  %v274 = vunpack.c.h.b16 %v71
  %v275 = vunpack.c.l.b16 %v72
  %v276 = vunpack.c.h.b16 %v72
  %v277 = vunpack.c.l.b16 %v73
  %v278 = vunpack.c.h.b16 %v73
  %v279 = vunpack.c.l.b16 %v74
  %v280 = vunpack.c.h.b16 %v74
  %v281 = vunpack.c.l.b16 %v75
  %v282 = vunpack.c.h.b16 %v75
  %v283 = vunpack.c.l.b16 %v76
  %v284 = vunpack.c.h.b16 %v76
  %v285 = vunpack.c.l.b16 %v77
  %v286 = vunpack.c.h.b16 %v77
  %v287 = vunpack.c.l.b16 %v78
  %v288 = vunpack.c.h.b16 %v78
  %v289 = vpack.c.b16 %v169, %v161
  %v290 = vpack.c.b16 %v170, %v162
  %v291 = vpack.c.b16 %v171, %v163
  %v292 = vpack.c.b16 %v172, %v164
  %v293 = vpack.c.b16 %v173, %v165
  %v294 = vpack.c.b16 %v174, %v166
  %v295 = vpack.c.b16 %v175, %v167
  %v296 = vpack.c.b16 %v176, %v168
  %v297 = vpack.c.b16 %v185, %v177
  %v298 = vpack.c.b16 %v186, %v178
  %v299 = vpack.c.b16 %v187, %v179
  %v300 = vpack.c.b16 %v188, %v180
  %v301 = vpack.c.b16 %v189, %v181
  %v302 = vpack.c.b16 %v190, %v182
  %v303 = vpack.c.b16 %v191, %v183
  %v304 = vpack.c.b16 %v192, %v184
  %v305 = vpack.c.b16 %v201, %v193
  %v306 = vpack.c.b16 %v202, %v194
  %v307 = vpack.c.b16 %v203, %v195
  %v308 = vpack.c.b16 %v204, %v196
  %v309 = vpack.c.b16 %v205, %v197
  %v310 = vpack.c.b16 %v206, %v198
  %v311 = vpack.c.b16 %v207, %v199
  %v312 = vpack.c.b16 %v208, %v200
  %v313 = vpack.c.b16 %v217, %v209
  %v314 = vpack.c.b16 %v218, %v210
  %v315 = vpack.c.b16 %v219, %v211
  %v316 = vpack.c.b16 %v220, %v212
  %v317 = vpack.c.b16 %v221, %v213
  %v318 = vpack.c.b16 %v222, %v214
  %v319 = vpack.c.b16 %v223, %v215
  %v320 = vpack.c.b16 %v224, %v216
  %v321 = vpack.c.b16 %v233, %v225
  %v322 = vpack.c.b16 %v234, %v226
  %v323 = vpack.c.b16 %v235, %v227
  %v324 = vpack.c.b16 %v236, %v228
  %v325 = vpack.c.b16 %v237, %v229
  %v326 = vpack.c.b16 %v238, %v230
  %v327 = vpack.c.b16 %v239, %v231
  %v328 = vpack.c.b16 %v240, %v232
  %v329 = vpack.c.b16 %v249, %v241
  %v330 = vpack.c.b16 %v250, %v242
  %v331 = vpack.c.b16 %v251, %v243
  %v332 = vpack.c.b16 %v252, %v244
  %v333 = vpack.c.b16 %v253, %v245
  %v334 = vpack.c.b16 %v254, %v246
  %v335 = vpack.c.b16 %v255, %v247
  %v336 = vpack.c.b16 %v256, %v248
  %v337 = vpack.c.b16 %v265, %v257
  %v338 = vpack.c.b16 %v266, %v258
  %v339 = vpack.c.b16 %v267, %v259
  %v340 = vpack.c.b16 %v268, %v260
  %v341 = vpack.c.b16 %v269, %v261
  %v342 = vpack.c.b16 %v270, %v262
  %v343 = vpack.c.b16 %v271, %v263
  %v344 = vpack.c.b16 %v272, %v264
  %v345 = vpack.c.b16 %v281, %v273
  %v346 = vpack.c.b16 %v282, %v274
  %v347 = vpack.c.b16 %v283, %v275
  %v348 = vpack.c.b16 %v284, %v276
  %v349 = vpack.c.b16 %v285, %v277
  %v350 = vpack.c.b16 %v286, %v278
  %v351 = vpack.c.b16 %v287, %v279
  %v352 = vpack.c.b16 %v288, %v280
  %417 = vmatpush.bf16.msra.mxu0 %v345
  %418 = vmatpush.bf16.msra.mxu0 %v337
  %419 = vmatpush.bf16.msra.mxu0 %v329
  %420 = vmatpush.bf16.msra.mxu0 %v321
  %421 = vmatpush.bf16.msra.mxu0 %v313
  %422 = vmatpush.bf16.msra.mxu0 %v305
  %423 = vmatpush.bf16.msra.mxu0 %v297
  %424 = vmatpush.bf16.msra.mxu0 %v289
  %425 = vmatmul.bf16.gmra.mxu0 %v14
  %v426 = vpop.f32.mrf.mxu0
  %v427 = vadd.f32 %v81, %v426
  %v428 = vpop.f32.mrf.mxu0
  %429 = vdwg.mxu0
  %430 = vmatpush.bf16.msra.mxu0 %v346
  %431 = vmatpush.bf16.msra.mxu0 %v338
  %432 = vmatpush.bf16.msra.mxu0 %v330
  %433 = vmatpush.bf16.msra.mxu0 %v322
  %434 = vmatpush.bf16.msra.mxu0 %v314
  %435 = vmatpush.bf16.msra.mxu0 %v306
  %436 = vmatpush.bf16.msra.mxu0 %v298
  %437 = vmatpush.bf16.msra.mxu0 %v290
  %438 = vmatmul.bf16.gmra.mxu0 %v14
  %v439 = vpop.f32.mrf.mxu0
  %v440 = vadd.f32 %v82, %v439
  %v441 = vpop.f32.mrf.mxu0
  %442 = vdwg.mxu0
  %443 = vmatpush.bf16.msra.mxu0 %v347
  %444 = vmatpush.bf16.msra.mxu0 %v339
  %445 = vmatpush.bf16.msra.mxu0 %v331
  %446 = vmatpush.bf16.msra.mxu0 %v323
  %447 = vmatpush.bf16.msra.mxu0 %v315
  %448 = vmatpush.bf16.msra.mxu0 %v307
  %449 = vmatpush.bf16.msra.mxu0 %v299
  %450 = vmatpush.bf16.msra.mxu0 %v291
  %451 = vmatmul.bf16.gmra.mxu0 %v14
  %v452 = vpop.f32.mrf.mxu0
  %v453 = vadd.f32 %v83, %v452
  %v454 = vpop.f32.mrf.mxu0
  %455 = vdwg.mxu0
  %456 = vmatpush.bf16.msra.mxu0 %v348
  %457 = vmatpush.bf16.msra.mxu0 %v340
  %458 = vmatpush.bf16.msra.mxu0 %v332
  %459 = vmatpush.bf16.msra.mxu0 %v324
  %460 = vmatpush.bf16.msra.mxu0 %v316
  %461 = vmatpush.bf16.msra.mxu0 %v308
  %462 = vmatpush.bf16.msra.mxu0 %v300
  %463 = vmatpush.bf16.msra.mxu0 %v292
  %464 = vmatmul.bf16.gmra.mxu0 %v14
  %v465 = vpop.f32.mrf.mxu0
  %v466 = vadd.f32 %v84, %v465
  %v467 = vpop.f32.mrf.mxu0
  %468 = vdwg.mxu0
  %469 = vmatpush.bf16.msra.mxu0 %v349
  %470 = vmatpush.bf16.msra.mxu0 %v341
  %471 = vmatpush.bf16.msra.mxu0 %v333
  %472 = vmatpush.bf16.msra.mxu0 %v325
  %473 = vmatpush.bf16.msra.mxu0 %v317
  %474 = vmatpush.bf16.msra.mxu0 %v309
  %475 = vmatpush.bf16.msra.mxu0 %v301
  %476 = vmatpush.bf16.msra.mxu0 %v293
  %477 = vmatmul.bf16.gmra.mxu0 %v14
  %v478 = vpop.f32.mrf.mxu0
  %v479 = vadd.f32 %v85, %v478
  %v480 = vpop.f32.mrf.mxu0
  %481 = vdwg.mxu0
  %482 = vmatpush.bf16.msra.mxu0 %v350
  %483 = vmatpush.bf16.msra.mxu0 %v342
  %484 = vmatpush.bf16.msra.mxu0 %v334
  %485 = vmatpush.bf16.msra.mxu0 %v326
  %486 = vmatpush.bf16.msra.mxu0 %v318
  %487 = vmatpush.bf16.msra.mxu0 %v310
  %488 = vmatpush.bf16.msra.mxu0 %v302
  %489 = vmatpush.bf16.msra.mxu0 %v294
  %490 = vmatmul.bf16.gmra.mxu0 %v14
  %v491 = vpop.f32.mrf.mxu0
  %v492 = vadd.f32 %v86, %v491
  %v493 = vpop.f32.mrf.mxu0
  %494 = vdwg.mxu0
  %495 = vmatpush.bf16.msra.mxu0 %v351
  %496 = vmatpush.bf16.msra.mxu0 %v343
  %497 = vmatpush.bf16.msra.mxu0 %v335
  %498 = vmatpush.bf16.msra.mxu0 %v327
  %499 = vmatpush.bf16.msra.mxu0 %v319
  %500 = vmatpush.bf16.msra.mxu0 %v311
  %501 = vmatpush.bf16.msra.mxu0 %v303
  %502 = vmatpush.bf16.msra.mxu0 %v295
  %503 = vmatmul.bf16.gmra.mxu0 %v14
  %v504 = vpop.f32.mrf.mxu0
  %v505 = vadd.f32 %v87, %v504
  %v506 = vpop.f32.mrf.mxu0
  %507 = vdwg.mxu0
  %508 = vmatpush.bf16.msra.mxu0 %v352
  %509 = vmatpush.bf16.msra.mxu0 %v344
  %510 = vmatpush.bf16.msra.mxu0 %v336
  %511 = vmatpush.bf16.msra.mxu0 %v328
  %512 = vmatpush.bf16.msra.mxu0 %v320
  %513 = vmatpush.bf16.msra.mxu0 %v312
  %514 = vmatpush.bf16.msra.mxu0 %v304
  %515 = vmatpush.bf16.msra.mxu0 %v296
  %516 = vmatmul.bf16.gmra.mxu0 %v14
  %v517 = vpop.f32.mrf.mxu0
  %v518 = vadd.f32 %v88, %v517
  %v519 = vpop.f32.mrf.mxu0
  %520 = vdwg.mxu0
  %v521 = vpack.c.bf16 %v440, %v427
  %v522 = vpack.c.bf16 %v466, %v453
  %v523 = vpack.c.bf16 %v492, %v479
  %v524 = vpack.c.bf16 %v518, %v505
  %525 = vst [vmem:[%s3] sm:$0xff] %v521
  %526 = vst [vmem:[%s3 + $0x8] sm:$0xff] %v522
  %527 = vst [vmem:[%s3 + $0x10] sm:$0xff] %v523
  %528 = vst [vmem:[%s3 + $0x18] sm:$0xff] %v524
  // Predicated region
  $region14: #{vae_forward.16} parent=0 // pred_check
    _
  $region15: #{vae_forward.16} parent=0 // pred_check_branch
    %530 = sbr.rel (0) target = $region17
  $region16: #{vae_forward.16} parent=0 // pred_region
    _
  $region17: #{vae_forward.16} parent=0 // pred_fallthru
    _
  // Predicated region
  $region18: #{vae_forward.16} parent=0 // pred_check
    _
  $region19: #{vae_forward.16} parent=0 // pred_check_branch
    %532 = sbr.rel (0) target = $region21
  $region20: #{vae_forward.16} parent=0 // pred_region
    _
  $region21: #{vae_forward.16} parent=0 // pred_fallthru
    _

// kernel: vae_forward.17
$region0: #{vae_forward.17}
  #allocation0 [shape = 'u32[]', space=smem, size = 0x4, offset = 0x4, fixed_abs, tag = 'smem constant byte address 0x4 - core index']
  #allocation1 [shape = 'u32[72,128]{1,0:T(1,128)}', space=vmem, size = 0x9000, scoped, tag = 'internal scratch']
  %s0 = inlined_call_operand.vmem [shape: bf16[32,256], index: 0, kind: input, shape index: {}]
  %s1 = inlined_call_operand.vmem [shape: bf16[256,512], index: 1, kind: input, shape index: {}]
  %s2 = inlined_call_operand.vmem [shape: f32[1,512], index: 2, kind: input, shape index: {}]
  %s3 = inlined_call_operand.vmem [shape: f32[32,512], index: 3, kind: output, shape index: {0}]
  %s4 = inlined_call_operand.vmem [shape: f32[1,512], index: 4, kind: output, shape index: {1}]
  %s5 = inlined_call_operand.vmem [shape: f32[1,512], index: 5, kind: output, shape index: {2}]
  %6 = xla_tuple %s3, %s4, %s5
  %s7 = sld [smem:[#allocation0]]
  $region42: #{vae_forward.17} parent=0
    _
  %s9 = ssub.s32 1, %s7
  %s10 = scalar_select 0, %s9, %s7
  // Predicated region
  $region2: #{vae_forward.17} parent=0 // pred_check
    _
  $region3: #{vae_forward.17} parent=0 // pred_check_branch
    %12 = sbr.rel (0) target = $region5
  $region4: #{vae_forward.17} parent=0 // pred_region
    _
  $region5: #{vae_forward.17} parent=0 // pred_fallthru
    _
  // Predicated region
  $region6: #{vae_forward.17} parent=0 // pred_check
    _
  $region7: #{vae_forward.17} parent=0 // pred_check_branch
    %14 = sbr.rel (0) target = $region9
  $region8: #{vae_forward.17} parent=0 // pred_region
    _
  $region9: #{vae_forward.17} parent=0 // pred_fallthru
    _
  // Predicated region
  $region10: #{vae_forward.17} parent=0 // pred_check
    _
  $region11: #{vae_forward.17} parent=0 // pred_check_branch
    %16 = sbr.rel (0) target = $region13
  $region12: #{vae_forward.17} parent=0 // pred_region
    _
  $region13: #{vae_forward.17} parent=0 // pred_fallthru
    _
  %v17 = vld [vmem:[%s0] sm:$0xff]
  %v18 = vld [vmem:[%s0 + $0x8] sm:$0xff]
  %v19 = vld [vmem:[%s0 + $0x10] sm:$0xff]
  %v20 = vld [vmem:[%s0 + $0x18] sm:$0xff]
  %v21 = vld [vmem:[%s1] sm:$0xff]
  %v22 = vld [vmem:[%s1 + $0x8] sm:$0xff]
  %v23 = vld [vmem:[%s1 + $0x10] sm:$0xff]
  %v24 = vld [vmem:[%s1 + $0x18] sm:$0xff]
  %v25 = vld [vmem:[%s1 + $0x20] sm:$0xff]
  %v26 = vld [vmem:[%s1 + $0x28] sm:$0xff]
  %v27 = vld [vmem:[%s1 + $0x30] sm:$0xff]
  %v28 = vld [vmem:[%s1 + $0x38] sm:$0xff]
  %v29 = vld [vmem:[%s1 + $0x40] sm:$0xff]
  %v30 = vld [vmem:[%s1 + $0x48] sm:$0xff]
  %v31 = vld [vmem:[%s1 + $0x50] sm:$0xff]
  %v32 = vld [vmem:[%s1 + $0x58] sm:$0xff]
  %v33 = vld [vmem:[%s1 + $0x60] sm:$0xff]
  %v34 = vld [vmem:[%s1 + $0x68] sm:$0xff]
  %v35 = vld [vmem:[%s1 + $0x70] sm:$0xff]
  %v36 = vld [vmem:[%s1 + $0x78] sm:$0xff]
  %v37 = vld [vmem:[%s1 + $0x80] sm:$0xff]
  %v38 = vld [vmem:[%s1 + $0x88] sm:$0xff]
  %v39 = vld [vmem:[%s1 + $0x90] sm:$0xff]
  %v40 = vld [vmem:[%s1 + $0x98] sm:$0xff]
  %v41 = vld [vmem:[%s1 + $0xa0] sm:$0xff]
  %v42 = vld [vmem:[%s1 + $0xa8] sm:$0xff]
  %v43 = vld [vmem:[%s1 + $0xb0] sm:$0xff]
  %v44 = vld [vmem:[%s1 + $0xb8] sm:$0xff]
  %v45 = vld [vmem:[%s1 + $0xc0] sm:$0xff]
  %v46 = vld [vmem:[%s1 + $0xc8] sm:$0xff]
  %v47 = vld [vmem:[%s1 + $0xd0] sm:$0xff]
  %v48 = vld [vmem:[%s1 + $0xd8] sm:$0xff]
  %v49 = vld [vmem:[%s1 + $0xe0] sm:$0xff]
  %v50 = vld [vmem:[%s1 + $0xe8] sm:$0xff]
  %v51 = vld [vmem:[%s1 + $0xf0] sm:$0xff]
  %v52 = vld [vmem:[%s1 + $0xf8] sm:$0xff]
  %v53 = vld [vmem:[%s1 + $0x100] sm:$0xff]
  %v54 = vld [vmem:[%s1 + $0x108] sm:$0xff]
  %v55 = vld [vmem:[%s1 + $0x110] sm:$0xff]
  %v56 = vld [vmem:[%s1 + $0x118] sm:$0xff]
  %v57 = vld [vmem:[%s1 + $0x120] sm:$0xff]
  %v58 = vld [vmem:[%s1 + $0x128] sm:$0xff]
  %v59 = vld [vmem:[%s1 + $0x130] sm:$0xff]
  %v60 = vld [vmem:[%s1 + $0x138] sm:$0xff]
  %v61 = vld [vmem:[%s1 + $0x140] sm:$0xff]
  %v62 = vld [vmem:[%s1 + $0x148] sm:$0xff]
  %v63 = vld [vmem:[%s1 + $0x150] sm:$0xff]
  %v64 = vld [vmem:[%s1 + $0x158] sm:$0xff]
  %v65 = vld [vmem:[%s1 + $0x160] sm:$0xff]
  %v66 = vld [vmem:[%s1 + $0x168] sm:$0xff]
  %v67 = vld [vmem:[%s1 + $0x170] sm:$0xff]
  %v68 = vld [vmem:[%s1 + $0x178] sm:$0xff]
  %v69 = vld [vmem:[%s1 + $0x180] sm:$0xff]
  %v70 = vld [vmem:[%s1 + $0x188] sm:$0xff]
  %v71 = vld [vmem:[%s1 + $0x190] sm:$0xff]
  %v72 = vld [vmem:[%s1 + $0x198] sm:$0xff]
  %v73 = vld [vmem:[%s1 + $0x1a0] sm:$0xff]
  %v74 = vld [vmem:[%s1 + $0x1a8] sm:$0xff]
  %v75 = vld [vmem:[%s1 + $0x1b0] sm:$0xff]
  %v76 = vld [vmem:[%s1 + $0x1b8] sm:$0xff]
  %v77 = vld [vmem:[%s1 + $0x1c0] sm:$0xff]
  %v78 = vld [vmem:[%s1 + $0x1c8] sm:$0xff]
  %v79 = vld [vmem:[%s1 + $0x1d0] sm:$0xff]
  %v80 = vld [vmem:[%s1 + $0x1d8] sm:$0xff]
  %v81 = vld [vmem:[%s1 + $0x1e0] sm:$0xff]
  %v82 = vld [vmem:[%s1 + $0x1e8] sm:$0xff]
  %v83 = vld [vmem:[%s1 + $0x1f0] sm:$0xff]
  %v84 = vld [vmem:[%s1 + $0x1f8] sm:$0xff]
  %v85 = vld [vmem:[%s2] sm:$0xf]
  %v87 = vperm.slane %v85, 0
  %v88 = vperm.slane %v85, 1
  %v89 = vperm.slane %v85, 2
  %v90 = vperm.slane %v85, 3
  %v99 = vunpack.c.l.b16 %v17
  %v100 = vunpack.c.h.b16 %v17
  %v101 = vunpack.c.l.b16 %v18
  %v102 = vunpack.c.h.b16 %v18
  %v103 = vunpack.c.l.b16 %v19
  %v104 = vunpack.c.h.b16 %v19
  %v105 = vunpack.c.l.b16 %v20
  %v106 = vunpack.c.h.b16 %v20
  %v107 = vpack.c.b16 %v101, %v99
  %v108 = vpack.c.b16 %v102, %v100
  %v109 = vpack.c.b16 %v105, %v103
  %v110 = vpack.c.b16 %v106, %v104
  %v179 = vunpack.c.l.b16 %v21
  %v180 = vunpack.c.h.b16 %v21
  %v181 = vunpack.c.l.b16 %v22
  %v182 = vunpack.c.h.b16 %v22
  %v183 = vunpack.c.l.b16 %v23
  %v184 = vunpack.c.h.b16 %v23
  %v185 = vunpack.c.l.b16 %v24
  %v186 = vunpack.c.h.b16 %v24
  %v187 = vunpack.c.l.b16 %v25
  %v188 = vunpack.c.h.b16 %v25
  %v189 = vunpack.c.l.b16 %v26
  %v190 = vunpack.c.h.b16 %v26
  %v191 = vunpack.c.l.b16 %v27
  %v192 = vunpack.c.h.b16 %v27
  %v193 = vunpack.c.l.b16 %v28
  %v194 = vunpack.c.h.b16 %v28
  %v195 = vunpack.c.l.b16 %v29
  %v196 = vunpack.c.h.b16 %v29
  %v197 = vunpack.c.l.b16 %v30
  %v198 = vunpack.c.h.b16 %v30
  %v199 = vunpack.c.l.b16 %v31
  %v200 = vunpack.c.h.b16 %v31
  %v201 = vunpack.c.l.b16 %v32
  %v202 = vunpack.c.h.b16 %v32
  %v203 = vunpack.c.l.b16 %v33
  %v204 = vunpack.c.h.b16 %v33
  %v205 = vunpack.c.l.b16 %v34
  %v206 = vunpack.c.h.b16 %v34
  %v207 = vunpack.c.l.b16 %v35
  %v208 = vunpack.c.h.b16 %v35
  %v209 = vunpack.c.l.b16 %v36
  %v210 = vunpack.c.h.b16 %v36
  %v211 = vunpack.c.l.b16 %v37
  %v212 = vunpack.c.h.b16 %v37
  %v213 = vunpack.c.l.b16 %v38
  %v214 = vunpack.c.h.b16 %v38
  %v215 = vunpack.c.l.b16 %v39
  %v216 = vunpack.c.h.b16 %v39
  %v217 = vunpack.c.l.b16 %v40
  %v218 = vunpack.c.h.b16 %v40
  %v219 = vunpack.c.l.b16 %v41
  %v220 = vunpack.c.h.b16 %v41
  %v221 = vunpack.c.l.b16 %v42
  %v222 = vunpack.c.h.b16 %v42
  %v223 = vunpack.c.l.b16 %v43
  %v224 = vunpack.c.h.b16 %v43
  %v225 = vunpack.c.l.b16 %v44
  %v226 = vunpack.c.h.b16 %v44
  %v227 = vunpack.c.l.b16 %v45
  %v228 = vunpack.c.h.b16 %v45
  %v229 = vunpack.c.l.b16 %v46
  %v230 = vunpack.c.h.b16 %v46
  %v231 = vunpack.c.l.b16 %v47
  %v232 = vunpack.c.h.b16 %v47
  %v233 = vunpack.c.l.b16 %v48
  %v234 = vunpack.c.h.b16 %v48
  %v235 = vunpack.c.l.b16 %v49
  %v236 = vunpack.c.h.b16 %v49
  %v237 = vunpack.c.l.b16 %v50
  %v238 = vunpack.c.h.b16 %v50
  %v239 = vunpack.c.l.b16 %v51
  %v240 = vunpack.c.h.b16 %v51
  %v241 = vunpack.c.l.b16 %v52
  %v242 = vunpack.c.h.b16 %v52
  %v243 = vunpack.c.l.b16 %v53
  %v244 = vunpack.c.h.b16 %v53
  %v245 = vunpack.c.l.b16 %v54
  %v246 = vunpack.c.h.b16 %v54
  %v247 = vunpack.c.l.b16 %v55
  %v248 = vunpack.c.h.b16 %v55
  %v249 = vunpack.c.l.b16 %v56
  %v250 = vunpack.c.h.b16 %v56
  %v251 = vunpack.c.l.b16 %v57
  %v252 = vunpack.c.h.b16 %v57
  %v253 = vunpack.c.l.b16 %v58
  %v254 = vunpack.c.h.b16 %v58
  %v255 = vunpack.c.l.b16 %v59
  %v256 = vunpack.c.h.b16 %v59
  %v257 = vunpack.c.l.b16 %v60
  %v258 = vunpack.c.h.b16 %v60
  %v259 = vunpack.c.l.b16 %v61
  %v260 = vunpack.c.h.b16 %v61
  %v261 = vunpack.c.l.b16 %v62
  %v262 = vunpack.c.h.b16 %v62
  %v263 = vunpack.c.l.b16 %v63
  %v264 = vunpack.c.h.b16 %v63
  %v265 = vunpack.c.l.b16 %v64
  %v266 = vunpack.c.h.b16 %v64
  %v267 = vunpack.c.l.b16 %v65
  %v268 = vunpack.c.h.b16 %v65
  %v269 = vunpack.c.l.b16 %v66
  %v270 = vunpack.c.h.b16 %v66
  %v271 = vunpack.c.l.b16 %v67
  %v272 = vunpack.c.h.b16 %v67
  %v273 = vunpack.c.l.b16 %v68
  %v274 = vunpack.c.h.b16 %v68
  %v275 = vunpack.c.l.b16 %v69
  %v276 = vunpack.c.h.b16 %v69
  %v277 = vunpack.c.l.b16 %v70
  %v278 = vunpack.c.h.b16 %v70
  %v279 = vunpack.c.l.b16 %v71
  %v280 = vunpack.c.h.b16 %v71
  %v281 = vunpack.c.l.b16 %v72
  %v282 = vunpack.c.h.b16 %v72
  %v283 = vunpack.c.l.b16 %v73
  %v284 = vunpack.c.h.b16 %v73
  %v285 = vunpack.c.l.b16 %v74
  %v286 = vunpack.c.h.b16 %v74
  %v287 = vunpack.c.l.b16 %v75
  %v288 = vunpack.c.h.b16 %v75
  %v289 = vunpack.c.l.b16 %v76
  %v290 = vunpack.c.h.b16 %v76
  %v291 = vunpack.c.l.b16 %v77
  %v292 = vunpack.c.h.b16 %v77
  %v293 = vunpack.c.l.b16 %v78
  %v294 = vunpack.c.h.b16 %v78
  %v295 = vunpack.c.l.b16 %v79
  %v296 = vunpack.c.h.b16 %v79
  %v297 = vunpack.c.l.b16 %v80
  %v298 = vunpack.c.h.b16 %v80
  %v299 = vunpack.c.l.b16 %v81
  %v300 = vunpack.c.h.b16 %v81
  %v301 = vunpack.c.l.b16 %v82
  %v302 = vunpack.c.h.b16 %v82
  %v303 = vunpack.c.l.b16 %v83
  %v304 = vunpack.c.h.b16 %v83
  %v305 = vunpack.c.l.b16 %v84
  %v306 = vunpack.c.h.b16 %v84
  %v307 = vpack.c.b16 %v183, %v179
  %v308 = vpack.c.b16 %v184, %v180
  %v309 = vpack.c.b16 %v185, %v181
  %v310 = vpack.c.b16 %v186, %v182
  %v311 = vpack.c.b16 %v191, %v187
  %v312 = vpack.c.b16 %v192, %v188
  %v313 = vpack.c.b16 %v193, %v189
  %v314 = vpack.c.b16 %v194, %v190
  %v315 = vpack.c.b16 %v199, %v195
  %v316 = vpack.c.b16 %v200, %v196
  %v317 = vpack.c.b16 %v201, %v197
  %v318 = vpack.c.b16 %v202, %v198
  %v319 = vpack.c.b16 %v207, %v203
  %v320 = vpack.c.b16 %v208, %v204
  %v321 = vpack.c.b16 %v209, %v205
  %v322 = vpack.c.b16 %v210, %v206
  %v323 = vpack.c.b16 %v215, %v211
  %v324 = vpack.c.b16 %v216, %v212
  %v325 = vpack.c.b16 %v217, %v213
  %v326 = vpack.c.b16 %v218, %v214
  %v327 = vpack.c.b16 %v223, %v219
  %v328 = vpack.c.b16 %v224, %v220
  %v329 = vpack.c.b16 %v225, %v221
  %v330 = vpack.c.b16 %v226, %v222
  %v331 = vpack.c.b16 %v231, %v227
  %v332 = vpack.c.b16 %v232, %v228
  %v333 = vpack.c.b16 %v233, %v229
  %v334 = vpack.c.b16 %v234, %v230
  %v335 = vpack.c.b16 %v239, %v235
  %v336 = vpack.c.b16 %v240, %v236
  %v337 = vpack.c.b16 %v241, %v237
  %v338 = vpack.c.b16 %v242, %v238
  %v339 = vpack.c.b16 %v247, %v243
  %v340 = vpack.c.b16 %v248, %v244
  %v341 = vpack.c.b16 %v249, %v245
  %v342 = vpack.c.b16 %v250, %v246
  %v343 = vpack.c.b16 %v255, %v251
  %v344 = vpack.c.b16 %v256, %v252
  %v345 = vpack.c.b16 %v257, %v253
  %v346 = vpack.c.b16 %v258, %v254
  %v347 = vpack.c.b16 %v263, %v259
  %v348 = vpack.c.b16 %v264, %v260
  %v349 = vpack.c.b16 %v265, %v261
  %v350 = vpack.c.b16 %v266, %v262
  %v351 = vpack.c.b16 %v271, %v267
  %v352 = vpack.c.b16 %v272, %v268
  %v353 = vpack.c.b16 %v273, %v269
  %v354 = vpack.c.b16 %v274, %v270
  %v355 = vpack.c.b16 %v279, %v275
  %v356 = vpack.c.b16 %v280, %v276
  %v357 = vpack.c.b16 %v281, %v277
  %v358 = vpack.c.b16 %v282, %v278
  %v359 = vpack.c.b16 %v287, %v283
  %v360 = vpack.c.b16 %v288, %v284
  %v361 = vpack.c.b16 %v289, %v285
  %v362 = vpack.c.b16 %v290, %v286
  %v363 = vpack.c.b16 %v295, %v291
  %v364 = vpack.c.b16 %v296, %v292
  %v365 = vpack.c.b16 %v297, %v293
  %v366 = vpack.c.b16 %v298, %v294
  %v367 = vpack.c.b16 %v303, %v299
  %v368 = vpack.c.b16 %v304, %v300
  %v369 = vpack.c.b16 %v305, %v301
  %v370 = vpack.c.b16 %v306, %v302
  %435 = vmatpush.bf16.msra.mxu0 %v335
  %436 = vmatpush.bf16.msra.mxu0 %v331
  %437 = vmatpush.bf16.msra.mxu0 %v327
  %438 = vmatpush.bf16.msra.mxu0 %v323
  %439 = vmatpush.bf16.msra.mxu0 %v319
  %440 = vmatpush.bf16.msra.mxu0 %v315
  %441 = vmatpush.bf16.msra.mxu0 %v311
  %442 = vmatpush.bf16.msra.mxu0 %v307
  %443 = vmatmul.bf16.gmra.mxu0 %v107
  %v444 = vpop.f32.mrf.mxu0
  %v445 = vadd.f32 %v87, %v444
  %v446 = vpop.f32.mrf.mxu0
  %v447 = vadd.f32 %v87, %v446
  %448 = vmatmul.bf16.gmra.mxu0 %v109
  %v449 = vpop.f32.mrf.mxu0
  %v450 = vadd.f32 %v87, %v449
  %v451 = vpop.f32.mrf.mxu0
  %v452 = vadd.f32 %v87, %v451
  %453 = vdwg.mxu0
  %454 = vmatpush.bf16.msra.mxu0 %v367
  %455 = vmatpush.bf16.msra.mxu0 %v363
  %456 = vmatpush.bf16.msra.mxu0 %v359
  %457 = vmatpush.bf16.msra.mxu0 %v355
  %458 = vmatpush.bf16.msra.mxu0 %v351
  %459 = vmatpush.bf16.msra.mxu0 %v347
  %460 = vmatpush.bf16.msra.mxu0 %v343
  %461 = vmatpush.bf16.msra.mxu0 %v339
  %462 = vmatmul.bf16.gmra.mxu0 %v108
  %v463 = vpop.f32.mrf.mxu0
  %v464 = vadd.f32 %v445, %v463
  %v465 = vpop.f32.mrf.mxu0
  %v466 = vadd.f32 %v447, %v465
  %467 = vmatmul.bf16.gmra.mxu0 %v110
  %v468 = vpop.f32.mrf.mxu0
  %v469 = vadd.f32 %v450, %v468
  %v470 = vpop.f32.mrf.mxu0
  %v471 = vadd.f32 %v452, %v470
  %472 = vdwg.mxu0
  %473 = vmatpush.bf16.msra.mxu0 %v336
  %474 = vmatpush.bf16.msra.mxu0 %v332
  %475 = vmatpush.bf16.msra.mxu0 %v328
  %476 = vmatpush.bf16.msra.mxu0 %v324
  %477 = vmatpush.bf16.msra.mxu0 %v320
  %478 = vmatpush.bf16.msra.mxu0 %v316
  %479 = vmatpush.bf16.msra.mxu0 %v312
  %480 = vmatpush.bf16.msra.mxu0 %v308
  %481 = vmatmul.bf16.gmra.mxu0 %v107
  %v482 = vpop.f32.mrf.mxu0
  %v483 = vadd.f32 %v88, %v482
  %v484 = vpop.f32.mrf.mxu0
  %v485 = vadd.f32 %v88, %v484
  %486 = vmatmul.bf16.gmra.mxu0 %v109
  %v487 = vpop.f32.mrf.mxu0
  %v488 = vadd.f32 %v88, %v487
  %v489 = vpop.f32.mrf.mxu0
  %v490 = vadd.f32 %v88, %v489
  %491 = vdwg.mxu0
  %492 = vmatpush.bf16.msra.mxu0 %v368
  %493 = vmatpush.bf16.msra.mxu0 %v364
  %494 = vmatpush.bf16.msra.mxu0 %v360
  %495 = vmatpush.bf16.msra.mxu0 %v356
  %496 = vmatpush.bf16.msra.mxu0 %v352
  %497 = vmatpush.bf16.msra.mxu0 %v348
  %498 = vmatpush.bf16.msra.mxu0 %v344
  %499 = vmatpush.bf16.msra.mxu0 %v340
  %500 = vmatmul.bf16.gmra.mxu0 %v108
  %v501 = vpop.f32.mrf.mxu0
  %v502 = vadd.f32 %v483, %v501
  %v503 = vpop.f32.mrf.mxu0
  %v504 = vadd.f32 %v485, %v503
  %505 = vmatmul.bf16.gmra.mxu0 %v110
  %v506 = vpop.f32.mrf.mxu0
  %v507 = vadd.f32 %v488, %v506
  %v508 = vpop.f32.mrf.mxu0
  %v509 = vadd.f32 %v490, %v508
  %510 = vdwg.mxu0
  %511 = vmatpush.bf16.msra.mxu0 %v337
  %512 = vmatpush.bf16.msra.mxu0 %v333
  %513 = vmatpush.bf16.msra.mxu0 %v329
  %514 = vmatpush.bf16.msra.mxu0 %v325
  %515 = vmatpush.bf16.msra.mxu0 %v321
  %516 = vmatpush.bf16.msra.mxu0 %v317
  %517 = vmatpush.bf16.msra.mxu0 %v313
  %518 = vmatpush.bf16.msra.mxu0 %v309
  %519 = vmatmul.bf16.gmra.mxu0 %v107
  %v520 = vpop.f32.mrf.mxu0
  %v521 = vadd.f32 %v89, %v520
  %v522 = vpop.f32.mrf.mxu0
  %v523 = vadd.f32 %v89, %v522
  %524 = vmatmul.bf16.gmra.mxu0 %v109
  %v525 = vpop.f32.mrf.mxu0
  %v526 = vadd.f32 %v89, %v525
  %v527 = vpop.f32.mrf.mxu0
  %v528 = vadd.f32 %v89, %v527
  %529 = vdwg.mxu0
  %530 = vmatpush.bf16.msra.mxu0 %v369
  %531 = vmatpush.bf16.msra.mxu0 %v365
  %532 = vmatpush.bf16.msra.mxu0 %v361
  %533 = vmatpush.bf16.msra.mxu0 %v357
  %534 = vmatpush.bf16.msra.mxu0 %v353
  %535 = vmatpush.bf16.msra.mxu0 %v349
  %536 = vmatpush.bf16.msra.mxu0 %v345
  %537 = vmatpush.bf16.msra.mxu0 %v341
  %538 = vmatmul.bf16.gmra.mxu0 %v108
  %v539 = vpop.f32.mrf.mxu0
  %v540 = vadd.f32 %v521, %v539
  %v541 = vpop.f32.mrf.mxu0
  %v542 = vadd.f32 %v523, %v541
  %543 = vmatmul.bf16.gmra.mxu0 %v110
  %v544 = vpop.f32.mrf.mxu0
  %v545 = vadd.f32 %v526, %v544
  %v546 = vpop.f32.mrf.mxu0
  %v547 = vadd.f32 %v528, %v546
  %548 = vdwg.mxu0
  %549 = vmatpush.bf16.msra.mxu0 %v338
  %550 = vmatpush.bf16.msra.mxu0 %v334
  %551 = vmatpush.bf16.msra.mxu0 %v330
  %552 = vmatpush.bf16.msra.mxu0 %v326
  %553 = vmatpush.bf16.msra.mxu0 %v322
  %554 = vmatpush.bf16.msra.mxu0 %v318
  %555 = vmatpush.bf16.msra.mxu0 %v314
  %556 = vmatpush.bf16.msra.mxu0 %v310
  %557 = vmatmul.bf16.gmra.mxu0 %v107
  %v558 = vpop.f32.mrf.mxu0
  %v559 = vadd.f32 %v90, %v558
  %v560 = vpop.f32.mrf.mxu0
  %v561 = vadd.f32 %v90, %v560
  %562 = vmatmul.bf16.gmra.mxu0 %v109
  %v563 = vpop.f32.mrf.mxu0
  %v564 = vadd.f32 %v90, %v563
  %v565 = vpop.f32.mrf.mxu0
  %v566 = vadd.f32 %v90, %v565
  %567 = vdwg.mxu0
  %568 = vmatpush.bf16.msra.mxu0 %v370
  %569 = vmatpush.bf16.msra.mxu0 %v366
  %570 = vmatpush.bf16.msra.mxu0 %v362
  %571 = vmatpush.bf16.msra.mxu0 %v358
  %572 = vmatpush.bf16.msra.mxu0 %v354
  %573 = vmatpush.bf16.msra.mxu0 %v350
  %574 = vmatpush.bf16.msra.mxu0 %v346
  %575 = vmatpush.bf16.msra.mxu0 %v342
  %576 = vmatmul.bf16.gmra.mxu0 %v108
  %v577 = vpop.f32.mrf.mxu0
  %v578 = vadd.f32 %v559, %v577
  %v579 = vpop.f32.mrf.mxu0
  %v580 = vadd.f32 %v561, %v579
  %581 = vmatmul.bf16.gmra.mxu0 %v110
  %v582 = vpop.f32.mrf.mxu0
  %v583 = vadd.f32 %v564, %v582
  %v584 = vpop.f32.mrf.mxu0
  %v585 = vadd.f32 %v566, %v584
  %586 = vdwg.mxu0
  %587 = vst [vmem:[%s3] sm:$0xff] %v464
  %588 = vst [vmem:[%s3 + $0x8] sm:$0xff] %v502
  %589 = vst [vmem:[%s3 + $0x10] sm:$0xff] %v540
  %590 = vst [vmem:[%s3 + $0x18] sm:$0xff] %v578
  %591 = vst [vmem:[%s3 + $0x20] sm:$0xff] %v466
  %592 = vst [vmem:[%s3 + $0x28] sm:$0xff] %v504
  %593 = vst [vmem:[%s3 + $0x30] sm:$0xff] %v542
  %594 = vst [vmem:[%s3 + $0x38] sm:$0xff] %v580
  %595 = vst [vmem:[%s3 + $0x40] sm:$0xff] %v469
  %596 = vst [vmem:[%s3 + $0x48] sm:$0xff] %v507
  %597 = vst [vmem:[%s3 + $0x50] sm:$0xff] %v545
  %598 = vst [vmem:[%s3 + $0x58] sm:$0xff] %v583
  %599 = vst [vmem:[%s3 + $0x60] sm:$0xff] %v471
  %600 = vst [vmem:[%s3 + $0x68] sm:$0xff] %v509
  %601 = vst [vmem:[%s3 + $0x70] sm:$0xff] %v547
  %602 = vst [vmem:[%s3 + $0x78] sm:$0xff] %v585
  %p603 = scmp.eq.s32.totalorder 0, 0
  // Predicated region
  $region14: #{vae_forward.17} parent=0 // pred_check
    %p604 = pneg %p603
  $region15: #{vae_forward.17} parent=0 // pred_check_branch
    %606 = sbr.rel (%p604) target = $region17
  $region16: #{vae_forward.17} parent=0 // pred_region
    %v607 = vlaneseq
    %vm608 = vcmp.ge.s32.totalorder %v607, 0
    %vm609 = vcmp.lt.s32.totalorder %v607, 512
    %vm610 = vmand %vm608, %vm609
    %611 = vst.msk [vmem:[%s4] sm:$0xf] %vm610, 0.0
    %612 = vst.msk [vmem:[%s5] sm:$0xf] %vm610, 0.0
  $region17: #{vae_forward.17} parent=0 // pred_fallthru
    _
  %v613 = vld [vmem:[%s4] sm:$0xf]
  %v614 = vadd.f32 %v464, %v466
  %v615 = vadd.f32 %v614, %v469
  %v616 = vadd.f32 %v615, %v471
  %v617 = vrot.slane %v616, 4
  %v618 = vadd.f32 %v616, %v617
  %v619 = vrot.slane %v618, 2
  %v620 = vadd.f32 %v618, %v619
  %v621 = vrot.slane %v620, 1
  %v622 = vadd.f32 %v620, %v621
  %v623 = vadd.f32 %v502, %v504
  %v624 = vadd.f32 %v623, %v507
  %v625 = vadd.f32 %v624, %v509
  %v626 = vrot.slane %v625, 4
  %v627 = vadd.f32 %v625, %v626
  %v628 = vrot.slane %v627, 2
  %v629 = vadd.f32 %v627, %v628
  %v630 = vrot.slane %v629, 1
  %v631 = vadd.f32 %v629, %v630
  %v632 = vadd.f32 %v540, %v542
  %v633 = vadd.f32 %v632, %v545
  %v634 = vadd.f32 %v633, %v547
  %v635 = vrot.slane %v634, 4
  %v636 = vadd.f32 %v634, %v635
  %v637 = vrot.slane %v636, 2
  %v638 = vadd.f32 %v636, %v637
  %v639 = vrot.slane %v638, 1
  %v640 = vadd.f32 %v638, %v639
  %v641 = vadd.f32 %v578, %v580
  %v642 = vadd.f32 %v641, %v583
  %v643 = vadd.f32 %v642, %v585
  %v644 = vrot.slane %v643, 4
  %v645 = vadd.f32 %v643, %v644
  %v646 = vrot.slane %v645, 2
  %v647 = vadd.f32 %v645, %v646
  %v648 = vrot.slane %v647, 1
  %v649 = vadd.f32 %v647, %v648
  %v654 = vrot.slane %v631, 7
  %v655 = vrot.slane %v640, 6
  %v656 = vrot.slane %v649, 5
  %vm657 = vcmask 1040384
  %v658 = vsel %vm657, %v622, %v654
  %vm659 = vcmask 1042434
  %v660 = vsel %vm659, %v655, %v656
  %vm661 = vcmask 1041408
  %v662 = vsel %vm661, %v658, %v660
  %v664 = vadd.f32 %v613, %v662
  %v665 = vlaneseq
  %vm666 = vcmp.ge.s32.totalorder %v665, 0
  %vm667 = vcmp.lt.s32.totalorder %v665, 512
  %vm668 = vmand %vm666, %vm667
  %669 = vst.msk [vmem:[%s4] sm:$0xf] %vm668, %v664
  %v670 = vld [vmem:[%s5] sm:$0xf]
  %v671 = vmul.f32 %v464, %v464
  %v672 = vmul.f32 %v502, %v502
  %v673 = vmul.f32 %v540, %v540
  %v674 = vmul.f32 %v578, %v578
  %v675 = vmul.f32 %v466, %v466
  %v676 = vmul.f32 %v504, %v504
  %v677 = vmul.f32 %v542, %v542
  %v678 = vmul.f32 %v580, %v580
  %v679 = vmul.f32 %v469, %v469
  %v680 = vmul.f32 %v507, %v507
  %v681 = vmul.f32 %v545, %v545
  %v682 = vmul.f32 %v583, %v583
  %v683 = vmul.f32 %v471, %v471
  %v684 = vmul.f32 %v509, %v509
  %v685 = vmul.f32 %v547, %v547
  %v686 = vmul.f32 %v585, %v585
  %v687 = vadd.f32 %v671, %v675
  %v688 = vadd.f32 %v687, %v679
  %v689 = vadd.f32 %v688, %v683
  %v690 = vrot.slane %v689, 4
  %v691 = vadd.f32 %v689, %v690
  %v692 = vrot.slane %v691, 2
  %v693 = vadd.f32 %v691, %v692
  %v694 = vrot.slane %v693, 1
  %v695 = vadd.f32 %v693, %v694
  %v696 = vadd.f32 %v672, %v676
  %v697 = vadd.f32 %v696, %v680
  %v698 = vadd.f32 %v697, %v684
  %v699 = vrot.slane %v698, 4
  %v700 = vadd.f32 %v698, %v699
  %v701 = vrot.slane %v700, 2
  %v702 = vadd.f32 %v700, %v701
  %v703 = vrot.slane %v702, 1
  %v704 = vadd.f32 %v702, %v703
  %v705 = vadd.f32 %v673, %v677
  %v706 = vadd.f32 %v705, %v681
  %v707 = vadd.f32 %v706, %v685
  %v708 = vrot.slane %v707, 4
  %v709 = vadd.f32 %v707, %v708
  %v710 = vrot.slane %v709, 2
  %v711 = vadd.f32 %v709, %v710
  %v712 = vrot.slane %v711, 1
  %v713 = vadd.f32 %v711, %v712
  %v714 = vadd.f32 %v674, %v678
  %v715 = vadd.f32 %v714, %v682
  %v716 = vadd.f32 %v715, %v686
  %v717 = vrot.slane %v716, 4
  %v718 = vadd.f32 %v716, %v717
  %v719 = vrot.slane %v718, 2
  %v720 = vadd.f32 %v718, %v719
  %v721 = vrot.slane %v720, 1
  %v722 = vadd.f32 %v720, %v721
  %v727 = vrot.slane %v704, 7
  %v728 = vrot.slane %v713, 6
  %v729 = vrot.slane %v722, 5
  %v730 = vsel %vm657, %v695, %v727
  %v731 = vsel %vm659, %v728, %v729
  %v732 = vsel %vm661, %v730, %v731
  %v734 = vadd.f32 %v670, %v732
  %735 = vst.msk [vmem:[%s5] sm:$0xf] %vm668, %v734
  // Predicated region
  $region18: #{vae_forward.17} parent=0 // pred_check
    _
  $region19: #{vae_forward.17} parent=0 // pred_check_branch
    %737 = sbr.rel (0) target = $region21
  $region20: #{vae_forward.17} parent=0 // pred_region
    _
  $region21: #{vae_forward.17} parent=0 // pred_fallthru
    _
  // Predicated region
  $region22: #{vae_forward.17} parent=0 // pred_check
    _
  $region23: #{vae_forward.17} parent=0 // pred_check_branch
    %739 = sbr.rel (0) target = $region25
  $region24: #{vae_forward.17} parent=0 // pred_region
    _
  $region25: #{vae_forward.17} parent=0 // pred_fallthru
    _
  // Predicated region
  $region26: #{vae_forward.17} parent=0 // pred_check
    _
  $region27: #{vae_forward.17} parent=0 // pred_check_branch
    %741 = sbr.rel (0) target = $region29
  $region28: #{vae_forward.17} parent=0 // pred_region
    _
  $region29: #{vae_forward.17} parent=0 // pred_fallthru
    _
  // Predicated region
  $region30: #{vae_forward.17} parent=0 // pred_check
    _
  $region31: #{vae_forward.17} parent=0 // pred_check_branch
    %743 = sbr.rel (0) target = $region33
  $region32: #{vae_forward.17} parent=0 // pred_region
    _
  $region33: #{vae_forward.17} parent=0 // pred_fallthru
    _
  // Predicated region
  $region34: #{vae_forward.17} parent=0 // pred_check
    _
  $region35: #{vae_forward.17} parent=0 // pred_check_branch
    %745 = sbr.rel (0) target = $region37
  $region36: #{vae_forward.17} parent=0 // pred_region
    _
  $region37: #{vae_forward.17} parent=0 // pred_fallthru
    _
  // Predicated region
  $region38: #{vae_forward.17} parent=0 // pred_check
    _
  $region39: #{vae_forward.17} parent=0 // pred_check_branch
    %747 = sbr.rel (0) target = $region41
  $region40: #{vae_forward.17} parent=0 // pred_region
    _
  $region41: #{vae_forward.17} parent=0 // pred_fallthru
    _

// kernel: vae_forward.18
$region0: #{vae_forward.18}
  #allocation0 [shape = 'u32[]', space=smem, size = 0x4, offset = 0x4, fixed_abs, tag = 'smem constant byte address 0x4 - core index']
  #allocation1 [shape = 'u32[72,128]{1,0:T(1,128)}', space=vmem, size = 0x9000, scoped, tag = 'internal scratch']
  %s0 = inlined_call_operand.vmem [shape: f32[32,512], index: 0, kind: input, shape index: {}]
  %s1 = inlined_call_operand.vmem [shape: f32[1,512], index: 1, kind: input, shape index: {}]
  %s2 = inlined_call_operand.vmem [shape: f32[1,512], index: 2, kind: input, shape index: {}]
  %s3 = inlined_call_operand.vmem [shape: bf16[32,512], index: 3, kind: output, shape index: {}]
  %s4 = sld [smem:[#allocation0]]
  $region22: #{vae_forward.18} parent=0
    _
  %s6 = ssub.s32 1, %s4
  %s7 = scalar_select 0, %s6, %s4
  // Predicated region
  $region2: #{vae_forward.18} parent=0 // pred_check
    _
  $region3: #{vae_forward.18} parent=0 // pred_check_branch
    %9 = sbr.rel (0) target = $region5
  $region4: #{vae_forward.18} parent=0 // pred_region
    _
  $region5: #{vae_forward.18} parent=0 // pred_fallthru
    _
  // Predicated region
  $region6: #{vae_forward.18} parent=0 // pred_check
    _
  $region7: #{vae_forward.18} parent=0 // pred_check_branch
    %11 = sbr.rel (0) target = $region9
  $region8: #{vae_forward.18} parent=0 // pred_region
    _
  $region9: #{vae_forward.18} parent=0 // pred_fallthru
    _
  // Predicated region
  $region10: #{vae_forward.18} parent=0 // pred_check
    _
  $region11: #{vae_forward.18} parent=0 // pred_check_branch
    %13 = sbr.rel (0) target = $region13
  $region12: #{vae_forward.18} parent=0 // pred_region
    _
  $region13: #{vae_forward.18} parent=0 // pred_fallthru
    _
  %v14 = vld [vmem:[%s0] sm:$0xff]
  %v15 = vld [vmem:[%s0 + $0x8] sm:$0xff]
  %v16 = vld [vmem:[%s0 + $0x10] sm:$0xff]
  %v17 = vld [vmem:[%s0 + $0x18] sm:$0xff]
  %v18 = vld [vmem:[%s0 + $0x20] sm:$0xff]
  %v19 = vld [vmem:[%s0 + $0x28] sm:$0xff]
  %v20 = vld [vmem:[%s0 + $0x30] sm:$0xff]
  %v21 = vld [vmem:[%s0 + $0x38] sm:$0xff]
  %v22 = vld [vmem:[%s0 + $0x40] sm:$0xff]
  %v23 = vld [vmem:[%s0 + $0x48] sm:$0xff]
  %v24 = vld [vmem:[%s0 + $0x50] sm:$0xff]
  %v25 = vld [vmem:[%s0 + $0x58] sm:$0xff]
  %v26 = vld [vmem:[%s0 + $0x60] sm:$0xff]
  %v27 = vld [vmem:[%s0 + $0x68] sm:$0xff]
  %v28 = vld [vmem:[%s0 + $0x70] sm:$0xff]
  %v29 = vld [vmem:[%s0 + $0x78] sm:$0xff]
  %v30 = vld [vmem:[%s1] sm:$0xf]
  %v32 = vperm.slane %v30, 0
  %v33 = vperm.slane %v30, 1
  %v34 = vperm.slane %v30, 2
  %v35 = vperm.slane %v30, 3
  %v40 = vmul.f32 %v14, %v32
  %v41 = vmul.f32 %v15, %v33
  %v42 = vmul.f32 %v16, %v34
  %v43 = vmul.f32 %v17, %v35
  %v44 = vmul.f32 %v18, %v32
  %v45 = vmul.f32 %v19, %v33
  %v46 = vmul.f32 %v20, %v34
  %v47 = vmul.f32 %v21, %v35
  %v48 = vmul.f32 %v22, %v32
  %v49 = vmul.f32 %v23, %v33
  %v50 = vmul.f32 %v24, %v34
  %v51 = vmul.f32 %v25, %v35
  %v52 = vmul.f32 %v26, %v32
  %v53 = vmul.f32 %v27, %v33
  %v54 = vmul.f32 %v28, %v34
  %v55 = vmul.f32 %v29, %v35
  %v56 = vld [vmem:[%s2] sm:$0xf]
  %v58 = vperm.slane %v56, 0
  %v59 = vperm.slane %v56, 1
  %v60 = vperm.slane %v56, 2
  %v61 = vperm.slane %v56, 3
  %v66 = vadd.f32 %v40, %v58
  %v67 = vadd.f32 %v41, %v59
  %v68 = vadd.f32 %v42, %v60
  %v69 = vadd.f32 %v43, %v61
  %v70 = vadd.f32 %v44, %v58
  %v71 = vadd.f32 %v45, %v59
  %v72 = vadd.f32 %v46, %v60
  %v73 = vadd.f32 %v47, %v61
  %v74 = vadd.f32 %v48, %v58
  %v75 = vadd.f32 %v49, %v59
  %v76 = vadd.f32 %v50, %v60
  %v77 = vadd.f32 %v51, %v61
  %v78 = vadd.f32 %v52, %v58
  %v79 = vadd.f32 %v53, %v59
  %v80 = vadd.f32 %v54, %v60
  %v81 = vadd.f32 %v55, %v61
  %vm82 = vcmp.gt.f32.partialorder %v66, 0.0
  %vm83 = vcmp.gt.f32.partialorder %v67, 0.0
  %vm84 = vcmp.gt.f32.partialorder %v68, 0.0
  %vm85 = vcmp.gt.f32.partialorder %v69, 0.0
  %vm86 = vcmp.gt.f32.partialorder %v70, 0.0
  %vm87 = vcmp.gt.f32.partialorder %v71, 0.0
  %vm88 = vcmp.gt.f32.partialorder %v72, 0.0
  %vm89 = vcmp.gt.f32.partialorder %v73, 0.0
  %vm90 = vcmp.gt.f32.partialorder %v74, 0.0
  %vm91 = vcmp.gt.f32.partialorder %v75, 0.0
  %vm92 = vcmp.gt.f32.partialorder %v76, 0.0
  %vm93 = vcmp.gt.f32.partialorder %v77, 0.0
  %vm94 = vcmp.gt.f32.partialorder %v78, 0.0
  %vm95 = vcmp.gt.f32.partialorder %v79, 0.0
  %vm96 = vcmp.gt.f32.partialorder %v80, 0.0
  %vm97 = vcmp.gt.f32.partialorder %v81, 0.0
  %v98 = vmul.f32 %v66, 0.01
  %v99 = vmul.f32 %v67, 0.01
  %v100 = vmul.f32 %v68, 0.01
  %v101 = vmul.f32 %v69, 0.01
  %v102 = vmul.f32 %v70, 0.01
  %v103 = vmul.f32 %v71, 0.01
  %v104 = vmul.f32 %v72, 0.01
  %v105 = vmul.f32 %v73, 0.01
  %v106 = vmul.f32 %v74, 0.01
  %v107 = vmul.f32 %v75, 0.01
  %v108 = vmul.f32 %v76, 0.01
  %v109 = vmul.f32 %v77, 0.01
  %v110 = vmul.f32 %v78, 0.01
  %v111 = vmul.f32 %v79, 0.01
  %v112 = vmul.f32 %v80, 0.01
  %v113 = vmul.f32 %v81, 0.01
  %v114 = vsel %vm82, %v66, %v98
  %v115 = vsel %vm83, %v67, %v99
  %v116 = vsel %vm84, %v68, %v100
  %v117 = vsel %vm85, %v69, %v101
  %v118 = vsel %vm86, %v70, %v102
  %v119 = vsel %vm87, %v71, %v103
  %v120 = vsel %vm88, %v72, %v104
  %v121 = vsel %vm89, %v73, %v105
  %v122 = vsel %vm90, %v74, %v106
  %v123 = vsel %vm91, %v75, %v107
  %v124 = vsel %vm92, %v76, %v108
  %v125 = vsel %vm93, %v77, %v109
  %v126 = vsel %vm94, %v78, %v110
  %v127 = vsel %vm95, %v79, %v111
  %v128 = vsel %vm96, %v80, %v112
  %v129 = vsel %vm97, %v81, %v113
  %v130 = vpack.c.bf16 %v115, %v114
  %v131 = vpack.c.bf16 %v117, %v116
  %v132 = vpack.c.bf16 %v119, %v118
  %v133 = vpack.c.bf16 %v121, %v120
  %v134 = vpack.c.bf16 %v123, %v122
  %v135 = vpack.c.bf16 %v125, %v124
  %v136 = vpack.c.bf16 %v127, %v126
  %v137 = vpack.c.bf16 %v129, %v128
  %138 = vst [vmem:[%s3] sm:$0xff] %v130
  %139 = vst [vmem:[%s3 + $0x8] sm:$0xff] %v131
  %140 = vst [vmem:[%s3 + $0x10] sm:$0xff] %v132
  %141 = vst [vmem:[%s3 + $0x18] sm:$0xff] %v133
  %142 = vst [vmem:[%s3 + $0x20] sm:$0xff] %v134
  %143 = vst [vmem:[%s3 + $0x28] sm:$0xff] %v135
  %144 = vst [vmem:[%s3 + $0x30] sm:$0xff] %v136
  %145 = vst [vmem:[%s3 + $0x38] sm:$0xff] %v137
  // Predicated region
  $region14: #{vae_forward.18} parent=0 // pred_check
    _
  $region15: #{vae_forward.18} parent=0 // pred_check_branch
    %147 = sbr.rel (0) target = $region17
  $region16: #{vae_forward.18} parent=0 // pred_region
    _
  $region17: #{vae_forward.18} parent=0 // pred_fallthru
    _
  // Predicated region
  $region18: #{vae_forward.18} parent=0 // pred_check
    _
  $region19: #{vae_forward.18} parent=0 // pred_check_branch
    %149 = sbr.rel (0) target = $region21
  $region20: #{vae_forward.18} parent=0 // pred_region
    _
  $region21: #{vae_forward.18} parent=0 // pred_fallthru
    _

// kernel: vae_forward.20
$region0: #{vae_forward.20}
  #allocation0 [shape = 'u32[]', space=smem, size = 0x4, offset = 0x4, fixed_abs, tag = 'smem constant byte address 0x4 - core index']
  #allocation1 [shape = 'u32[72,128]{1,0:T(1,128)}', space=vmem, size = 0x9000, scoped, tag = 'internal scratch']
  %s0 = inlined_call_operand.vmem [shape: f32[128,512], index: 0, kind: input, shape index: {}]
  %s1 = inlined_call_operand.vmem [shape: f32[1,512], index: 1, kind: input, shape index: {}]
  %s2 = inlined_call_operand.vmem [shape: f32[1,512], index: 2, kind: input, shape index: {}]
  %s3 = inlined_call_operand.vmem [shape: bf16[128,512], index: 3, kind: output, shape index: {}]
  %s4 = sld [smem:[#allocation0]]
  $region22: #{vae_forward.20} parent=0
    _
  %s6 = ssub.s32 1, %s4
  %s7 = scalar_select 0, %s6, %s4
  // Predicated region
  $region2: #{vae_forward.20} parent=0 // pred_check
    _
  $region3: #{vae_forward.20} parent=0 // pred_check_branch
    %9 = sbr.rel (0) target = $region5
  $region4: #{vae_forward.20} parent=0 // pred_region
    _
  $region5: #{vae_forward.20} parent=0 // pred_fallthru
    _
  // Predicated region
  $region6: #{vae_forward.20} parent=0 // pred_check
    _
  $region7: #{vae_forward.20} parent=0 // pred_check_branch
    %11 = sbr.rel (0) target = $region9
  $region8: #{vae_forward.20} parent=0 // pred_region
    _
  $region9: #{vae_forward.20} parent=0 // pred_fallthru
    _
  // Predicated region
  $region10: #{vae_forward.20} parent=0 // pred_check
    _
  $region11: #{vae_forward.20} parent=0 // pred_check_branch
    %13 = sbr.rel (0) target = $region13
  $region12: #{vae_forward.20} parent=0 // pred_region
    _
  $region13: #{vae_forward.20} parent=0 // pred_fallthru
    _
  %v14 = vld [vmem:[%s0] sm:$0xff]
  %v15 = vld [vmem:[%s0 + $0x8] sm:$0xff]
  %v16 = vld [vmem:[%s0 + $0x10] sm:$0xff]
  %v17 = vld [vmem:[%s0 + $0x18] sm:$0xff]
  %v18 = vld [vmem:[%s0 + $0x20] sm:$0xff]
  %v19 = vld [vmem:[%s0 + $0x28] sm:$0xff]
  %v20 = vld [vmem:[%s0 + $0x30] sm:$0xff]
  %v21 = vld [vmem:[%s0 + $0x38] sm:$0xff]
  %v22 = vld [vmem:[%s0 + $0x40] sm:$0xff]
  %v23 = vld [vmem:[%s0 + $0x48] sm:$0xff]
  %v24 = vld [vmem:[%s0 + $0x50] sm:$0xff]
  %v25 = vld [vmem:[%s0 + $0x58] sm:$0xff]
  %v26 = vld [vmem:[%s0 + $0x60] sm:$0xff]
  %v27 = vld [vmem:[%s0 + $0x68] sm:$0xff]
  %v28 = vld [vmem:[%s0 + $0x70] sm:$0xff]
  %v29 = vld [vmem:[%s0 + $0x78] sm:$0xff]
  %v30 = vld [vmem:[%s0 + $0x80] sm:$0xff]
  %v31 = vld [vmem:[%s0 + $0x88] sm:$0xff]
  %v32 = vld [vmem:[%s0 + $0x90] sm:$0xff]
  %v33 = vld [vmem:[%s0 + $0x98] sm:$0xff]
  %v34 = vld [vmem:[%s0 + $0xa0] sm:$0xff]
  %v35 = vld [vmem:[%s0 + $0xa8] sm:$0xff]
  %v36 = vld [vmem:[%s0 + $0xb0] sm:$0xff]
  %v37 = vld [vmem:[%s0 + $0xb8] sm:$0xff]
  %v38 = vld [vmem:[%s0 + $0xc0] sm:$0xff]
  %v39 = vld [vmem:[%s0 + $0xc8] sm:$0xff]
  %v40 = vld [vmem:[%s0 + $0xd0] sm:$0xff]
  %v41 = vld [vmem:[%s0 + $0xd8] sm:$0xff]
  %v42 = vld [vmem:[%s0 + $0xe0] sm:$0xff]
  %v43 = vld [vmem:[%s0 + $0xe8] sm:$0xff]
  %v44 = vld [vmem:[%s0 + $0xf0] sm:$0xff]
  %v45 = vld [vmem:[%s0 + $0xf8] sm:$0xff]
  %v46 = vld [vmem:[%s0 + $0x100] sm:$0xff]
  %v47 = vld [vmem:[%s0 + $0x108] sm:$0xff]
  %v48 = vld [vmem:[%s0 + $0x110] sm:$0xff]
  %v49 = vld [vmem:[%s0 + $0x118] sm:$0xff]
  %v50 = vld [vmem:[%s0 + $0x120] sm:$0xff]
  %v51 = vld [vmem:[%s0 + $0x128] sm:$0xff]
  %v52 = vld [vmem:[%s0 + $0x130] sm:$0xff]
  %v53 = vld [vmem:[%s0 + $0x138] sm:$0xff]
  %v54 = vld [vmem:[%s0 + $0x140] sm:$0xff]
  %v55 = vld [vmem:[%s0 + $0x148] sm:$0xff]
  %v56 = vld [vmem:[%s0 + $0x150] sm:$0xff]
  %v57 = vld [vmem:[%s0 + $0x158] sm:$0xff]
  %v58 = vld [vmem:[%s0 + $0x160] sm:$0xff]
  %v59 = vld [vmem:[%s0 + $0x168] sm:$0xff]
  %v60 = vld [vmem:[%s0 + $0x170] sm:$0xff]
  %v61 = vld [vmem:[%s0 + $0x178] sm:$0xff]
  %v62 = vld [vmem:[%s0 + $0x180] sm:$0xff]
  %v63 = vld [vmem:[%s0 + $0x188] sm:$0xff]
  %v64 = vld [vmem:[%s0 + $0x190] sm:$0xff]
  %v65 = vld [vmem:[%s0 + $0x198] sm:$0xff]
  %v66 = vld [vmem:[%s0 + $0x1a0] sm:$0xff]
  %v67 = vld [vmem:[%s0 + $0x1a8] sm:$0xff]
  %v68 = vld [vmem:[%s0 + $0x1b0] sm:$0xff]
  %v69 = vld [vmem:[%s0 + $0x1b8] sm:$0xff]
  %v70 = vld [vmem:[%s0 + $0x1c0] sm:$0xff]
  %v71 = vld [vmem:[%s0 + $0x1c8] sm:$0xff]
  %v72 = vld [vmem:[%s0 + $0x1d0] sm:$0xff]
  %v73 = vld [vmem:[%s0 + $0x1d8] sm:$0xff]
  %v74 = vld [vmem:[%s0 + $0x1e0] sm:$0xff]
  %v75 = vld [vmem:[%s0 + $0x1e8] sm:$0xff]
  %v76 = vld [vmem:[%s0 + $0x1f0] sm:$0xff]
  %v77 = vld [vmem:[%s0 + $0x1f8] sm:$0xff]
  %v78 = vld [vmem:[%s1] sm:$0xf]
  %v80 = vperm.slane %v78, 0
  %v81 = vperm.slane %v78, 1
  %v82 = vperm.slane %v78, 2
  %v83 = vperm.slane %v78, 3
  %v88 = vmul.f32 %v14, %v80
  %v89 = vmul.f32 %v15, %v81
  %v90 = vmul.f32 %v16, %v82
  %v91 = vmul.f32 %v17, %v83
  %v92 = vmul.f32 %v18, %v80
  %v93 = vmul.f32 %v19, %v81
  %v94 = vmul.f32 %v20, %v82
  %v95 = vmul.f32 %v21, %v83
  %v96 = vmul.f32 %v22, %v80
  %v97 = vmul.f32 %v23, %v81
  %v98 = vmul.f32 %v24, %v82
  %v99 = vmul.f32 %v25, %v83
  %v100 = vmul.f32 %v26, %v80
  %v101 = vmul.f32 %v27, %v81
  %v102 = vmul.f32 %v28, %v82
  %v103 = vmul.f32 %v29, %v83
  %v104 = vmul.f32 %v30, %v80
  %v105 = vmul.f32 %v31, %v81
  %v106 = vmul.f32 %v32, %v82
  %v107 = vmul.f32 %v33, %v83
  %v108 = vmul.f32 %v34, %v80
  %v109 = vmul.f32 %v35, %v81
  %v110 = vmul.f32 %v36, %v82
  %v111 = vmul.f32 %v37, %v83
  %v112 = vmul.f32 %v38, %v80
  %v113 = vmul.f32 %v39, %v81
  %v114 = vmul.f32 %v40, %v82
  %v115 = vmul.f32 %v41, %v83
  %v116 = vmul.f32 %v42, %v80
  %v117 = vmul.f32 %v43, %v81
  %v118 = vmul.f32 %v44, %v82
  %v119 = vmul.f32 %v45, %v83
  %v120 = vmul.f32 %v46, %v80
  %v121 = vmul.f32 %v47, %v81
  %v122 = vmul.f32 %v48, %v82
  %v123 = vmul.f32 %v49, %v83
  %v124 = vmul.f32 %v50, %v80
  %v125 = vmul.f32 %v51, %v81
  %v126 = vmul.f32 %v52, %v82
  %v127 = vmul.f32 %v53, %v83
  %v128 = vmul.f32 %v54, %v80
  %v129 = vmul.f32 %v55, %v81
  %v130 = vmul.f32 %v56, %v82
  %v131 = vmul.f32 %v57, %v83
  %v132 = vmul.f32 %v58, %v80
  %v133 = vmul.f32 %v59, %v81
  %v134 = vmul.f32 %v60, %v82
  %v135 = vmul.f32 %v61, %v83
  %v136 = vmul.f32 %v62, %v80
  %v137 = vmul.f32 %v63, %v81
  %v138 = vmul.f32 %v64, %v82
  %v139 = vmul.f32 %v65, %v83
  %v140 = vmul.f32 %v66, %v80
  %v141 = vmul.f32 %v67, %v81
  %v142 = vmul.f32 %v68, %v82
  %v143 = vmul.f32 %v69, %v83
  %v144 = vmul.f32 %v70, %v80
  %v145 = vmul.f32 %v71, %v81
  %v146 = vmul.f32 %v72, %v82
  %v147 = vmul.f32 %v73, %v83
  %v148 = vmul.f32 %v74, %v80
  %v149 = vmul.f32 %v75, %v81
  %v150 = vmul.f32 %v76, %v82
  %v151 = vmul.f32 %v77, %v83
  %v152 = vld [vmem:[%s2] sm:$0xf]
  %v154 = vperm.slane %v152, 0
  %v155 = vperm.slane %v152, 1
  %v156 = vperm.slane %v152, 2
  %v157 = vperm.slane %v152, 3
  %v162 = vadd.f32 %v88, %v154
  %v163 = vadd.f32 %v89, %v155
  %v164 = vadd.f32 %v90, %v156
  %v165 = vadd.f32 %v91, %v157
  %v166 = vadd.f32 %v92, %v154
  %v167 = vadd.f32 %v93, %v155
  %v168 = vadd.f32 %v94, %v156
  %v169 = vadd.f32 %v95, %v157
  %v170 = vadd.f32 %v96, %v154
  %v171 = vadd.f32 %v97, %v155
  %v172 = vadd.f32 %v98, %v156
  %v173 = vadd.f32 %v99, %v157
  %v174 = vadd.f32 %v100, %v154
  %v175 = vadd.f32 %v101, %v155
  %v176 = vadd.f32 %v102, %v156
  %v177 = vadd.f32 %v103, %v157
  %v178 = vadd.f32 %v104, %v154
  %v179 = vadd.f32 %v105, %v155
  %v180 = vadd.f32 %v106, %v156
  %v181 = vadd.f32 %v107, %v157
  %v182 = vadd.f32 %v108, %v154
  %v183 = vadd.f32 %v109, %v155
  %v184 = vadd.f32 %v110, %v156
  %v185 = vadd.f32 %v111, %v157
  %v186 = vadd.f32 %v112, %v154
  %v187 = vadd.f32 %v113, %v155
  %v188 = vadd.f32 %v114, %v156
  %v189 = vadd.f32 %v115, %v157
  %v190 = vadd.f32 %v116, %v154
  %v191 = vadd.f32 %v117, %v155
  %v192 = vadd.f32 %v118, %v156
  %v193 = vadd.f32 %v119, %v157
  %v194 = vadd.f32 %v120, %v154
  %v195 = vadd.f32 %v121, %v155
  %v196 = vadd.f32 %v122, %v156
  %v197 = vadd.f32 %v123, %v157
  %v198 = vadd.f32 %v124, %v154
  %v199 = vadd.f32 %v125, %v155
  %v200 = vadd.f32 %v126, %v156
  %v201 = vadd.f32 %v127, %v157
  %v202 = vadd.f32 %v128, %v154
  %v203 = vadd.f32 %v129, %v155
  %v204 = vadd.f32 %v130, %v156
  %v205 = vadd.f32 %v131, %v157
  %v206 = vadd.f32 %v132, %v154
  %v207 = vadd.f32 %v133, %v155
  %v208 = vadd.f32 %v134, %v156
  %v209 = vadd.f32 %v135, %v157
  %v210 = vadd.f32 %v136, %v154
  %v211 = vadd.f32 %v137, %v155
  %v212 = vadd.f32 %v138, %v156
  %v213 = vadd.f32 %v139, %v157
  %v214 = vadd.f32 %v140, %v154
  %v215 = vadd.f32 %v141, %v155
  %v216 = vadd.f32 %v142, %v156
  %v217 = vadd.f32 %v143, %v157
  %v218 = vadd.f32 %v144, %v154
  %v219 = vadd.f32 %v145, %v155
  %v220 = vadd.f32 %v146, %v156
  %v221 = vadd.f32 %v147, %v157
  %v222 = vadd.f32 %v148, %v154
  %v223 = vadd.f32 %v149, %v155
  %v224 = vadd.f32 %v150, %v156
  %v225 = vadd.f32 %v151, %v157
  %vm226 = vcmp.gt.f32.partialorder %v162, 0.0
  %vm227 = vcmp.gt.f32.partialorder %v163, 0.0
  %vm228 = vcmp.gt.f32.partialorder %v164, 0.0
  %vm229 = vcmp.gt.f32.partialorder %v165, 0.0
  %vm230 = vcmp.gt.f32.partialorder %v166, 0.0
  %vm231 = vcmp.gt.f32.partialorder %v167, 0.0
  %vm232 = vcmp.gt.f32.partialorder %v168, 0.0
  %vm233 = vcmp.gt.f32.partialorder %v169, 0.0
  %vm234 = vcmp.gt.f32.partialorder %v170, 0.0
  %vm235 = vcmp.gt.f32.partialorder %v171, 0.0
  %vm236 = vcmp.gt.f32.partialorder %v172, 0.0
  %vm237 = vcmp.gt.f32.partialorder %v173, 0.0
  %vm238 = vcmp.gt.f32.partialorder %v174, 0.0
  %vm239 = vcmp.gt.f32.partialorder %v175, 0.0
  %vm240 = vcmp.gt.f32.partialorder %v176, 0.0
  %vm241 = vcmp.gt.f32.partialorder %v177, 0.0
  %vm242 = vcmp.gt.f32.partialorder %v178, 0.0
  %vm243 = vcmp.gt.f32.partialorder %v179, 0.0
  %vm244 = vcmp.gt.f32.partialorder %v180, 0.0
  %vm245 = vcmp.gt.f32.partialorder %v181, 0.0
  %vm246 = vcmp.gt.f32.partialorder %v182, 0.0
  %vm247 = vcmp.gt.f32.partialorder %v183, 0.0
  %vm248 = vcmp.gt.f32.partialorder %v184, 0.0
  %vm249 = vcmp.gt.f32.partialorder %v185, 0.0
  %vm250 = vcmp.gt.f32.partialorder %v186, 0.0
  %vm251 = vcmp.gt.f32.partialorder %v187, 0.0
  %vm252 = vcmp.gt.f32.partialorder %v188, 0.0
  %vm253 = vcmp.gt.f32.partialorder %v189, 0.0
  %vm254 = vcmp.gt.f32.partialorder %v190, 0.0
  %vm255 = vcmp.gt.f32.partialorder %v191, 0.0
  %vm256 = vcmp.gt.f32.partialorder %v192, 0.0
  %vm257 = vcmp.gt.f32.partialorder %v193, 0.0
  %vm258 = vcmp.gt.f32.partialorder %v194, 0.0
  %vm259 = vcmp.gt.f32.partialorder %v195, 0.0
  %vm260 = vcmp.gt.f32.partialorder %v196, 0.0
  %vm261 = vcmp.gt.f32.partialorder %v197, 0.0
  %vm262 = vcmp.gt.f32.partialorder %v198, 0.0
  %vm263 = vcmp.gt.f32.partialorder %v199, 0.0
  %vm264 = vcmp.gt.f32.partialorder %v200, 0.0
  %vm265 = vcmp.gt.f32.partialorder %v201, 0.0
  %vm266 = vcmp.gt.f32.partialorder %v202, 0.0
  %vm267 = vcmp.gt.f32.partialorder %v203, 0.0
  %vm268 = vcmp.gt.f32.partialorder %v204, 0.0
  %vm269 = vcmp.gt.f32.partialorder %v205, 0.0
  %vm270 = vcmp.gt.f32.partialorder %v206, 0.0
  %vm271 = vcmp.gt.f32.partialorder %v207, 0.0
  %vm272 = vcmp.gt.f32.partialorder %v208, 0.0
  %vm273 = vcmp.gt.f32.partialorder %v209, 0.0
  %vm274 = vcmp.gt.f32.partialorder %v210, 0.0
  %vm275 = vcmp.gt.f32.partialorder %v211, 0.0
  %vm276 = vcmp.gt.f32.partialorder %v212, 0.0
  %vm277 = vcmp.gt.f32.partialorder %v213, 0.0
  %vm278 = vcmp.gt.f32.partialorder %v214, 0.0
  %vm279 = vcmp.gt.f32.partialorder %v215, 0.0
  %vm280 = vcmp.gt.f32.partialorder %v216, 0.0
  %vm281 = vcmp.gt.f32.partialorder %v217, 0.0
  %vm282 = vcmp.gt.f32.partialorder %v218, 0.0
  %vm283 = vcmp.gt.f32.partialorder %v219, 0.0
  %vm284 = vcmp.gt.f32.partialorder %v220, 0.0
  %vm285 = vcmp.gt.f32.partialorder %v221, 0.0
  %vm286 = vcmp.gt.f32.partialorder %v222, 0.0
  %vm287 = vcmp.gt.f32.partialorder %v223, 0.0
  %vm288 = vcmp.gt.f32.partialorder %v224, 0.0
  %vm289 = vcmp.gt.f32.partialorder %v225, 0.0
  %v290 = vmul.f32 %v162, 0.01
  %v291 = vmul.f32 %v163, 0.01
  %v292 = vmul.f32 %v164, 0.01
  %v293 = vmul.f32 %v165, 0.01
  %v294 = vmul.f32 %v166, 0.01
  %v295 = vmul.f32 %v167, 0.01
  %v296 = vmul.f32 %v168, 0.01
  %v297 = vmul.f32 %v169, 0.01
  %v298 = vmul.f32 %v170, 0.01
  %v299 = vmul.f32 %v171, 0.01
  %v300 = vmul.f32 %v172, 0.01
  %v301 = vmul.f32 %v173, 0.01
  %v302 = vmul.f32 %v174, 0.01
  %v303 = vmul.f32 %v175, 0.01
  %v304 = vmul.f32 %v176, 0.01
  %v305 = vmul.f32 %v177, 0.01
  %v306 = vmul.f32 %v178, 0.01
  %v307 = vmul.f32 %v179, 0.01
  %v308 = vmul.f32 %v180, 0.01
  %v309 = vmul.f32 %v181, 0.01
  %v310 = vmul.f32 %v182, 0.01
  %v311 = vmul.f32 %v183, 0.01
  %v312 = vmul.f32 %v184, 0.01
  %v313 = vmul.f32 %v185, 0.01
  %v314 = vmul.f32 %v186, 0.01
  %v315 = vmul.f32 %v187, 0.01
  %v316 = vmul.f32 %v188, 0.01
  %v317 = vmul.f32 %v189, 0.01
  %v318 = vmul.f32 %v190, 0.01
  %v319 = vmul.f32 %v191, 0.01
  %v320 = vmul.f32 %v192, 0.01
  %v321 = vmul.f32 %v193, 0.01
  %v322 = vmul.f32 %v194, 0.01
  %v323 = vmul.f32 %v195, 0.01
  %v324 = vmul.f32 %v196, 0.01
  %v325 = vmul.f32 %v197, 0.01
  %v326 = vmul.f32 %v198, 0.01
  %v327 = vmul.f32 %v199, 0.01
  %v328 = vmul.f32 %v200, 0.01
  %v329 = vmul.f32 %v201, 0.01
  %v330 = vmul.f32 %v202, 0.01
  %v331 = vmul.f32 %v203, 0.01
  %v332 = vmul.f32 %v204, 0.01
  %v333 = vmul.f32 %v205, 0.01
  %v334 = vmul.f32 %v206, 0.01
  %v335 = vmul.f32 %v207, 0.01
  %v336 = vmul.f32 %v208, 0.01
  %v337 = vmul.f32 %v209, 0.01
  %v338 = vmul.f32 %v210, 0.01
  %v339 = vmul.f32 %v211, 0.01
  %v340 = vmul.f32 %v212, 0.01
  %v341 = vmul.f32 %v213, 0.01
  %v342 = vmul.f32 %v214, 0.01
  %v343 = vmul.f32 %v215, 0.01
  %v344 = vmul.f32 %v216, 0.01
  %v345 = vmul.f32 %v217, 0.01
  %v346 = vmul.f32 %v218, 0.01
  %v347 = vmul.f32 %v219, 0.01
  %v348 = vmul.f32 %v220, 0.01
  %v349 = vmul.f32 %v221, 0.01
  %v350 = vmul.f32 %v222, 0.01
  %v351 = vmul.f32 %v223, 0.01
  %v352 = vmul.f32 %v224, 0.01
  %v353 = vmul.f32 %v225, 0.01
  %v354 = vsel %vm226, %v162, %v290
  %v355 = vsel %vm227, %v163, %v291
  %v356 = vsel %vm228, %v164, %v292
  %v357 = vsel %vm229, %v165, %v293
  %v358 = vsel %vm230, %v166, %v294
  %v359 = vsel %vm231, %v167, %v295
  %v360 = vsel %vm232, %v168, %v296
  %v361 = vsel %vm233, %v169, %v297
  %v362 = vsel %vm234, %v170, %v298
  %v363 = vsel %vm235, %v171, %v299
  %v364 = vsel %vm236, %v172, %v300
  %v365 = vsel %vm237, %v173, %v301
  %v366 = vsel %vm238, %v174, %v302
  %v367 = vsel %vm239, %v175, %v303
  %v368 = vsel %vm240, %v176, %v304
  %v369 = vsel %vm241, %v177, %v305
  %v370 = vsel %vm242, %v178, %v306
  %v371 = vsel %vm243, %v179, %v307
  %v372 = vsel %vm244, %v180, %v308
  %v373 = vsel %vm245, %v181, %v309
  %v374 = vsel %vm246, %v182, %v310
  %v375 = vsel %vm247, %v183, %v311
  %v376 = vsel %vm248, %v184, %v312
  %v377 = vsel %vm249, %v185, %v313
  %v378 = vsel %vm250, %v186, %v314
  %v379 = vsel %vm251, %v187, %v315
  %v380 = vsel %vm252, %v188, %v316
  %v381 = vsel %vm253, %v189, %v317
  %v382 = vsel %vm254, %v190, %v318
  %v383 = vsel %vm255, %v191, %v319
  %v384 = vsel %vm256, %v192, %v320
  %v385 = vsel %vm257, %v193, %v321
  %v386 = vsel %vm258, %v194, %v322
  %v387 = vsel %vm259, %v195, %v323
  %v388 = vsel %vm260, %v196, %v324
  %v389 = vsel %vm261, %v197, %v325
  %v390 = vsel %vm262, %v198, %v326
  %v391 = vsel %vm263, %v199, %v327
  %v392 = vsel %vm264, %v200, %v328
  %v393 = vsel %vm265, %v201, %v329
  %v394 = vsel %vm266, %v202, %v330
  %v395 = vsel %vm267, %v203, %v331
  %v396 = vsel %vm268, %v204, %v332
  %v397 = vsel %vm269, %v205, %v333
  %v398 = vsel %vm270, %v206, %v334
  %v399 = vsel %vm271, %v207, %v335
  %v400 = vsel %vm272, %v208, %v336
  %v401 = vsel %vm273, %v209, %v337
  %v402 = vsel %vm274, %v210, %v338
  %v403 = vsel %vm275, %v211, %v339
  %v404 = vsel %vm276, %v212, %v340
  %v405 = vsel %vm277, %v213, %v341
  %v406 = vsel %vm278, %v214, %v342
  %v407 = vsel %vm279, %v215, %v343
  %v408 = vsel %vm280, %v216, %v344
  %v409 = vsel %vm281, %v217, %v345
  %v410 = vsel %vm282, %v218, %v346
  %v411 = vsel %vm283, %v219, %v347
  %v412 = vsel %vm284, %v220, %v348
  %v413 = vsel %vm285, %v221, %v349
  %v414 = vsel %vm286, %v222, %v350
  %v415 = vsel %vm287, %v223, %v351
  %v416 = vsel %vm288, %v224, %v352
  %v417 = vsel %vm289, %v225, %v353
  %v418 = vpack.c.bf16 %v355, %v354
  %v419 = vpack.c.bf16 %v357, %v356
  %v420 = vpack.c.bf16 %v359, %v358
  %v421 = vpack.c.bf16 %v361, %v360
  %v422 = vpack.c.bf16 %v363, %v362
  %v423 = vpack.c.bf16 %v365, %v364
  %v424 = vpack.c.bf16 %v367, %v366
  %v425 = vpack.c.bf16 %v369, %v368
  %v426 = vpack.c.bf16 %v371, %v370
  %v427 = vpack.c.bf16 %v373, %v372
  %v428 = vpack.c.bf16 %v375, %v374
  %v429 = vpack.c.bf16 %v377, %v376
  %v430 = vpack.c.bf16 %v379, %v378
  %v431 = vpack.c.bf16 %v381, %v380
  %v432 = vpack.c.bf16 %v383, %v382
  %v433 = vpack.c.bf16 %v385, %v384
  %v434 = vpack.c.bf16 %v387, %v386
  %v435 = vpack.c.bf16 %v389, %v388
  %v436 = vpack.c.bf16 %v391, %v390
  %v437 = vpack.c.bf16 %v393, %v392
  %v438 = vpack.c.bf16 %v395, %v394
  %v439 = vpack.c.bf16 %v397, %v396
  %v440 = vpack.c.bf16 %v399, %v398
  %v441 = vpack.c.bf16 %v401, %v400
  %v442 = vpack.c.bf16 %v403, %v402
  %v443 = vpack.c.bf16 %v405, %v404
  %v444 = vpack.c.bf16 %v407, %v406
  %v445 = vpack.c.bf16 %v409, %v408
  %v446 = vpack.c.bf16 %v411, %v410
  %v447 = vpack.c.bf16 %v413, %v412
  %v448 = vpack.c.bf16 %v415, %v414
  %v449 = vpack.c.bf16 %v417, %v416
  %450 = vst [vmem:[%s3] sm:$0xff] %v418
  %451 = vst [vmem:[%s3 + $0x8] sm:$0xff] %v419
  %452 = vst [vmem:[%s3 + $0x10] sm:$0xff] %v420
  %453 = vst [vmem:[%s3 + $0x18] sm:$0xff] %v421
  %454 = vst [vmem:[%s3 + $0x20] sm:$0xff] %v422
  %455 = vst [vmem:[%s3 + $0x28] sm:$0xff] %v423
  %456 = vst [vmem:[%s3 + $0x30] sm:$0xff] %v424
  %457 = vst [vmem:[%s3 + $0x38] sm:$0xff] %v425
  %458 = vst [vmem:[%s3 + $0x40] sm:$0xff] %v426
  %459 = vst [vmem:[%s3 + $0x48] sm:$0xff] %v427
  %460 = vst [vmem:[%s3 + $0x50] sm:$0xff] %v428
  %461 = vst [vmem:[%s3 + $0x58] sm:$0xff] %v429
  %462 = vst [vmem:[%s3 + $0x60] sm:$0xff] %v430
  %463 = vst [vmem:[%s3 + $0x68] sm:$0xff] %v431
  %464 = vst [vmem:[%s3 + $0x70] sm:$0xff] %v432
  %465 = vst [vmem:[%s3 + $0x78] sm:$0xff] %v433
  %466 = vst [vmem:[%s3 + $0x80] sm:$0xff] %v434
  %467 = vst [vmem:[%s3 + $0x88] sm:$0xff] %v435
  %468 = vst [vmem:[%s3 + $0x90] sm:$0xff] %v436
  %469 = vst [vmem:[%s3 + $0x98] sm:$0xff] %v437
  %470 = vst [vmem:[%s3 + $0xa0] sm:$0xff] %v438
  %471 = vst [vmem:[%s3 + $0xa8] sm:$0xff] %v439
  %472 = vst [vmem:[%s3 + $0xb0] sm:$0xff] %v440
  %473 = vst [vmem:[%s3 + $0xb8] sm:$0xff] %v441
  %474 = vst [vmem:[%s3 + $0xc0] sm:$0xff] %v442
  %475 = vst [vmem:[%s3 + $0xc8] sm:$0xff] %v443
  %476 = vst [vmem:[%s3 + $0xd0] sm:$0xff] %v444
  %477 = vst [vmem:[%s3 + $0xd8] sm:$0xff] %v445
  %478 = vst [vmem:[%s3 + $0xe0] sm:$0xff] %v446
  %479 = vst [vmem:[%s3 + $0xe8] sm:$0xff] %v447
  %480 = vst [vmem:[%s3 + $0xf0] sm:$0xff] %v448
  %481 = vst [vmem:[%s3 + $0xf8] sm:$0xff] %v449
  // Predicated region
  $region14: #{vae_forward.20} parent=0 // pred_check
    _
  $region15: #{vae_forward.20} parent=0 // pred_check_branch
    %483 = sbr.rel (0) target = $region17
  $region16: #{vae_forward.20} parent=0 // pred_region
    _
  $region17: #{vae_forward.20} parent=0 // pred_fallthru
    _
  // Predicated region
  $region18: #{vae_forward.20} parent=0 // pred_check
    _
  $region19: #{vae_forward.20} parent=0 // pred_check_branch
    %485 = sbr.rel (0) target = $region21
  $region20: #{vae_forward.20} parent=0 // pred_region
    _
  $region21: #{vae_forward.20} parent=0 // pred_fallthru
    _

// kernel: vae_forward.19
$region0: #{vae_forward.19}
  #allocation0 [shape = 'u32[]', space=smem, size = 0x4, offset = 0x4, fixed_abs, tag = 'smem constant byte address 0x4 - core index']
  #allocation1 [shape = 'u32[72,128]{1,0:T(1,128)}', space=vmem, size = 0x9000, scoped, tag = 'internal scratch']
  %s0 = inlined_call_operand.vmem [shape: bf16[128,128], index: 0, kind: input, shape index: {}]
  %s1 = inlined_call_operand.vmem [shape: bf16[128,512], index: 1, kind: input, shape index: {}]
  %s2 = inlined_call_operand.vmem [shape: f32[1,512], index: 2, kind: input, shape index: {}]
  %s3 = inlined_call_operand.vmem [shape: f32[128,512], index: 3, kind: output, shape index: {0}]
  %s4 = inlined_call_operand.vmem [shape: f32[1,512], index: 4, kind: output, shape index: {1}]
  %s5 = inlined_call_operand.vmem [shape: f32[1,512], index: 5, kind: output, shape index: {2}]
  %6 = xla_tuple %s3, %s4, %s5
  %s7 = sld [smem:[#allocation0]]
  $region42: #{vae_forward.19} parent=0
    _
  %s9 = ssub.s32 1, %s7
  %s10 = scalar_select 0, %s9, %s7
  // Predicated region
  $region2: #{vae_forward.19} parent=0 // pred_check
    _
  $region3: #{vae_forward.19} parent=0 // pred_check_branch
    %12 = sbr.rel (0) target = $region5
  $region4: #{vae_forward.19} parent=0 // pred_region
    _
  $region5: #{vae_forward.19} parent=0 // pred_fallthru
    _
  // Predicated region
  $region6: #{vae_forward.19} parent=0 // pred_check
    _
  $region7: #{vae_forward.19} parent=0 // pred_check_branch
    %14 = sbr.rel (0) target = $region9
  $region8: #{vae_forward.19} parent=0 // pred_region
    _
  $region9: #{vae_forward.19} parent=0 // pred_fallthru
    _
  // Predicated region
  $region10: #{vae_forward.19} parent=0 // pred_check
    _
  $region11: #{vae_forward.19} parent=0 // pred_check_branch
    %16 = sbr.rel (0) target = $region13
  $region12: #{vae_forward.19} parent=0 // pred_region
    _
  $region13: #{vae_forward.19} parent=0 // pred_fallthru
    _
  %v17 = vld [vmem:[%s0] sm:$0xf]
  %v18 = vld [vmem:[%s0 + $0x4] sm:$0xf]
  %v19 = vld [vmem:[%s0 + $0x8] sm:$0xf]
  %v20 = vld [vmem:[%s0 + $0xc] sm:$0xf]
  %v21 = vld [vmem:[%s0 + $0x10] sm:$0xf]
  %v22 = vld [vmem:[%s0 + $0x14] sm:$0xf]
  %v23 = vld [vmem:[%s0 + $0x18] sm:$0xf]
  %v24 = vld [vmem:[%s0 + $0x1c] sm:$0xf]
  %v25 = vld [vmem:[%s0 + $0x20] sm:$0xf]
  %v26 = vld [vmem:[%s0 + $0x24] sm:$0xf]
  %v27 = vld [vmem:[%s0 + $0x28] sm:$0xf]
  %v28 = vld [vmem:[%s0 + $0x2c] sm:$0xf]
  %v29 = vld [vmem:[%s0 + $0x30] sm:$0xf]
  %v30 = vld [vmem:[%s0 + $0x34] sm:$0xf]
  %v31 = vld [vmem:[%s0 + $0x38] sm:$0xf]
  %v32 = vld [vmem:[%s0 + $0x3c] sm:$0xf]
  %v33 = vld [vmem:[%s1] sm:$0xff]
  %v34 = vld [vmem:[%s1 + $0x8] sm:$0xff]
  %v35 = vld [vmem:[%s1 + $0x10] sm:$0xff]
  %v36 = vld [vmem:[%s1 + $0x18] sm:$0xff]
  %v37 = vld [vmem:[%s1 + $0x20] sm:$0xff]
  %v38 = vld [vmem:[%s1 + $0x28] sm:$0xff]
  %v39 = vld [vmem:[%s1 + $0x30] sm:$0xff]
  %v40 = vld [vmem:[%s1 + $0x38] sm:$0xff]
  %v41 = vld [vmem:[%s1 + $0x40] sm:$0xff]
  %v42 = vld [vmem:[%s1 + $0x48] sm:$0xff]
  %v43 = vld [vmem:[%s1 + $0x50] sm:$0xff]
  %v44 = vld [vmem:[%s1 + $0x58] sm:$0xff]
  %v45 = vld [vmem:[%s1 + $0x60] sm:$0xff]
  %v46 = vld [vmem:[%s1 + $0x68] sm:$0xff]
  %v47 = vld [vmem:[%s1 + $0x70] sm:$0xff]
  %v48 = vld [vmem:[%s1 + $0x78] sm:$0xff]
  %v49 = vld [vmem:[%s1 + $0x80] sm:$0xff]
  %v50 = vld [vmem:[%s1 + $0x88] sm:$0xff]
  %v51 = vld [vmem:[%s1 + $0x90] sm:$0xff]
  %v52 = vld [vmem:[%s1 + $0x98] sm:$0xff]
  %v53 = vld [vmem:[%s1 + $0xa0] sm:$0xff]
  %v54 = vld [vmem:[%s1 + $0xa8] sm:$0xff]
  %v55 = vld [vmem:[%s1 + $0xb0] sm:$0xff]
  %v56 = vld [vmem:[%s1 + $0xb8] sm:$0xff]
  %v57 = vld [vmem:[%s1 + $0xc0] sm:$0xff]
  %v58 = vld [vmem:[%s1 + $0xc8] sm:$0xff]
  %v59 = vld [vmem:[%s1 + $0xd0] sm:$0xff]
  %v60 = vld [vmem:[%s1 + $0xd8] sm:$0xff]
  %v61 = vld [vmem:[%s1 + $0xe0] sm:$0xff]
  %v62 = vld [vmem:[%s1 + $0xe8] sm:$0xff]
  %v63 = vld [vmem:[%s1 + $0xf0] sm:$0xff]
  %v64 = vld [vmem:[%s1 + $0xf8] sm:$0xff]
  %v65 = vld [vmem:[%s2] sm:$0xf]
  %v67 = vperm.slane %v65, 0
  %v68 = vperm.slane %v65, 1
  %v69 = vperm.slane %v65, 2
  %v70 = vperm.slane %v65, 3
  %v91 = vunpack.c.l.b16 %v17
  %v92 = vunpack.c.l.b16 %v18
  %v93 = vunpack.c.l.b16 %v19
  %v94 = vunpack.c.l.b16 %v20
  %v95 = vunpack.c.l.b16 %v21
  %v96 = vunpack.c.l.b16 %v22
  %v97 = vunpack.c.l.b16 %v23
  %v98 = vunpack.c.l.b16 %v24
  %v99 = vunpack.c.l.b16 %v25
  %v100 = vunpack.c.l.b16 %v26
  %v101 = vunpack.c.l.b16 %v27
  %v102 = vunpack.c.l.b16 %v28
  %v103 = vunpack.c.l.b16 %v29
  %v104 = vunpack.c.l.b16 %v30
  %v105 = vunpack.c.l.b16 %v31
  %v106 = vunpack.c.l.b16 %v32
  %v107 = vpack.c.b16 %v92, %v91
  %v108 = vpack.c.b16 %v94, %v93
  %v109 = vpack.c.b16 %v96, %v95
  %v110 = vpack.c.b16 %v98, %v97
  %v111 = vpack.c.b16 %v100, %v99
  %v112 = vpack.c.b16 %v102, %v101
  %v113 = vpack.c.b16 %v104, %v103
  %v114 = vpack.c.b16 %v106, %v105
  %v155 = vunpack.c.l.b16 %v33
  %v156 = vunpack.c.h.b16 %v33
  %v157 = vunpack.c.l.b16 %v34
  %v158 = vunpack.c.h.b16 %v34
  %v159 = vunpack.c.l.b16 %v35
  %v160 = vunpack.c.h.b16 %v35
  %v161 = vunpack.c.l.b16 %v36
  %v162 = vunpack.c.h.b16 %v36
  %v163 = vunpack.c.l.b16 %v37
  %v164 = vunpack.c.h.b16 %v37
  %v165 = vunpack.c.l.b16 %v38
  %v166 = vunpack.c.h.b16 %v38
  %v167 = vunpack.c.l.b16 %v39
  %v168 = vunpack.c.h.b16 %v39
  %v169 = vunpack.c.l.b16 %v40
  %v170 = vunpack.c.h.b16 %v40
  %v171 = vunpack.c.l.b16 %v41
  %v172 = vunpack.c.h.b16 %v41
  %v173 = vunpack.c.l.b16 %v42
  %v174 = vunpack.c.h.b16 %v42
  %v175 = vunpack.c.l.b16 %v43
  %v176 = vunpack.c.h.b16 %v43
  %v177 = vunpack.c.l.b16 %v44
  %v178 = vunpack.c.h.b16 %v44
  %v179 = vunpack.c.l.b16 %v45
  %v180 = vunpack.c.h.b16 %v45
  %v181 = vunpack.c.l.b16 %v46
  %v182 = vunpack.c.h.b16 %v46
  %v183 = vunpack.c.l.b16 %v47
  %v184 = vunpack.c.h.b16 %v47
  %v185 = vunpack.c.l.b16 %v48
  %v186 = vunpack.c.h.b16 %v48
  %v187 = vunpack.c.l.b16 %v49
  %v188 = vunpack.c.h.b16 %v49
  %v189 = vunpack.c.l.b16 %v50
  %v190 = vunpack.c.h.b16 %v50
  %v191 = vunpack.c.l.b16 %v51
  %v192 = vunpack.c.h.b16 %v51
  %v193 = vunpack.c.l.b16 %v52
  %v194 = vunpack.c.h.b16 %v52
  %v195 = vunpack.c.l.b16 %v53
  %v196 = vunpack.c.h.b16 %v53
  %v197 = vunpack.c.l.b16 %v54
  %v198 = vunpack.c.h.b16 %v54
  %v199 = vunpack.c.l.b16 %v55
  %v200 = vunpack.c.h.b16 %v55
  %v201 = vunpack.c.l.b16 %v56
  %v202 = vunpack.c.h.b16 %v56
  %v203 = vunpack.c.l.b16 %v57
  %v204 = vunpack.c.h.b16 %v57
  %v205 = vunpack.c.l.b16 %v58
  %v206 = vunpack.c.h.b16 %v58
  %v207 = vunpack.c.l.b16 %v59
  %v208 = vunpack.c.h.b16 %v59
  %v209 = vunpack.c.l.b16 %v60
  %v210 = vunpack.c.h.b16 %v60
  %v211 = vunpack.c.l.b16 %v61
  %v212 = vunpack.c.h.b16 %v61
  %v213 = vunpack.c.l.b16 %v62
  %v214 = vunpack.c.h.b16 %v62
  %v215 = vunpack.c.l.b16 %v63
  %v216 = vunpack.c.h.b16 %v63
  %v217 = vunpack.c.l.b16 %v64
  %v218 = vunpack.c.h.b16 %v64
  %v219 = vpack.c.b16 %v159, %v155
  %v220 = vpack.c.b16 %v160, %v156
  %v221 = vpack.c.b16 %v161, %v157
  %v222 = vpack.c.b16 %v162, %v158
  %v223 = vpack.c.b16 %v167, %v163
  %v224 = vpack.c.b16 %v168, %v164
  %v225 = vpack.c.b16 %v169, %v165
  %v226 = vpack.c.b16 %v170, %v166
  %v227 = vpack.c.b16 %v175, %v171
  %v228 = vpack.c.b16 %v176, %v172
  %v229 = vpack.c.b16 %v177, %v173
  %v230 = vpack.c.b16 %v178, %v174
  %v231 = vpack.c.b16 %v183, %v179
  %v232 = vpack.c.b16 %v184, %v180
  %v233 = vpack.c.b16 %v185, %v181
  %v234 = vpack.c.b16 %v186, %v182
  %v235 = vpack.c.b16 %v191, %v187
  %v236 = vpack.c.b16 %v192, %v188
  %v237 = vpack.c.b16 %v193, %v189
  %v238 = vpack.c.b16 %v194, %v190
  %v239 = vpack.c.b16 %v199, %v195
  %v240 = vpack.c.b16 %v200, %v196
  %v241 = vpack.c.b16 %v201, %v197
  %v242 = vpack.c.b16 %v202, %v198
  %v243 = vpack.c.b16 %v207, %v203
  %v244 = vpack.c.b16 %v208, %v204
  %v245 = vpack.c.b16 %v209, %v205
  %v246 = vpack.c.b16 %v210, %v206
  %v247 = vpack.c.b16 %v215, %v211
  %v248 = vpack.c.b16 %v216, %v212
  %v249 = vpack.c.b16 %v217, %v213
  %v250 = vpack.c.b16 %v218, %v214
  %283 = vmatpush.bf16.msra.mxu0 %v247
  %284 = vmatpush.bf16.msra.mxu0 %v243
  %285 = vmatpush.bf16.msra.mxu0 %v239
  %286 = vmatpush.bf16.msra.mxu0 %v235
  %287 = vmatpush.bf16.msra.mxu0 %v231
  %288 = vmatpush.bf16.msra.mxu0 %v227
  %289 = vmatpush.bf16.msra.mxu0 %v223
  %290 = vmatpush.bf16.msra.mxu0 %v219
  %291 = vmatmul.bf16.gmra.mxu0 %v107
  %v292 = vpop.f32.mrf.mxu0
  %v293 = vadd.f32 %v67, %v292
  %v294 = vpop.f32.mrf.mxu0
  %v295 = vadd.f32 %v67, %v294
  %296 = vmatmul.bf16.gmra.mxu0 %v108
  %v297 = vpop.f32.mrf.mxu0
  %v298 = vadd.f32 %v67, %v297
  %v299 = vpop.f32.mrf.mxu0
  %v300 = vadd.f32 %v67, %v299
  %301 = vmatmul.bf16.gmra.mxu0 %v109
  %v302 = vpop.f32.mrf.mxu0
  %v303 = vadd.f32 %v67, %v302
  %v304 = vpop.f32.mrf.mxu0
  %v305 = vadd.f32 %v67, %v304
  %306 = vmatmul.bf16.gmra.mxu0 %v110
  %v307 = vpop.f32.mrf.mxu0
  %v308 = vadd.f32 %v67, %v307
  %v309 = vpop.f32.mrf.mxu0
  %v310 = vadd.f32 %v67, %v309
  %311 = vmatmul.bf16.gmra.mxu0 %v111
  %v312 = vpop.f32.mrf.mxu0
  %v313 = vadd.f32 %v67, %v312
  %v314 = vpop.f32.mrf.mxu0
  %v315 = vadd.f32 %v67, %v314
  %316 = vmatmul.bf16.gmra.mxu0 %v112
  %v317 = vpop.f32.mrf.mxu0
  %v318 = vadd.f32 %v67, %v317
  %v319 = vpop.f32.mrf.mxu0
  %v320 = vadd.f32 %v67, %v319
  %321 = vmatmul.bf16.gmra.mxu0 %v113
  %v322 = vpop.f32.mrf.mxu0
  %v323 = vadd.f32 %v67, %v322
  %v324 = vpop.f32.mrf.mxu0
  %v325 = vadd.f32 %v67, %v324
  %326 = vmatmul.bf16.gmra.mxu0 %v114
  %v327 = vpop.f32.mrf.mxu0
  %v328 = vadd.f32 %v67, %v327
  %v329 = vpop.f32.mrf.mxu0
  %v330 = vadd.f32 %v67, %v329
  %331 = vdwg.mxu0
  %332 = vmatpush.bf16.msra.mxu0 %v248
  %333 = vmatpush.bf16.msra.mxu0 %v244
  %334 = vmatpush.bf16.msra.mxu0 %v240
  %335 = vmatpush.bf16.msra.mxu0 %v236
  %336 = vmatpush.bf16.msra.mxu0 %v232
  %337 = vmatpush.bf16.msra.mxu0 %v228
  %338 = vmatpush.bf16.msra.mxu0 %v224
  %339 = vmatpush.bf16.msra.mxu0 %v220
  %340 = vmatmul.bf16.gmra.mxu0 %v107
  %v341 = vpop.f32.mrf.mxu0
  %v342 = vadd.f32 %v68, %v341
  %v343 = vpop.f32.mrf.mxu0
  %v344 = vadd.f32 %v68, %v343
  %345 = vmatmul.bf16.gmra.mxu0 %v108
  %v346 = vpop.f32.mrf.mxu0
  %v347 = vadd.f32 %v68, %v346
  %v348 = vpop.f32.mrf.mxu0
  %v349 = vadd.f32 %v68, %v348
  %350 = vmatmul.bf16.gmra.mxu0 %v109
  %v351 = vpop.f32.mrf.mxu0
  %v352 = vadd.f32 %v68, %v351
  %v353 = vpop.f32.mrf.mxu0
  %v354 = vadd.f32 %v68, %v353
  %355 = vmatmul.bf16.gmra.mxu0 %v110
  %v356 = vpop.f32.mrf.mxu0
  %v357 = vadd.f32 %v68, %v356
  %v358 = vpop.f32.mrf.mxu0
  %v359 = vadd.f32 %v68, %v358
  %360 = vmatmul.bf16.gmra.mxu0 %v111
  %v361 = vpop.f32.mrf.mxu0
  %v362 = vadd.f32 %v68, %v361
  %v363 = vpop.f32.mrf.mxu0
  %v364 = vadd.f32 %v68, %v363
  %365 = vmatmul.bf16.gmra.mxu0 %v112
  %v366 = vpop.f32.mrf.mxu0
  %v367 = vadd.f32 %v68, %v366
  %v368 = vpop.f32.mrf.mxu0
  %v369 = vadd.f32 %v68, %v368
  %370 = vmatmul.bf16.gmra.mxu0 %v113
  %v371 = vpop.f32.mrf.mxu0
  %v372 = vadd.f32 %v68, %v371
  %v373 = vpop.f32.mrf.mxu0
  %v374 = vadd.f32 %v68, %v373
  %375 = vmatmul.bf16.gmra.mxu0 %v114
  %v376 = vpop.f32.mrf.mxu0
  %v377 = vadd.f32 %v68, %v376
  %v378 = vpop.f32.mrf.mxu0
  %v379 = vadd.f32 %v68, %v378
  %380 = vdwg.mxu0
  %381 = vmatpush.bf16.msra.mxu0 %v249
  %382 = vmatpush.bf16.msra.mxu0 %v245
  %383 = vmatpush.bf16.msra.mxu0 %v241
  %384 = vmatpush.bf16.msra.mxu0 %v237
  %385 = vmatpush.bf16.msra.mxu0 %v233
  %386 = vmatpush.bf16.msra.mxu0 %v229
  %387 = vmatpush.bf16.msra.mxu0 %v225
  %388 = vmatpush.bf16.msra.mxu0 %v221
  %389 = vmatmul.bf16.gmra.mxu0 %v107
  %v390 = vpop.f32.mrf.mxu0
  %v391 = vadd.f32 %v69, %v390
  %v392 = vpop.f32.mrf.mxu0
  %v393 = vadd.f32 %v69, %v392
  %394 = vmatmul.bf16.gmra.mxu0 %v108
  %v395 = vpop.f32.mrf.mxu0
  %v396 = vadd.f32 %v69, %v395
  %v397 = vpop.f32.mrf.mxu0
  %v398 = vadd.f32 %v69, %v397
  %399 = vmatmul.bf16.gmra.mxu0 %v109
  %v400 = vpop.f32.mrf.mxu0
  %v401 = vadd.f32 %v69, %v400
  %v402 = vpop.f32.mrf.mxu0
  %v403 = vadd.f32 %v69, %v402
  %404 = vmatmul.bf16.gmra.mxu0 %v110
  %v405 = vpop.f32.mrf.mxu0
  %v406 = vadd.f32 %v69, %v405
  %v407 = vpop.f32.mrf.mxu0
  %v408 = vadd.f32 %v69, %v407
  %409 = vmatmul.bf16.gmra.mxu0 %v111
  %v410 = vpop.f32.mrf.mxu0
  %v411 = vadd.f32 %v69, %v410
  %v412 = vpop.f32.mrf.mxu0
  %v413 = vadd.f32 %v69, %v412
  %414 = vmatmul.bf16.gmra.mxu0 %v112
  %v415 = vpop.f32.mrf.mxu0
  %v416 = vadd.f32 %v69, %v415
  %v417 = vpop.f32.mrf.mxu0
  %v418 = vadd.f32 %v69, %v417
  %419 = vmatmul.bf16.gmra.mxu0 %v113
  %v420 = vpop.f32.mrf.mxu0
  %v421 = vadd.f32 %v69, %v420
  %v422 = vpop.f32.mrf.mxu0
  %v423 = vadd.f32 %v69, %v422
  %424 = vmatmul.bf16.gmra.mxu0 %v114
  %v425 = vpop.f32.mrf.mxu0
  %v426 = vadd.f32 %v69, %v425
  %v427 = vpop.f32.mrf.mxu0
  %v428 = vadd.f32 %v69, %v427
  %429 = vdwg.mxu0
  %430 = vmatpush.bf16.msra.mxu0 %v250
  %431 = vmatpush.bf16.msra.mxu0 %v246
  %432 = vmatpush.bf16.msra.mxu0 %v242
  %433 = vmatpush.bf16.msra.mxu0 %v238
  %434 = vmatpush.bf16.msra.mxu0 %v234
  %435 = vmatpush.bf16.msra.mxu0 %v230
  %436 = vmatpush.bf16.msra.mxu0 %v226
  %437 = vmatpush.bf16.msra.mxu0 %v222
  %438 = vmatmul.bf16.gmra.mxu0 %v107
  %v439 = vpop.f32.mrf.mxu0
  %v440 = vadd.f32 %v70, %v439
  %v441 = vpop.f32.mrf.mxu0
  %v442 = vadd.f32 %v70, %v441
  %443 = vmatmul.bf16.gmra.mxu0 %v108
  %v444 = vpop.f32.mrf.mxu0
  %v445 = vadd.f32 %v70, %v444
  %v446 = vpop.f32.mrf.mxu0
  %v447 = vadd.f32 %v70, %v446
  %448 = vmatmul.bf16.gmra.mxu0 %v109
  %v449 = vpop.f32.mrf.mxu0
  %v450 = vadd.f32 %v70, %v449
  %v451 = vpop.f32.mrf.mxu0
  %v452 = vadd.f32 %v70, %v451
  %453 = vmatmul.bf16.gmra.mxu0 %v110
  %v454 = vpop.f32.mrf.mxu0
  %v455 = vadd.f32 %v70, %v454
  %v456 = vpop.f32.mrf.mxu0
  %v457 = vadd.f32 %v70, %v456
  %458 = vmatmul.bf16.gmra.mxu0 %v111
  %v459 = vpop.f32.mrf.mxu0
  %v460 = vadd.f32 %v70, %v459
  %v461 = vpop.f32.mrf.mxu0
  %v462 = vadd.f32 %v70, %v461
  %463 = vmatmul.bf16.gmra.mxu0 %v112
  %v464 = vpop.f32.mrf.mxu0
  %v465 = vadd.f32 %v70, %v464
  %v466 = vpop.f32.mrf.mxu0
  %v467 = vadd.f32 %v70, %v466
  %468 = vmatmul.bf16.gmra.mxu0 %v113
  %v469 = vpop.f32.mrf.mxu0
  %v470 = vadd.f32 %v70, %v469
  %v471 = vpop.f32.mrf.mxu0
  %v472 = vadd.f32 %v70, %v471
  %473 = vmatmul.bf16.gmra.mxu0 %v114
  %v474 = vpop.f32.mrf.mxu0
  %v475 = vadd.f32 %v70, %v474
  %v476 = vpop.f32.mrf.mxu0
  %v477 = vadd.f32 %v70, %v476
  %478 = vdwg.mxu0
  %479 = vst [vmem:[%s3] sm:$0xff] %v293
  %480 = vst [vmem:[%s3 + $0x8] sm:$0xff] %v342
  %481 = vst [vmem:[%s3 + $0x10] sm:$0xff] %v391
  %482 = vst [vmem:[%s3 + $0x18] sm:$0xff] %v440
  %483 = vst [vmem:[%s3 + $0x20] sm:$0xff] %v295
  %484 = vst [vmem:[%s3 + $0x28] sm:$0xff] %v344
  %485 = vst [vmem:[%s3 + $0x30] sm:$0xff] %v393
  %486 = vst [vmem:[%s3 + $0x38] sm:$0xff] %v442
  %487 = vst [vmem:[%s3 + $0x40] sm:$0xff] %v298
  %488 = vst [vmem:[%s3 + $0x48] sm:$0xff] %v347
  %489 = vst [vmem:[%s3 + $0x50] sm:$0xff] %v396
  %490 = vst [vmem:[%s3 + $0x58] sm:$0xff] %v445
  %491 = vst [vmem:[%s3 + $0x60] sm:$0xff] %v300
  %492 = vst [vmem:[%s3 + $0x68] sm:$0xff] %v349
  %493 = vst [vmem:[%s3 + $0x70] sm:$0xff] %v398
  %494 = vst [vmem:[%s3 + $0x78] sm:$0xff] %v447
  %495 = vst [vmem:[%s3 + $0x80] sm:$0xff] %v303
  %496 = vst [vmem:[%s3 + $0x88] sm:$0xff] %v352
  %497 = vst [vmem:[%s3 + $0x90] sm:$0xff] %v401
  %498 = vst [vmem:[%s3 + $0x98] sm:$0xff] %v450
  %499 = vst [vmem:[%s3 + $0xa0] sm:$0xff] %v305
  %500 = vst [vmem:[%s3 + $0xa8] sm:$0xff] %v354
  %501 = vst [vmem:[%s3 + $0xb0] sm:$0xff] %v403
  %502 = vst [vmem:[%s3 + $0xb8] sm:$0xff] %v452
  %503 = vst [vmem:[%s3 + $0xc0] sm:$0xff] %v308
  %504 = vst [vmem:[%s3 + $0xc8] sm:$0xff] %v357
  %505 = vst [vmem:[%s3 + $0xd0] sm:$0xff] %v406
  %506 = vst [vmem:[%s3 + $0xd8] sm:$0xff] %v455
  %507 = vst [vmem:[%s3 + $0xe0] sm:$0xff] %v310
  %508 = vst [vmem:[%s3 + $0xe8] sm:$0xff] %v359
  %509 = vst [vmem:[%s3 + $0xf0] sm:$0xff] %v408
  %510 = vst [vmem:[%s3 + $0xf8] sm:$0xff] %v457
  %511 = vst [vmem:[%s3 + $0x100] sm:$0xff] %v313
  %512 = vst [vmem:[%s3 + $0x108] sm:$0xff] %v362
  %513 = vst [vmem:[%s3 + $0x110] sm:$0xff] %v411
  %514 = vst [vmem:[%s3 + $0x118] sm:$0xff] %v460
  %515 = vst [vmem:[%s3 + $0x120] sm:$0xff] %v315
  %516 = vst [vmem:[%s3 + $0x128] sm:$0xff] %v364
  %517 = vst [vmem:[%s3 + $0x130] sm:$0xff] %v413
  %518 = vst [vmem:[%s3 + $0x138] sm:$0xff] %v462
  %519 = vst [vmem:[%s3 + $0x140] sm:$0xff] %v318
  %520 = vst [vmem:[%s3 + $0x148] sm:$0xff] %v367
  %521 = vst [vmem:[%s3 + $0x150] sm:$0xff] %v416
  %522 = vst [vmem:[%s3 + $0x158] sm:$0xff] %v465
  %523 = vst [vmem:[%s3 + $0x160] sm:$0xff] %v320
  %524 = vst [vmem:[%s3 + $0x168] sm:$0xff] %v369
  %525 = vst [vmem:[%s3 + $0x170] sm:$0xff] %v418
  %526 = vst [vmem:[%s3 + $0x178] sm:$0xff] %v467
  %527 = vst [vmem:[%s3 + $0x180] sm:$0xff] %v323
  %528 = vst [vmem:[%s3 + $0x188] sm:$0xff] %v372
  %529 = vst [vmem:[%s3 + $0x190] sm:$0xff] %v421
  %530 = vst [vmem:[%s3 + $0x198] sm:$0xff] %v470
  %531 = vst [vmem:[%s3 + $0x1a0] sm:$0xff] %v325
  %532 = vst [vmem:[%s3 + $0x1a8] sm:$0xff] %v374
  %533 = vst [vmem:[%s3 + $0x1b0] sm:$0xff] %v423
  %534 = vst [vmem:[%s3 + $0x1b8] sm:$0xff] %v472
  %535 = vst [vmem:[%s3 + $0x1c0] sm:$0xff] %v328
  %536 = vst [vmem:[%s3 + $0x1c8] sm:$0xff] %v377
  %537 = vst [vmem:[%s3 + $0x1d0] sm:$0xff] %v426
  %538 = vst [vmem:[%s3 + $0x1d8] sm:$0xff] %v475
  %539 = vst [vmem:[%s3 + $0x1e0] sm:$0xff] %v330
  %540 = vst [vmem:[%s3 + $0x1e8] sm:$0xff] %v379
  %541 = vst [vmem:[%s3 + $0x1f0] sm:$0xff] %v428
  %542 = vst [vmem:[%s3 + $0x1f8] sm:$0xff] %v477
  %p543 = scmp.eq.s32.totalorder 0, 0
  // Predicated region
  $region14: #{vae_forward.19} parent=0 // pred_check
    %p544 = pneg %p543
  $region15: #{vae_forward.19} parent=0 // pred_check_branch
    %546 = sbr.rel (%p544) target = $region17
  $region16: #{vae_forward.19} parent=0 // pred_region
    %v547 = vlaneseq
    %vm548 = vcmp.ge.s32.totalorder %v547, 0
    %vm549 = vcmp.lt.s32.totalorder %v547, 512
    %vm550 = vmand %vm548, %vm549
    %551 = vst.msk [vmem:[%s4] sm:$0xf] %vm550, 0.0
    %552 = vst.msk [vmem:[%s5] sm:$0xf] %vm550, 0.0
  $region17: #{vae_forward.19} parent=0 // pred_fallthru
    _
  %v553 = vld [vmem:[%s4] sm:$0xf]
  %v554 = vadd.f32 %v293, %v295
  %v555 = vadd.f32 %v554, %v298
  %v556 = vadd.f32 %v555, %v300
  %v557 = vadd.f32 %v556, %v303
  %v558 = vadd.f32 %v557, %v305
  %v559 = vadd.f32 %v558, %v308
  %v560 = vadd.f32 %v559, %v310
  %v561 = vadd.f32 %v560, %v313
  %v562 = vadd.f32 %v561, %v315
  %v563 = vadd.f32 %v562, %v318
  %v564 = vadd.f32 %v563, %v320
  %v565 = vadd.f32 %v564, %v323
  %v566 = vadd.f32 %v565, %v325
  %v567 = vadd.f32 %v566, %v328
  %v568 = vadd.f32 %v567, %v330
  %v569 = vrot.slane %v568, 4
  %v570 = vadd.f32 %v568, %v569
  %v571 = vrot.slane %v570, 2
  %v572 = vadd.f32 %v570, %v571
  %v573 = vrot.slane %v572, 1
  %v574 = vadd.f32 %v572, %v573
  %v575 = vadd.f32 %v342, %v344
  %v576 = vadd.f32 %v575, %v347
  %v577 = vadd.f32 %v576, %v349
  %v578 = vadd.f32 %v577, %v352
  %v579 = vadd.f32 %v578, %v354
  %v580 = vadd.f32 %v579, %v357
  %v581 = vadd.f32 %v580, %v359
  %v582 = vadd.f32 %v581, %v362
  %v583 = vadd.f32 %v582, %v364
  %v584 = vadd.f32 %v583, %v367
  %v585 = vadd.f32 %v584, %v369
  %v586 = vadd.f32 %v585, %v372
  %v587 = vadd.f32 %v586, %v374
  %v588 = vadd.f32 %v587, %v377
  %v589 = vadd.f32 %v588, %v379
  %v590 = vrot.slane %v589, 4
  %v591 = vadd.f32 %v589, %v590
  %v592 = vrot.slane %v591, 2
  %v593 = vadd.f32 %v591, %v592
  %v594 = vrot.slane %v593, 1
  %v595 = vadd.f32 %v593, %v594
  %v596 = vadd.f32 %v391, %v393
  %v597 = vadd.f32 %v596, %v396
  %v598 = vadd.f32 %v597, %v398
  %v599 = vadd.f32 %v598, %v401
  %v600 = vadd.f32 %v599, %v403
  %v601 = vadd.f32 %v600, %v406
  %v602 = vadd.f32 %v601, %v408
  %v603 = vadd.f32 %v602, %v411
  %v604 = vadd.f32 %v603, %v413
  %v605 = vadd.f32 %v604, %v416
  %v606 = vadd.f32 %v605, %v418
  %v607 = vadd.f32 %v606, %v421
  %v608 = vadd.f32 %v607, %v423
  %v609 = vadd.f32 %v608, %v426
  %v610 = vadd.f32 %v609, %v428
  %v611 = vrot.slane %v610, 4
  %v612 = vadd.f32 %v610, %v611
  %v613 = vrot.slane %v612, 2
  %v614 = vadd.f32 %v612, %v613
  %v615 = vrot.slane %v614, 1
  %v616 = vadd.f32 %v614, %v615
  %v617 = vadd.f32 %v440, %v442
  %v618 = vadd.f32 %v617, %v445
  %v619 = vadd.f32 %v618, %v447
  %v620 = vadd.f32 %v619, %v450
  %v621 = vadd.f32 %v620, %v452
  %v622 = vadd.f32 %v621, %v455
  %v623 = vadd.f32 %v622, %v457
  %v624 = vadd.f32 %v623, %v460
  %v625 = vadd.f32 %v624, %v462
  %v626 = vadd.f32 %v625, %v465
  %v627 = vadd.f32 %v626, %v467
  %v628 = vadd.f32 %v627, %v470
  %v629 = vadd.f32 %v628, %v472
  %v630 = vadd.f32 %v629, %v475
  %v631 = vadd.f32 %v630, %v477
  %v632 = vrot.slane %v631, 4
  %v633 = vadd.f32 %v631, %v632
  %v634 = vrot.slane %v633, 2
  %v635 = vadd.f32 %v633, %v634
  %v636 = vrot.slane %v635, 1
  %v637 = vadd.f32 %v635, %v636
  %v642 = vrot.slane %v595, 7
  %v643 = vrot.slane %v616, 6
  %v644 = vrot.slane %v637, 5
  %vm645 = vcmask 1040384
  %v646 = vsel %vm645, %v574, %v642
  %vm647 = vcmask 1042434
  %v648 = vsel %vm647, %v643, %v644
  %vm649 = vcmask 1041408
  %v650 = vsel %vm649, %v646, %v648
  %v652 = vadd.f32 %v553, %v650
  %v653 = vlaneseq
  %vm654 = vcmp.ge.s32.totalorder %v653, 0
  %vm655 = vcmp.lt.s32.totalorder %v653, 512
  %vm656 = vmand %vm654, %vm655
  %657 = vst.msk [vmem:[%s4] sm:$0xf] %vm656, %v652
  %v658 = vld [vmem:[%s5] sm:$0xf]
  %v659 = vmul.f32 %v293, %v293
  %v660 = vmul.f32 %v342, %v342
  %v661 = vmul.f32 %v391, %v391
  %v662 = vmul.f32 %v440, %v440
  %v663 = vmul.f32 %v295, %v295
  %v664 = vmul.f32 %v344, %v344
  %v665 = vmul.f32 %v393, %v393
  %v666 = vmul.f32 %v442, %v442
  %v667 = vmul.f32 %v298, %v298
  %v668 = vmul.f32 %v347, %v347
  %v669 = vmul.f32 %v396, %v396
  %v670 = vmul.f32 %v445, %v445
  %v671 = vmul.f32 %v300, %v300
  %v672 = vmul.f32 %v349, %v349
  %v673 = vmul.f32 %v398, %v398
  %v674 = vmul.f32 %v447, %v447
  %v675 = vmul.f32 %v303, %v303
  %v676 = vmul.f32 %v352, %v352
  %v677 = vmul.f32 %v401, %v401
  %v678 = vmul.f32 %v450, %v450
  %v679 = vmul.f32 %v305, %v305
  %v680 = vmul.f32 %v354, %v354
  %v681 = vmul.f32 %v403, %v403
  %v682 = vmul.f32 %v452, %v452
  %v683 = vmul.f32 %v308, %v308
  %v684 = vmul.f32 %v357, %v357
  %v685 = vmul.f32 %v406, %v406
  %v686 = vmul.f32 %v455, %v455
  %v687 = vmul.f32 %v310, %v310
  %v688 = vmul.f32 %v359, %v359
  %v689 = vmul.f32 %v408, %v408
  %v690 = vmul.f32 %v457, %v457
  %v691 = vmul.f32 %v313, %v313
  %v692 = vmul.f32 %v362, %v362
  %v693 = vmul.f32 %v411, %v411
  %v694 = vmul.f32 %v460, %v460
  %v695 = vmul.f32 %v315, %v315
  %v696 = vmul.f32 %v364, %v364
  %v697 = vmul.f32 %v413, %v413
  %v698 = vmul.f32 %v462, %v462
  %v699 = vmul.f32 %v318, %v318
  %v700 = vmul.f32 %v367, %v367
  %v701 = vmul.f32 %v416, %v416
  %v702 = vmul.f32 %v465, %v465
  %v703 = vmul.f32 %v320, %v320
  %v704 = vmul.f32 %v369, %v369
  %v705 = vmul.f32 %v418, %v418
  %v706 = vmul.f32 %v467, %v467
  %v707 = vmul.f32 %v323, %v323
  %v708 = vmul.f32 %v372, %v372
  %v709 = vmul.f32 %v421, %v421
  %v710 = vmul.f32 %v470, %v470
  %v711 = vmul.f32 %v325, %v325
  %v712 = vmul.f32 %v374, %v374
  %v713 = vmul.f32 %v423, %v423
  %v714 = vmul.f32 %v472, %v472
  %v715 = vmul.f32 %v328, %v328
  %v716 = vmul.f32 %v377, %v377
  %v717 = vmul.f32 %v426, %v426
  %v718 = vmul.f32 %v475, %v475
  %v719 = vmul.f32 %v330, %v330
  %v720 = vmul.f32 %v379, %v379
  %v721 = vmul.f32 %v428, %v428
  %v722 = vmul.f32 %v477, %v477
  %v723 = vadd.f32 %v659, %v663
  %v724 = vadd.f32 %v723, %v667
  %v725 = vadd.f32 %v724, %v671
  %v726 = vadd.f32 %v725, %v675
  %v727 = vadd.f32 %v726, %v679
  %v728 = vadd.f32 %v727, %v683
  %v729 = vadd.f32 %v728, %v687
  %v730 = vadd.f32 %v729, %v691
  %v731 = vadd.f32 %v730, %v695
  %v732 = vadd.f32 %v731, %v699
  %v733 = vadd.f32 %v732, %v703
  %v734 = vadd.f32 %v733, %v707
  %v735 = vadd.f32 %v734, %v711
  %v736 = vadd.f32 %v735, %v715
  %v737 = vadd.f32 %v736, %v719
  %v738 = vrot.slane %v737, 4
  %v739 = vadd.f32 %v737, %v738
  %v740 = vrot.slane %v739, 2
  %v741 = vadd.f32 %v739, %v740
  %v742 = vrot.slane %v741, 1
  %v743 = vadd.f32 %v741, %v742
  %v744 = vadd.f32 %v660, %v664
  %v745 = vadd.f32 %v744, %v668
  %v746 = vadd.f32 %v745, %v672
  %v747 = vadd.f32 %v746, %v676
  %v748 = vadd.f32 %v747, %v680
  %v749 = vadd.f32 %v748, %v684
  %v750 = vadd.f32 %v749, %v688
  %v751 = vadd.f32 %v750, %v692
  %v752 = vadd.f32 %v751, %v696
  %v753 = vadd.f32 %v752, %v700
  %v754 = vadd.f32 %v753, %v704
  %v755 = vadd.f32 %v754, %v708
  %v756 = vadd.f32 %v755, %v712
  %v757 = vadd.f32 %v756, %v716
  %v758 = vadd.f32 %v757, %v720
  %v759 = vrot.slane %v758, 4
  %v760 = vadd.f32 %v758, %v759
  %v761 = vrot.slane %v760, 2
  %v762 = vadd.f32 %v760, %v761
  %v763 = vrot.slane %v762, 1
  %v764 = vadd.f32 %v762, %v763
  %v765 = vadd.f32 %v661, %v665
  %v766 = vadd.f32 %v765, %v669
  %v767 = vadd.f32 %v766, %v673
  %v768 = vadd.f32 %v767, %v677
  %v769 = vadd.f32 %v768, %v681
  %v770 = vadd.f32 %v769, %v685
  %v771 = vadd.f32 %v770, %v689
  %v772 = vadd.f32 %v771, %v693
  %v773 = vadd.f32 %v772, %v697
  %v774 = vadd.f32 %v773, %v701
  %v775 = vadd.f32 %v774, %v705
  %v776 = vadd.f32 %v775, %v709
  %v777 = vadd.f32 %v776, %v713
  %v778 = vadd.f32 %v777, %v717
  %v779 = vadd.f32 %v778, %v721
  %v780 = vrot.slane %v779, 4
  %v781 = vadd.f32 %v779, %v780
  %v782 = vrot.slane %v781, 2
  %v783 = vadd.f32 %v781, %v782
  %v784 = vrot.slane %v783, 1
  %v785 = vadd.f32 %v783, %v784
  %v786 = vadd.f32 %v662, %v666
  %v787 = vadd.f32 %v786, %v670
  %v788 = vadd.f32 %v787, %v674
  %v789 = vadd.f32 %v788, %v678
  %v790 = vadd.f32 %v789, %v682
  %v791 = vadd.f32 %v790, %v686
  %v792 = vadd.f32 %v791, %v690
  %v793 = vadd.f32 %v792, %v694
  %v794 = vadd.f32 %v793, %v698
  %v795 = vadd.f32 %v794, %v702
  %v796 = vadd.f32 %v795, %v706
  %v797 = vadd.f32 %v796, %v710
  %v798 = vadd.f32 %v797, %v714
  %v799 = vadd.f32 %v798, %v718
  %v800 = vadd.f32 %v799, %v722
  %v801 = vrot.slane %v800, 4
  %v802 = vadd.f32 %v800, %v801
  %v803 = vrot.slane %v802, 2
  %v804 = vadd.f32 %v802, %v803
  %v805 = vrot.slane %v804, 1
  %v806 = vadd.f32 %v804, %v805
  %v811 = vrot.slane %v764, 7
  %v812 = vrot.slane %v785, 6
  %v813 = vrot.slane %v806, 5
  %v814 = vsel %vm645, %v743, %v811
  %v815 = vsel %vm647, %v812, %v813
  %v816 = vsel %vm649, %v814, %v815
  %v818 = vadd.f32 %v658, %v816
  %819 = vst.msk [vmem:[%s5] sm:$0xf] %vm656, %v818
  // Predicated region
  $region18: #{vae_forward.19} parent=0 // pred_check
    _
  $region19: #{vae_forward.19} parent=0 // pred_check_branch
    %821 = sbr.rel (0) target = $region21
  $region20: #{vae_forward.19} parent=0 // pred_region
    _
  $region21: #{vae_forward.19} parent=0 // pred_fallthru
    _
  // Predicated region
  $region22: #{vae_forward.19} parent=0 // pred_check
    _
  $region23: #{vae_forward.19} parent=0 // pred_check_branch
    %823 = sbr.rel (0) target = $region25
  $region24: #{vae_forward.19} parent=0 // pred_region
    _
  $region25: #{vae_forward.19} parent=0 // pred_fallthru
    _
  // Predicated region
  $region26: #{vae_forward.19} parent=0 // pred_check
    _
  $region27: #{vae_forward.19} parent=0 // pred_check_branch
    %825 = sbr.rel (0) target = $region29
  $region28: #{vae_forward.19} parent=0 // pred_region
    _
  $region29: #{vae_forward.19} parent=0 // pred_fallthru
    _
  // Predicated region
  $region30: #{vae_forward.19} parent=0 // pred_check
    _
  $region31: #{vae_forward.19} parent=0 // pred_check_branch
    %827 = sbr.rel (0) target = $region33
  $region32: #{vae_forward.19} parent=0 // pred_region
    _
  $region33: #{vae_forward.19} parent=0 // pred_fallthru
    _
  // Predicated region
  $region34: #{vae_forward.19} parent=0 // pred_check
    _
  $region35: #{vae_forward.19} parent=0 // pred_check_branch
    %829 = sbr.rel (0) target = $region37
  $region36: #{vae_forward.19} parent=0 // pred_region
    _
  $region37: #{vae_forward.19} parent=0 // pred_fallthru
    _
  // Predicated region
  $region38: #{vae_forward.19} parent=0 // pred_check
    _
  $region39: #{vae_forward.19} parent=0 // pred_check_branch
    %831 = sbr.rel (0) target = $region41
  $region40: #{vae_forward.19} parent=0 // pred_region
    _
  $region41: #{vae_forward.19} parent=0 // pred_fallthru
    _

// kernel: vae_forward.21
$region0: #{vae_forward.21}
  #allocation0 [shape = 'u32[]', space=smem, size = 0x4, offset = 0x4, fixed_abs, tag = 'smem constant byte address 0x4 - core index']
  #allocation1 [shape = 'u32[72,128]{1,0:T(1,128)}', space=vmem, size = 0x9000, scoped, tag = 'internal scratch']
  %s0 = inlined_call_operand.vmem [shape: bf16[512,384], index: 0, kind: input, shape index: {}]
  %s1 = inlined_call_operand.vmem [shape: bf16[384,128], index: 1, kind: input, shape index: {}]
  %s2 = inlined_call_operand.vmem [shape: f32[1,128], index: 2, kind: input, shape index: {}]
  %s3 = inlined_call_operand.vmem [shape: f32[512,128], index: 3, kind: output, shape index: {}]
  %s4 = sld [smem:[#allocation0]]
  $region45: #{vae_forward.21} parent=0
    _
  %s6 = ssub.s32 1, %s4
  %s7 = scalar_select 0, %s6, %s4
  loop: start=0, step=1, limit=4
  $region2: #{vae_forward.21} parent=0 // loop_pre_header
    _
  $region3: #{vae_forward.21} parent=0 // loop_header
    %s9 = sphi 0, %s13
    %p10 = scmp.ge.s32.totalorder %s9, 4
    %s19 = sphi 0, %s21
    %s22 = sphi 0, %s19
    %s23 = sphi 0, %s22
    %s39 = sphi 0, %s23
    %s43 = sphi 0, %s43
    %s45 = sphi 0, %s43
    %s46 = sphi 0, %s45
    %s60 = sphi 0, %s46
    %s64 = sphi 0, %s64
    %s66 = sphi 0, %s64
    %s67 = sphi 0, %s66
    %s81 = sphi 0, %s67
    %s87 = sphi 0, %s89
    %s90 = sphi 0, %s87
    %s91 = sphi 0, %s90
    %s107 = sphi 0, %s91
  $region4: #{vae_forward.21} parent=0 // loop_header_branch
    %12 = sbr.rel (%p10) target = $region8
  $region5: #{vae_forward.21} parent=0 // loop_body
    %s14 = ssub.s32 %s9, 1
    %s15 = ssub.s32 %s9, 2
    %s16 = sadd.s32 %s9, 1
    %s17 = ssub.s32 %s9, %s16
    %p18 = scmp.eq.s32.totalorder %s17, 0
    %s20 = sadd.s32 %s19, 1
    %s21 = scalar_select %p18, %s19, %s20
    %p24 = pneg %p18
    %p25 = scmp.eq.s32.totalorder %s9, 1
    %p26 = por %p24, %p25
    %p27 = scmp.ne.s32.totalorder %s19, %s22
    %p28 = scmp.eq.s32.totalorder %s9, 0
    %p29 = por %p27, %p28
    %p30 = scmp.ne.s32.totalorder %s19, %s22
    %p31 = scmp.eq.s32.totalorder %s14, 1
    %p32 = por %p30, %p31
    %p33 = scmp.ne.s32.totalorder %s22, %s23
    %p34 = scmp.eq.s32.totalorder %s14, 0
    %p35 = por %p33, %p34
    %p36 = scmp.ne.s32.totalorder %s22, %s23
    %p37 = scmp.eq.s32.totalorder %s15, 1
    %p38 = por %p36, %p37
    %p40 = scmp.ne.s32.totalorder %s23, %s39
    %p41 = scmp.eq.s32.totalorder %s15, 0
    %p42 = por %p40, %p41
    %s44 = sadd.s32 %s43, 1
    %p47 = scmp.eq.s32.totalorder %s9, 1
    %p48 = scmp.ne.s32.totalorder %s43, %s45
    %p49 = scmp.eq.s32.totalorder %s9, 0
    %p50 = por %p48, %p49
    %p51 = scmp.ne.s32.totalorder %s43, %s45
    %p52 = scmp.eq.s32.totalorder %s14, 1
    %p53 = por %p51, %p52
    %p54 = scmp.ne.s32.totalorder %s45, %s46
    %p55 = scmp.eq.s32.totalorder %s14, 0
    %p56 = por %p54, %p55
    %p57 = scmp.ne.s32.totalorder %s45, %s46
    %p58 = scmp.eq.s32.totalorder %s15, 1
    %p59 = por %p57, %p58
    %p61 = scmp.ne.s32.totalorder %s46, %s60
    %p62 = scmp.eq.s32.totalorder %s15, 0
    %p63 = por %p61, %p62
    %s65 = sadd.s32 %s64, 1
    %p68 = scmp.eq.s32.totalorder %s9, 1
    %p69 = scmp.ne.s32.totalorder %s64, %s66
    %p70 = scmp.eq.s32.totalorder %s9, 0
    %p71 = por %p69, %p70
    %p72 = scmp.ne.s32.totalorder %s64, %s66
    %p73 = scmp.eq.s32.totalorder %s14, 1
    %p74 = por %p72, %p73
    %p75 = scmp.ne.s32.totalorder %s66, %s67
    %p76 = scmp.eq.s32.totalorder %s14, 0
    %p77 = por %p75, %p76
    %p78 = scmp.ne.s32.totalorder %s66, %s67
    %p79 = scmp.eq.s32.totalorder %s15, 1
    %p80 = por %p78, %p79
    %p82 = scmp.ne.s32.totalorder %s67, %s81
    %p83 = scmp.eq.s32.totalorder %s15, 0
    %p84 = por %p82, %p83
    %s85 = ssub.s32 %s9, %s16
    %p86 = scmp.eq.s32.totalorder %s85, 0
    %s88 = sadd.s32 %s87, 1
    %s89 = scalar_select %p86, %s87, %s88
    %p92 = pneg %p86
    %p93 = scmp.eq.s32.totalorder %s9, 1
    %p94 = por %p92, %p93
    %p95 = scmp.ne.s32.totalorder %s87, %s90
    %p96 = scmp.eq.s32.totalorder %s9, 0
    %p97 = por %p95, %p96
    %p98 = scmp.ne.s32.totalorder %s87, %s90
    %p99 = scmp.eq.s32.totalorder %s14, 1
    %p100 = por %p98, %p99
    %p101 = scmp.ne.s32.totalorder %s90, %s91
    %p102 = scmp.eq.s32.totalorder %s14, 0
    %p103 = por %p101, %p102
    %p104 = scmp.ne.s32.totalorder %s90, %s91
    %p105 = scmp.eq.s32.totalorder %s15, 1
    %p106 = por %p104, %p105
    %p108 = scmp.ne.s32.totalorder %s91, %s107
    %p109 = scmp.eq.s32.totalorder %s15, 0
    %p110 = por %p108, %p109
    %p111 = scmp.le.s32.totalorder 1, %s9
    %p112 = scmp.lt.s32.totalorder %s9, 3
    %p113 = pnand %p111, %p112
    %p114 = pneg %p113
    // Predicated region
    $region9: #{vae_forward.21} parent=5 // pred_check
      _
    $region10: #{vae_forward.21} parent=5 // pred_check_branch
      %116 = sbr.rel (%p113) target = $region12
    $region11: #{vae_forward.21} parent=5 // pred_region
      %s117 = ssub.s32 %s9, 1
      // Predicated region
      $region13: #{vae_forward.21} parent=11 // pred_check
        %p118 = pneg %p56
      $region14: #{vae_forward.21} parent=11 // pred_check_branch
        %120 = sbr.rel (%p118) target = $region16
      $region15: #{vae_forward.21} parent=11 // pred_region
        _
      $region16: #{vae_forward.21} parent=11 // pred_fallthru
        _
      // Predicated region
      $region17: #{vae_forward.21} parent=11 // pred_check
        %p121 = pneg %p77
      $region18: #{vae_forward.21} parent=11 // pred_check_branch
        %123 = sbr.rel (%p121) target = $region20
      $region19: #{vae_forward.21} parent=11 // pred_region
        _
      $region20: #{vae_forward.21} parent=11 // pred_fallthru
        _
    $region12: #{vae_forward.21} parent=5 // pred_fallthru
      _
    %p124 = scmp.lt.s32.totalorder %s9, 2
    // Predicated region
    $region21: #{vae_forward.21} parent=5 // pred_check
      %p125 = pneg %p124
    $region22: #{vae_forward.21} parent=5 // pred_check_branch
      %127 = sbr.rel (%p125) target = $region24
    $region23: #{vae_forward.21} parent=5 // pred_region
      // Predicated region
      $region25: #{vae_forward.21} parent=23 // pred_check
        %p128 = pneg %p29
      $region26: #{vae_forward.21} parent=23 // pred_check_branch
        %130 = sbr.rel (%p128) target = $region28
      $region27: #{vae_forward.21} parent=23 // pred_region
        %s131 = smul.u32 32, %s9
        %p132 = scmp.lt.s32.totalorder %s131, 63
        %s133 = scalar_select %p132, %s131, 63
        %s134 = smul.addr %s133, 3
        %s135 = smul.addr %s134, 4
        %s136 = scalar_lea.vmem %s0, %s135
        %s137 = smul.u32 32, %s9
      $region28: #{vae_forward.21} parent=23 // pred_fallthru
        _
    $region24: #{vae_forward.21} parent=5 // pred_fallthru
      _
    %p138 = scmp.le.s32.totalorder 1, %s9
    %p139 = scmp.lt.s32.totalorder %s9, 3
    %p140 = pnand %p138, %p139
    %p141 = pneg %p140
    // Predicated region
    $region29: #{vae_forward.21} parent=5 // pred_check
      _
    $region30: #{vae_forward.21} parent=5 // pred_check_branch
      %143 = sbr.rel (%p140) target = $region32
    $region31: #{vae_forward.21} parent=5 // pred_region
      %s144 = ssub.s32 %s9, 1
      %s145 = smul.u32 32, %s14
      %p146 = scmp.lt.s32.totalorder %s145, 63
      %s147 = scalar_select %p146, %s145, 63
      %s148 = smul.addr %s147, 3
      %s149 = smul.addr %s148, 4
      %s150 = scalar_lea.vmem %s0, %s149
      %p151 = pneg %p35
      %p152 = pneg %p32
      %p153 = pneg %p56
      %p154 = pneg %p53
      %p155 = pneg %p77
      %p156 = pneg %p74
      %p157 = pneg %p103
      %p158 = pneg %p100
      %s159 = smul.u32 32, %s14
      %p160 = scmp.lt.s32.totalorder %s159, 63
      %s161 = scalar_select %p160, %s159, 63
      %s162 = smul.addr %s161, 8
      %s163 = scalar_lea.vmem %s3, %s162
      %s164 = smul.u32 32, %s14
      %p165 = scmp.lt.s32.totalorder %s164, 63
      %s166 = scalar_select %p165, %s164, 63
      %s167 = smul.addr %s166, 3
      %s168 = smul.addr %s167, 4
      %s169 = scalar_lea.vmem %s0, %s168
      %s170 = smul.u32 32, %s14
      %s171 = smul.u32 32, %s14
      %p172 = scmp.lt.s32.totalorder %s171, 63
      %s173 = scalar_select %p172, %s171, 63
      %s174 = smul.addr %s173, 8
      %s175 = scalar_lea.vmem %s3, %s174
      %s176 = smul.u32 32, %s14
      %v177 = vld [vmem:[%s169] sm:$0xff]
      %v178 = vld [vmem:[%s169 + $0x8] sm:$0xf]
      %v179 = vld [vmem:[%s169 + $0xc] sm:$0xff]
      %v180 = vld [vmem:[%s169 + $0x14] sm:$0xf]
      %v181 = vld [vmem:[%s169 + $0x18] sm:$0xff]
      %v182 = vld [vmem:[%s169 + $0x20] sm:$0xf]
      %v183 = vld [vmem:[%s169 + $0x24] sm:$0xff]
      %v184 = vld [vmem:[%s169 + $0x2c] sm:$0xf]
      %v185 = vld [vmem:[%s169 + $0x30] sm:$0xff]
      %v186 = vld [vmem:[%s169 + $0x38] sm:$0xf]
      %v187 = vld [vmem:[%s169 + $0x3c] sm:$0xff]
      %v188 = vld [vmem:[%s169 + $0x44] sm:$0xf]
      %v189 = vld [vmem:[%s169 + $0x48] sm:$0xff]
      %v190 = vld [vmem:[%s169 + $0x50] sm:$0xf]
      %v191 = vld [vmem:[%s169 + $0x54] sm:$0xff]
      %v192 = vld [vmem:[%s169 + $0x5c] sm:$0xf]
      %v193 = vld [vmem:[%s169 + $0x60] sm:$0xff]
      %v194 = vld [vmem:[%s169 + $0x68] sm:$0xf]
      %v195 = vld [vmem:[%s169 + $0x6c] sm:$0xff]
      %v196 = vld [vmem:[%s169 + $0x74] sm:$0xf]
      %v197 = vld [vmem:[%s169 + $0x78] sm:$0xff]
      %v198 = vld [vmem:[%s169 + $0x80] sm:$0xf]
      %v199 = vld [vmem:[%s169 + $0x84] sm:$0xff]
      %v200 = vld [vmem:[%s169 + $0x8c] sm:$0xf]
      %v201 = vld [vmem:[%s169 + $0x90] sm:$0xff]
      %v202 = vld [vmem:[%s169 + $0x98] sm:$0xf]
      %v203 = vld [vmem:[%s169 + $0x9c] sm:$0xff]
      %v204 = vld [vmem:[%s169 + $0xa4] sm:$0xf]
      %v205 = vld [vmem:[%s169 + $0xa8] sm:$0xff]
      %v206 = vld [vmem:[%s169 + $0xb0] sm:$0xf]
      %v207 = vld [vmem:[%s169 + $0xb4] sm:$0xff]
      %v208 = vld [vmem:[%s169 + $0xbc] sm:$0xf]
      %v209 = vld [vmem:[%s169 + $0xc0] sm:$0xff]
      %v210 = vld [vmem:[%s169 + $0xc8] sm:$0xf]
      %v211 = vld [vmem:[%s169 + $0xcc] sm:$0xff]
      %v212 = vld [vmem:[%s169 + $0xd4] sm:$0xf]
      %v213 = vld [vmem:[%s169 + $0xd8] sm:$0xff]
      %v214 = vld [vmem:[%s169 + $0xe0] sm:$0xf]
      %v215 = vld [vmem:[%s169 + $0xe4] sm:$0xff]
      %v216 = vld [vmem:[%s169 + $0xec] sm:$0xf]
      %v217 = vld [vmem:[%s169 + $0xf0] sm:$0xff]
      %v218 = vld [vmem:[%s169 + $0xf8] sm:$0xf]
      %v219 = vld [vmem:[%s169 + $0xfc] sm:$0xff]
      %v220 = vld [vmem:[%s169 + $0x104] sm:$0xf]
      %v221 = vld [vmem:[%s169 + $0x108] sm:$0xff]
      %v222 = vld [vmem:[%s169 + $0x110] sm:$0xf]
      %v223 = vld [vmem:[%s169 + $0x114] sm:$0xff]
      %v224 = vld [vmem:[%s169 + $0x11c] sm:$0xf]
      %v225 = vld [vmem:[%s169 + $0x120] sm:$0xff]
      %v226 = vld [vmem:[%s169 + $0x128] sm:$0xf]
      %v227 = vld [vmem:[%s169 + $0x12c] sm:$0xff]
      %v228 = vld [vmem:[%s169 + $0x134] sm:$0xf]
      %v229 = vld [vmem:[%s169 + $0x138] sm:$0xff]
      %v230 = vld [vmem:[%s169 + $0x140] sm:$0xf]
      %v231 = vld [vmem:[%s169 + $0x144] sm:$0xff]
      %v232 = vld [vmem:[%s169 + $0x14c] sm:$0xf]
      %v233 = vld [vmem:[%s169 + $0x150] sm:$0xff]
      %v234 = vld [vmem:[%s169 + $0x158] sm:$0xf]
      %v235 = vld [vmem:[%s169 + $0x15c] sm:$0xff]
      %v236 = vld [vmem:[%s169 + $0x164] sm:$0xf]
      %v237 = vld [vmem:[%s169 + $0x168] sm:$0xff]
      %v238 = vld [vmem:[%s169 + $0x170] sm:$0xf]
      %v239 = vld [vmem:[%s169 + $0x174] sm:$0xff]
      %v240 = vld [vmem:[%s169 + $0x17c] sm:$0xf]
      %v241 = vld [vmem:[%s1] sm:$0xf]
      %v242 = vld [vmem:[%s1 + $0x4] sm:$0xf]
      %v243 = vld [vmem:[%s1 + $0x8] sm:$0xf]
      %v244 = vld [vmem:[%s1 + $0xc] sm:$0xf]
      %v245 = vld [vmem:[%s1 + $0x10] sm:$0xf]
      %v246 = vld [vmem:[%s1 + $0x14] sm:$0xf]
      %v247 = vld [vmem:[%s1 + $0x18] sm:$0xf]
      %v248 = vld [vmem:[%s1 + $0x1c] sm:$0xf]
      %v249 = vld [vmem:[%s1 + $0x20] sm:$0xf]
      %v250 = vld [vmem:[%s1 + $0x24] sm:$0xf]
      %v251 = vld [vmem:[%s1 + $0x28] sm:$0xf]
      %v252 = vld [vmem:[%s1 + $0x2c] sm:$0xf]
      %v253 = vld [vmem:[%s1 + $0x30] sm:$0xf]
      %v254 = vld [vmem:[%s1 + $0x34] sm:$0xf]
      %v255 = vld [vmem:[%s1 + $0x38] sm:$0xf]
      %v256 = vld [vmem:[%s1 + $0x3c] sm:$0xf]
      %v257 = vld [vmem:[%s1 + $0x40] sm:$0xf]
      %v258 = vld [vmem:[%s1 + $0x44] sm:$0xf]
      %v259 = vld [vmem:[%s1 + $0x48] sm:$0xf]
      %v260 = vld [vmem:[%s1 + $0x4c] sm:$0xf]
      %v261 = vld [vmem:[%s1 + $0x50] sm:$0xf]
      %v262 = vld [vmem:[%s1 + $0x54] sm:$0xf]
      %v263 = vld [vmem:[%s1 + $0x58] sm:$0xf]
      %v264 = vld [vmem:[%s1 + $0x5c] sm:$0xf]
      %v265 = vld [vmem:[%s1 + $0x60] sm:$0xf]
      %v266 = vld [vmem:[%s1 + $0x64] sm:$0xf]
      %v267 = vld [vmem:[%s1 + $0x68] sm:$0xf]
      %v268 = vld [vmem:[%s1 + $0x6c] sm:$0xf]
      %v269 = vld [vmem:[%s1 + $0x70] sm:$0xf]
      %v270 = vld [vmem:[%s1 + $0x74] sm:$0xf]
      %v271 = vld [vmem:[%s1 + $0x78] sm:$0xf]
      %v272 = vld [vmem:[%s1 + $0x7c] sm:$0xf]
      %v273 = vld [vmem:[%s1 + $0x80] sm:$0xf]
      %v274 = vld [vmem:[%s1 + $0x84] sm:$0xf]
      %v275 = vld [vmem:[%s1 + $0x88] sm:$0xf]
      %v276 = vld [vmem:[%s1 + $0x8c] sm:$0xf]
      %v277 = vld [vmem:[%s1 + $0x90] sm:$0xf]
      %v278 = vld [vmem:[%s1 + $0x94] sm:$0xf]
      %v279 = vld [vmem:[%s1 + $0x98] sm:$0xf]
      %v280 = vld [vmem:[%s1 + $0x9c] sm:$0xf]
      %v281 = vld [vmem:[%s1 + $0xa0] sm:$0xf]
      %v282 = vld [vmem:[%s1 + $0xa4] sm:$0xf]
      %v283 = vld [vmem:[%s1 + $0xa8] sm:$0xf]
      %v284 = vld [vmem:[%s1 + $0xac] sm:$0xf]
      %v285 = vld [vmem:[%s1 + $0xb0] sm:$0xf]
      %v286 = vld [vmem:[%s1 + $0xb4] sm:$0xf]
      %v287 = vld [vmem:[%s1 + $0xb8] sm:$0xf]
      %v288 = vld [vmem:[%s1 + $0xbc] sm:$0xf]
      %v289 = vld [vmem:[%s2] sm:$0x1]
      %v291 = vperm.slane %v289, 0
      %v357 = vunpack.c.l.b16 %v177
      %v358 = vunpack.c.h.b16 %v177
      %v359 = vunpack.c.l.b16 %v178
      %v360 = vunpack.c.l.b16 %v179
      %v361 = vunpack.c.h.b16 %v179
      %v362 = vunpack.c.l.b16 %v180
      %v363 = vunpack.c.l.b16 %v181
      %v364 = vunpack.c.h.b16 %v181
      %v365 = vunpack.c.l.b16 %v182
      %v366 = vunpack.c.l.b16 %v183
      %v367 = vunpack.c.h.b16 %v183
      %v368 = vunpack.c.l.b16 %v184
      %v369 = vunpack.c.l.b16 %v185
      %v370 = vunpack.c.h.b16 %v185
      %v371 = vunpack.c.l.b16 %v186
      %v372 = vunpack.c.l.b16 %v187
      %v373 = vunpack.c.h.b16 %v187
      %v374 = vunpack.c.l.b16 %v188
      %v375 = vunpack.c.l.b16 %v189
      %v376 = vunpack.c.h.b16 %v189
      %v377 = vunpack.c.l.b16 %v190
      %v378 = vunpack.c.l.b16 %v191
      %v379 = vunpack.c.h.b16 %v191
      %v380 = vunpack.c.l.b16 %v192
      %v381 = vunpack.c.l.b16 %v193
      %v382 = vunpack.c.h.b16 %v193
      %v383 = vunpack.c.l.b16 %v194
      %v384 = vunpack.c.l.b16 %v195
      %v385 = vunpack.c.h.b16 %v195
      %v386 = vunpack.c.l.b16 %v196
      %v387 = vunpack.c.l.b16 %v197
      %v388 = vunpack.c.h.b16 %v197
      %v389 = vunpack.c.l.b16 %v198
      %v390 = vunpack.c.l.b16 %v199
      %v391 = vunpack.c.h.b16 %v199
      %v392 = vunpack.c.l.b16 %v200
      %v393 = vunpack.c.l.b16 %v201
      %v394 = vunpack.c.h.b16 %v201
      %v395 = vunpack.c.l.b16 %v202
      %v396 = vunpack.c.l.b16 %v203
      %v397 = vunpack.c.h.b16 %v203
      %v398 = vunpack.c.l.b16 %v204
      %v399 = vunpack.c.l.b16 %v205
      %v400 = vunpack.c.h.b16 %v205
      %v401 = vunpack.c.l.b16 %v206
      %v402 = vunpack.c.l.b16 %v207
      %v403 = vunpack.c.h.b16 %v207
      %v404 = vunpack.c.l.b16 %v208
      %v405 = vunpack.c.l.b16 %v209
      %v406 = vunpack.c.h.b16 %v209
      %v407 = vunpack.c.l.b16 %v210
      %v408 = vunpack.c.l.b16 %v211
      %v409 = vunpack.c.h.b16 %v211
      %v410 = vunpack.c.l.b16 %v212
      %v411 = vunpack.c.l.b16 %v213
      %v412 = vunpack.c.h.b16 %v213
      %v413 = vunpack.c.l.b16 %v214
      %v414 = vunpack.c.l.b16 %v215
      %v415 = vunpack.c.h.b16 %v215
      %v416 = vunpack.c.l.b16 %v216
      %v417 = vunpack.c.l.b16 %v217
      %v418 = vunpack.c.h.b16 %v217
      %v419 = vunpack.c.l.b16 %v218
      %v420 = vunpack.c.l.b16 %v219
      %v421 = vunpack.c.h.b16 %v219
      %v422 = vunpack.c.l.b16 %v220
      %v423 = vunpack.c.l.b16 %v221
      %v424 = vunpack.c.h.b16 %v221
      %v425 = vunpack.c.l.b16 %v222
      %v426 = vunpack.c.l.b16 %v223
      %v427 = vunpack.c.h.b16 %v223
      %v428 = vunpack.c.l.b16 %v224
      %v429 = vunpack.c.l.b16 %v225
      %v430 = vunpack.c.h.b16 %v225
      %v431 = vunpack.c.l.b16 %v226
      %v432 = vunpack.c.l.b16 %v227
      %v433 = vunpack.c.h.b16 %v227
      %v434 = vunpack.c.l.b16 %v228
      %v435 = vunpack.c.l.b16 %v229
      %v436 = vunpack.c.h.b16 %v229
      %v437 = vunpack.c.l.b16 %v230
      %v438 = vunpack.c.l.b16 %v231
      %v439 = vunpack.c.h.b16 %v231
      %v440 = vunpack.c.l.b16 %v232
      %v441 = vunpack.c.l.b16 %v233
      %v442 = vunpack.c.h.b16 %v233
      %v443 = vunpack.c.l.b16 %v234
      %v444 = vunpack.c.l.b16 %v235
      %v445 = vunpack.c.h.b16 %v235
      %v446 = vunpack.c.l.b16 %v236
      %v447 = vunpack.c.l.b16 %v237
      %v448 = vunpack.c.h.b16 %v237
      %v449 = vunpack.c.l.b16 %v238
      %v450 = vunpack.c.l.b16 %v239
      %v451 = vunpack.c.h.b16 %v239
      %v452 = vunpack.c.l.b16 %v240
      %v453 = vpack.c.b16 %v360, %v357
      %v454 = vpack.c.b16 %v361, %v358
      %v455 = vpack.c.b16 %v362, %v359
      %v456 = vpack.c.b16 %v366, %v363
      %v457 = vpack.c.b16 %v367, %v364
      %v458 = vpack.c.b16 %v368, %v365
      %v459 = vpack.c.b16 %v372, %v369
      %v460 = vpack.c.b16 %v373, %v370
      %v461 = vpack.c.b16 %v374, %v371
      %v462 = vpack.c.b16 %v378, %v375
      %v463 = vpack.c.b16 %v379, %v376
      %v464 = vpack.c.b16 %v380, %v377
      %v465 = vpack.c.b16 %v384, %v381
      %v466 = vpack.c.b16 %v385, %v382
      %v467 = vpack.c.b16 %v386, %v383
      %v468 = vpack.c.b16 %v390, %v387
      %v469 = vpack.c.b16 %v391, %v388
      %v470 = vpack.c.b16 %v392, %v389
      %v471 = vpack.c.b16 %v396, %v393
      %v472 = vpack.c.b16 %v397, %v394
      %v473 = vpack.c.b16 %v398, %v395
      %v474 = vpack.c.b16 %v402, %v399
      %v475 = vpack.c.b16 %v403, %v400
      %v476 = vpack.c.b16 %v404, %v401
      %v477 = vpack.c.b16 %v408, %v405
      %v478 = vpack.c.b16 %v409, %v406
      %v479 = vpack.c.b16 %v410, %v407
      %v480 = vpack.c.b16 %v414, %v411
      %v481 = vpack.c.b16 %v415, %v412
      %v482 = vpack.c.b16 %v416, %v413
      %v483 = vpack.c.b16 %v420, %v417
      %v484 = vpack.c.b16 %v421, %v418
      %v485 = vpack.c.b16 %v422, %v419
      %v486 = vpack.c.b16 %v426, %v423
      %v487 = vpack.c.b16 %v427, %v424
      %v488 = vpack.c.b16 %v428, %v425
      %v489 = vpack.c.b16 %v432, %v429
      %v490 = vpack.c.b16 %v433, %v430
      %v491 = vpack.c.b16 %v434, %v431
      %v492 = vpack.c.b16 %v438, %v435
      %v493 = vpack.c.b16 %v439, %v436
      %v494 = vpack.c.b16 %v440, %v437
      %v495 = vpack.c.b16 %v444, %v441
      %v496 = vpack.c.b16 %v445, %v442
      %v497 = vpack.c.b16 %v446, %v443
      %v498 = vpack.c.b16 %v450, %v447
      %v499 = vpack.c.b16 %v451, %v448
      %v500 = vpack.c.b16 %v452, %v449
      %v597 = vunpack.c.l.b16 %v241
      %v598 = vunpack.c.l.b16 %v242
      %v599 = vunpack.c.l.b16 %v243
      %v600 = vunpack.c.l.b16 %v244
      %v601 = vunpack.c.l.b16 %v245
      %v602 = vunpack.c.l.b16 %v246
      %v603 = vunpack.c.l.b16 %v247
      %v604 = vunpack.c.l.b16 %v248
      %v605 = vunpack.c.l.b16 %v249
      %v606 = vunpack.c.l.b16 %v250
      %v607 = vunpack.c.l.b16 %v251
      %v608 = vunpack.c.l.b16 %v252
      %v609 = vunpack.c.l.b16 %v253
      %v610 = vunpack.c.l.b16 %v254
      %v611 = vunpack.c.l.b16 %v255
      %v612 = vunpack.c.l.b16 %v256
      %v613 = vunpack.c.l.b16 %v257
      %v614 = vunpack.c.l.b16 %v258
      %v615 = vunpack.c.l.b16 %v259
      %v616 = vunpack.c.l.b16 %v260
      %v617 = vunpack.c.l.b16 %v261
      %v618 = vunpack.c.l.b16 %v262
      %v619 = vunpack.c.l.b16 %v263
      %v620 = vunpack.c.l.b16 %v264
      %v621 = vunpack.c.l.b16 %v265
      %v622 = vunpack.c.l.b16 %v266
      %v623 = vunpack.c.l.b16 %v267
      %v624 = vunpack.c.l.b16 %v268
      %v625 = vunpack.c.l.b16 %v269
      %v626 = vunpack.c.l.b16 %v270
      %v627 = vunpack.c.l.b16 %v271
      %v628 = vunpack.c.l.b16 %v272
      %v629 = vunpack.c.l.b16 %v273
      %v630 = vunpack.c.l.b16 %v274
      %v631 = vunpack.c.l.b16 %v275
      %v632 = vunpack.c.l.b16 %v276
      %v633 = vunpack.c.l.b16 %v277
      %v634 = vunpack.c.l.b16 %v278
      %v635 = vunpack.c.l.b16 %v279
      %v636 = vunpack.c.l.b16 %v280
      %v637 = vunpack.c.l.b16 %v281
      %v638 = vunpack.c.l.b16 %v282
      %v639 = vunpack.c.l.b16 %v283
      %v640 = vunpack.c.l.b16 %v284
      %v641 = vunpack.c.l.b16 %v285
      %v642 = vunpack.c.l.b16 %v286
      %v643 = vunpack.c.l.b16 %v287
      %v644 = vunpack.c.l.b16 %v288
      %v645 = vpack.c.b16 %v598, %v597
      %v646 = vpack.c.b16 %v600, %v599
      %v647 = vpack.c.b16 %v602, %v601
      %v648 = vpack.c.b16 %v604, %v603
      %v649 = vpack.c.b16 %v606, %v605
      %v650 = vpack.c.b16 %v608, %v607
      %v651 = vpack.c.b16 %v610, %v609
      %v652 = vpack.c.b16 %v612, %v611
      %v653 = vpack.c.b16 %v614, %v613
      %v654 = vpack.c.b16 %v616, %v615
      %v655 = vpack.c.b16 %v618, %v617
      %v656 = vpack.c.b16 %v620, %v619
      %v657 = vpack.c.b16 %v622, %v621
      %v658 = vpack.c.b16 %v624, %v623
      %v659 = vpack.c.b16 %v626, %v625
      %v660 = vpack.c.b16 %v628, %v627
      %v661 = vpack.c.b16 %v630, %v629
      %v662 = vpack.c.b16 %v632, %v631
      %v663 = vpack.c.b16 %v634, %v633
      %v664 = vpack.c.b16 %v636, %v635
      %v665 = vpack.c.b16 %v638, %v637
      %v666 = vpack.c.b16 %v640, %v639
      %v667 = vpack.c.b16 %v642, %v641
      %v668 = vpack.c.b16 %v644, %v643
      %693 = vmatpush.bf16.msra.mxu0 %v652
      %694 = vmatpush.bf16.msra.mxu0 %v651
      %695 = vmatpush.bf16.msra.mxu0 %v650
      %696 = vmatpush.bf16.msra.mxu0 %v649
      %697 = vmatpush.bf16.msra.mxu0 %v648
      %698 = vmatpush.bf16.msra.mxu0 %v647
      %699 = vmatpush.bf16.msra.mxu0 %v646
      %700 = vmatpush.bf16.msra.mxu0 %v645
      %701 = vmatmul.bf16.gmra.mxu0 %v453
      %v702 = vpop.f32.mrf.mxu0
      %v703 = vadd.f32 %v291, %v702
      %v704 = vpop.f32.mrf.mxu0
      %v705 = vadd.f32 %v291, %v704
      %706 = vmatmul.bf16.gmra.mxu0 %v456
      %v707 = vpop.f32.mrf.mxu0
      %v708 = vadd.f32 %v291, %v707
      %v709 = vpop.f32.mrf.mxu0
      %v710 = vadd.f32 %v291, %v709
      %711 = vmatmul.bf16.gmra.mxu0 %v459
      %v712 = vpop.f32.mrf.mxu0
      %v713 = vadd.f32 %v291, %v712
      %v714 = vpop.f32.mrf.mxu0
      %v715 = vadd.f32 %v291, %v714
      %716 = vmatmul.bf16.gmra.mxu0 %v462
      %v717 = vpop.f32.mrf.mxu0
      %v718 = vadd.f32 %v291, %v717
      %v719 = vpop.f32.mrf.mxu0
      %v720 = vadd.f32 %v291, %v719
      %721 = vmatmul.bf16.gmra.mxu0 %v465
      %v722 = vpop.f32.mrf.mxu0
      %v723 = vadd.f32 %v291, %v722
      %v724 = vpop.f32.mrf.mxu0
      %v725 = vadd.f32 %v291, %v724
      %726 = vmatmul.bf16.gmra.mxu0 %v468
      %v727 = vpop.f32.mrf.mxu0
      %v728 = vadd.f32 %v291, %v727
      %v729 = vpop.f32.mrf.mxu0
      %v730 = vadd.f32 %v291, %v729
      %731 = vmatmul.bf16.gmra.mxu0 %v471
      %v732 = vpop.f32.mrf.mxu0
      %v733 = vadd.f32 %v291, %v732
      %v734 = vpop.f32.mrf.mxu0
      %v735 = vadd.f32 %v291, %v734
      %736 = vmatmul.bf16.gmra.mxu0 %v474
      %v737 = vpop.f32.mrf.mxu0
      %v738 = vadd.f32 %v291, %v737
      %v739 = vpop.f32.mrf.mxu0
      %v740 = vadd.f32 %v291, %v739
      %741 = vmatmul.bf16.gmra.mxu0 %v477
      %v742 = vpop.f32.mrf.mxu0
      %v743 = vadd.f32 %v291, %v742
      %v744 = vpop.f32.mrf.mxu0
      %v745 = vadd.f32 %v291, %v744
      %746 = vmatmul.bf16.gmra.mxu0 %v480
      %v747 = vpop.f32.mrf.mxu0
      %v748 = vadd.f32 %v291, %v747
      %v749 = vpop.f32.mrf.mxu0
      %v750 = vadd.f32 %v291, %v749
      %751 = vmatmul.bf16.gmra.mxu0 %v483
      %v752 = vpop.f32.mrf.mxu0
      %v753 = vadd.f32 %v291, %v752
      %v754 = vpop.f32.mrf.mxu0
      %v755 = vadd.f32 %v291, %v754
      %756 = vmatmul.bf16.gmra.mxu0 %v486
      %v757 = vpop.f32.mrf.mxu0
      %v758 = vadd.f32 %v291, %v757
      %v759 = vpop.f32.mrf.mxu0
      %v760 = vadd.f32 %v291, %v759
      %761 = vmatmul.bf16.gmra.mxu0 %v489
      %v762 = vpop.f32.mrf.mxu0
      %v763 = vadd.f32 %v291, %v762
      %v764 = vpop.f32.mrf.mxu0
      %v765 = vadd.f32 %v291, %v764
      %766 = vmatmul.bf16.gmra.mxu0 %v492
      %v767 = vpop.f32.mrf.mxu0
      %v768 = vadd.f32 %v291, %v767
      %v769 = vpop.f32.mrf.mxu0
      %v770 = vadd.f32 %v291, %v769
      %771 = vmatmul.bf16.gmra.mxu0 %v495
      %v772 = vpop.f32.mrf.mxu0
      %v773 = vadd.f32 %v291, %v772
      %v774 = vpop.f32.mrf.mxu0
      %v775 = vadd.f32 %v291, %v774
      %776 = vmatmul.bf16.gmra.mxu0 %v498
      %v777 = vpop.f32.mrf.mxu0
      %v778 = vadd.f32 %v291, %v777
      %v779 = vpop.f32.mrf.mxu0
      %v780 = vadd.f32 %v291, %v779
      %781 = vdwg.mxu0
      %782 = vmatpush.bf16.msra.mxu0 %v660
      %783 = vmatpush.bf16.msra.mxu0 %v659
      %784 = vmatpush.bf16.msra.mxu0 %v658
      %785 = vmatpush.bf16.msra.mxu0 %v657
      %786 = vmatpush.bf16.msra.mxu0 %v656
      %787 = vmatpush.bf16.msra.mxu0 %v655
      %788 = vmatpush.bf16.msra.mxu0 %v654
      %789 = vmatpush.bf16.msra.mxu0 %v653
      %790 = vmatmul.bf16.gmra.mxu0 %v454
      %v791 = vpop.f32.mrf.mxu0
      %v792 = vadd.f32 %v703, %v791
      %v793 = vpop.f32.mrf.mxu0
      %v794 = vadd.f32 %v705, %v793
      %795 = vmatmul.bf16.gmra.mxu0 %v457
      %v796 = vpop.f32.mrf.mxu0
      %v797 = vadd.f32 %v708, %v796
      %v798 = vpop.f32.mrf.mxu0
      %v799 = vadd.f32 %v710, %v798
      %800 = vmatmul.bf16.gmra.mxu0 %v460
      %v801 = vpop.f32.mrf.mxu0
      %v802 = vadd.f32 %v713, %v801
      %v803 = vpop.f32.mrf.mxu0
      %v804 = vadd.f32 %v715, %v803
      %805 = vmatmul.bf16.gmra.mxu0 %v463
      %v806 = vpop.f32.mrf.mxu0
      %v807 = vadd.f32 %v718, %v806
      %v808 = vpop.f32.mrf.mxu0
      %v809 = vadd.f32 %v720, %v808
      %810 = vmatmul.bf16.gmra.mxu0 %v466
      %v811 = vpop.f32.mrf.mxu0
      %v812 = vadd.f32 %v723, %v811
      %v813 = vpop.f32.mrf.mxu0
      %v814 = vadd.f32 %v725, %v813
      %815 = vmatmul.bf16.gmra.mxu0 %v469
      %v816 = vpop.f32.mrf.mxu0
      %v817 = vadd.f32 %v728, %v816
      %v818 = vpop.f32.mrf.mxu0
      %v819 = vadd.f32 %v730, %v818
      %820 = vmatmul.bf16.gmra.mxu0 %v472
      %v821 = vpop.f32.mrf.mxu0
      %v822 = vadd.f32 %v733, %v821
      %v823 = vpop.f32.mrf.mxu0
      %v824 = vadd.f32 %v735, %v823
      %825 = vmatmul.bf16.gmra.mxu0 %v475
      %v826 = vpop.f32.mrf.mxu0
      %v827 = vadd.f32 %v738, %v826
      %v828 = vpop.f32.mrf.mxu0
      %v829 = vadd.f32 %v740, %v828
      %830 = vmatmul.bf16.gmra.mxu0 %v478
      %v831 = vpop.f32.mrf.mxu0
      %v832 = vadd.f32 %v743, %v831
      %v833 = vpop.f32.mrf.mxu0
      %v834 = vadd.f32 %v745, %v833
      %835 = vmatmul.bf16.gmra.mxu0 %v481
      %v836 = vpop.f32.mrf.mxu0
      %v837 = vadd.f32 %v748, %v836
      %v838 = vpop.f32.mrf.mxu0
      %v839 = vadd.f32 %v750, %v838
      %840 = vmatmul.bf16.gmra.mxu0 %v484
      %v841 = vpop.f32.mrf.mxu0
      %v842 = vadd.f32 %v753, %v841
      %v843 = vpop.f32.mrf.mxu0
      %v844 = vadd.f32 %v755, %v843
      %845 = vmatmul.bf16.gmra.mxu0 %v487
      %v846 = vpop.f32.mrf.mxu0
      %v847 = vadd.f32 %v758, %v846
      %v848 = vpop.f32.mrf.mxu0
      %v849 = vadd.f32 %v760, %v848
      %850 = vmatmul.bf16.gmra.mxu0 %v490
      %v851 = vpop.f32.mrf.mxu0
      %v852 = vadd.f32 %v763, %v851
      %v853 = vpop.f32.mrf.mxu0
      %v854 = vadd.f32 %v765, %v853
      %855 = vmatmul.bf16.gmra.mxu0 %v493
      %v856 = vpop.f32.mrf.mxu0
      %v857 = vadd.f32 %v768, %v856
      %v858 = vpop.f32.mrf.mxu0
      %v859 = vadd.f32 %v770, %v858
      %860 = vmatmul.bf16.gmra.mxu0 %v496
      %v861 = vpop.f32.mrf.mxu0
      %v862 = vadd.f32 %v773, %v861
      %v863 = vpop.f32.mrf.mxu0
      %v864 = vadd.f32 %v775, %v863
      %865 = vmatmul.bf16.gmra.mxu0 %v499
      %v866 = vpop.f32.mrf.mxu0
      %v867 = vadd.f32 %v778, %v866
      %v868 = vpop.f32.mrf.mxu0
      %v869 = vadd.f32 %v780, %v868
      %870 = vdwg.mxu0
      %871 = vmatpush.bf16.msra.mxu0 %v668
      %872 = vmatpush.bf16.msra.mxu0 %v667
      %873 = vmatpush.bf16.msra.mxu0 %v666
      %874 = vmatpush.bf16.msra.mxu0 %v665
      %875 = vmatpush.bf16.msra.mxu0 %v664
      %876 = vmatpush.bf16.msra.mxu0 %v663
      %877 = vmatpush.bf16.msra.mxu0 %v662
      %878 = vmatpush.bf16.msra.mxu0 %v661
      %879 = vmatmul.bf16.gmra.mxu0 %v455
      %v880 = vpop.f32.mrf.mxu0
      %v881 = vadd.f32 %v792, %v880
      %v882 = vpop.f32.mrf.mxu0
      %v883 = vadd.f32 %v794, %v882
      %884 = vmatmul.bf16.gmra.mxu0 %v458
      %v885 = vpop.f32.mrf.mxu0
      %v886 = vadd.f32 %v797, %v885
      %v887 = vpop.f32.mrf.mxu0
      %v888 = vadd.f32 %v799, %v887
      %889 = vmatmul.bf16.gmra.mxu0 %v461
      %v890 = vpop.f32.mrf.mxu0
      %v891 = vadd.f32 %v802, %v890
      %v892 = vpop.f32.mrf.mxu0
      %v893 = vadd.f32 %v804, %v892
      %894 = vmatmul.bf16.gmra.mxu0 %v464
      %v895 = vpop.f32.mrf.mxu0
      %v896 = vadd.f32 %v807, %v895
      %v897 = vpop.f32.mrf.mxu0
      %v898 = vadd.f32 %v809, %v897
      %899 = vmatmul.bf16.gmra.mxu0 %v467
      %v900 = vpop.f32.mrf.mxu0
      %v901 = vadd.f32 %v812, %v900
      %v902 = vpop.f32.mrf.mxu0
      %v903 = vadd.f32 %v814, %v902
      %904 = vmatmul.bf16.gmra.mxu0 %v470
      %v905 = vpop.f32.mrf.mxu0
      %v906 = vadd.f32 %v817, %v905
      %v907 = vpop.f32.mrf.mxu0
      %v908 = vadd.f32 %v819, %v907
      %909 = vmatmul.bf16.gmra.mxu0 %v473
      %v910 = vpop.f32.mrf.mxu0
      %v911 = vadd.f32 %v822, %v910
      %v912 = vpop.f32.mrf.mxu0
      %v913 = vadd.f32 %v824, %v912
      %914 = vmatmul.bf16.gmra.mxu0 %v476
      %v915 = vpop.f32.mrf.mxu0
      %v916 = vadd.f32 %v827, %v915
      %v917 = vpop.f32.mrf.mxu0
      %v918 = vadd.f32 %v829, %v917
      %919 = vmatmul.bf16.gmra.mxu0 %v479
      %v920 = vpop.f32.mrf.mxu0
      %v921 = vadd.f32 %v832, %v920
      %v922 = vpop.f32.mrf.mxu0
      %v923 = vadd.f32 %v834, %v922
      %924 = vmatmul.bf16.gmra.mxu0 %v482
      %v925 = vpop.f32.mrf.mxu0
      %v926 = vadd.f32 %v837, %v925
      %v927 = vpop.f32.mrf.mxu0
      %v928 = vadd.f32 %v839, %v927
      %929 = vmatmul.bf16.gmra.mxu0 %v485
      %v930 = vpop.f32.mrf.mxu0
      %v931 = vadd.f32 %v842, %v930
      %v932 = vpop.f32.mrf.mxu0
      %v933 = vadd.f32 %v844, %v932
      %934 = vmatmul.bf16.gmra.mxu0 %v488
      %v935 = vpop.f32.mrf.mxu0
      %v936 = vadd.f32 %v847, %v935
      %v937 = vpop.f32.mrf.mxu0
      %v938 = vadd.f32 %v849, %v937
      %939 = vmatmul.bf16.gmra.mxu0 %v491
      %v940 = vpop.f32.mrf.mxu0
      %v941 = vadd.f32 %v852, %v940
      %v942 = vpop.f32.mrf.mxu0
      %v943 = vadd.f32 %v854, %v942
      %944 = vmatmul.bf16.gmra.mxu0 %v494
      %v945 = vpop.f32.mrf.mxu0
      %v946 = vadd.f32 %v857, %v945
      %v947 = vpop.f32.mrf.mxu0
      %v948 = vadd.f32 %v859, %v947
      %949 = vmatmul.bf16.gmra.mxu0 %v497
      %v950 = vpop.f32.mrf.mxu0
      %v951 = vadd.f32 %v862, %v950
      %v952 = vpop.f32.mrf.mxu0
      %v953 = vadd.f32 %v864, %v952
      %954 = vmatmul.bf16.gmra.mxu0 %v500
      %v955 = vpop.f32.mrf.mxu0
      %v956 = vadd.f32 %v867, %v955
      %v957 = vpop.f32.mrf.mxu0
      %v958 = vadd.f32 %v869, %v957
      %959 = vdwg.mxu0
      %v960 = vtanh.pop %v881
      %v961 = vtanh.pop %v883
      %v962 = vtanh.pop %v886
      %v963 = vtanh.pop %v888
      %v964 = vtanh.pop %v891
      %v965 = vtanh.pop %v893
      %v966 = vtanh.pop %v896
      %v967 = vtanh.pop %v898
      %v968 = vtanh.pop %v901
      %v969 = vtanh.pop %v903
      %v970 = vtanh.pop %v906
      %v971 = vtanh.pop %v908
      %v972 = vtanh.pop %v911
      %v973 = vtanh.pop %v913
      %v974 = vtanh.pop %v916
      %v975 = vtanh.pop %v918
      %v976 = vtanh.pop %v921
      %v977 = vtanh.pop %v923
      %v978 = vtanh.pop %v926
      %v979 = vtanh.pop %v928
      %v980 = vtanh.pop %v931
      %v981 = vtanh.pop %v933
      %v982 = vtanh.pop %v936
      %v983 = vtanh.pop %v938
      %v984 = vtanh.pop %v941
      %v985 = vtanh.pop %v943
      %v986 = vtanh.pop %v946
      %v987 = vtanh.pop %v948
      %v988 = vtanh.pop %v951
      %v989 = vtanh.pop %v953
      %v990 = vtanh.pop %v956
      %v991 = vtanh.pop %v958
      %992 = vst [vmem:[%s175] sm:$0xff] %v960
      %993 = vst [vmem:[%s175 + $0x8] sm:$0xff] %v961
      %994 = vst [vmem:[%s175 + $0x10] sm:$0xff] %v962
      %995 = vst [vmem:[%s175 + $0x18] sm:$0xff] %v963
      %996 = vst [vmem:[%s175 + $0x20] sm:$0xff] %v964
      %997 = vst [vmem:[%s175 + $0x28] sm:$0xff] %v965
      %998 = vst [vmem:[%s175 + $0x30] sm:$0xff] %v966
      %999 = vst [vmem:[%s175 + $0x38] sm:$0xff] %v967
      %1000 = vst [vmem:[%s175 + $0x40] sm:$0xff] %v968
      %1001 = vst [vmem:[%s175 + $0x48] sm:$0xff] %v969
      %1002 = vst [vmem:[%s175 + $0x50] sm:$0xff] %v970
      %1003 = vst [vmem:[%s175 + $0x58] sm:$0xff] %v971
      %1004 = vst [vmem:[%s175 + $0x60] sm:$0xff] %v972
      %1005 = vst [vmem:[%s175 + $0x68] sm:$0xff] %v973
      %1006 = vst [vmem:[%s175 + $0x70] sm:$0xff] %v974
      %1007 = vst [vmem:[%s175 + $0x78] sm:$0xff] %v975
      %1008 = vst [vmem:[%s175 + $0x80] sm:$0xff] %v976
      %1009 = vst [vmem:[%s175 + $0x88] sm:$0xff] %v977
      %1010 = vst [vmem:[%s175 + $0x90] sm:$0xff] %v978
      %1011 = vst [vmem:[%s175 + $0x98] sm:$0xff] %v979
      %1012 = vst [vmem:[%s175 + $0xa0] sm:$0xff] %v980
      %1013 = vst [vmem:[%s175 + $0xa8] sm:$0xff] %v981
      %1014 = vst [vmem:[%s175 + $0xb0] sm:$0xff] %v982
      %1015 = vst [vmem:[%s175 + $0xb8] sm:$0xff] %v983
      %1016 = vst [vmem:[%s175 + $0xc0] sm:$0xff] %v984
      %1017 = vst [vmem:[%s175 + $0xc8] sm:$0xff] %v985
      %1018 = vst [vmem:[%s175 + $0xd0] sm:$0xff] %v986
      %1019 = vst [vmem:[%s175 + $0xd8] sm:$0xff] %v987
      %1020 = vst [vmem:[%s175 + $0xe0] sm:$0xff] %v988
      %1021 = vst [vmem:[%s175 + $0xe8] sm:$0xff] %v989
      %1022 = vst [vmem:[%s175 + $0xf0] sm:$0xff] %v990
      %1023 = vst [vmem:[%s175 + $0xf8] sm:$0xff] %v991
      %s1024 = smul.u32 32, %s14
      %p1025 = scmp.lt.s32.totalorder %s1024, 63
      %s1026 = scalar_select %p1025, %s1024, 63
      %s1027 = smul.addr %s1026, 8
      %s1028 = scalar_lea.vmem %s3, %s1027
      // Predicated region
      $region33: #{vae_forward.21} parent=31 // pred_check
        %p1029 = pneg %p100
      $region34: #{vae_forward.21} parent=31 // pred_check_branch
        %1031 = sbr.rel (%p1029) target = $region36
      $region35: #{vae_forward.21} parent=31 // pred_region
        %s1032 = smul.u32 32, %s14
      $region36: #{vae_forward.21} parent=31 // pred_fallthru
        _
    $region32: #{vae_forward.21} parent=5 // pred_fallthru
      _
    %p1033 = scmp.le.s32.totalorder 2, %s9
    // Predicated region
    $region37: #{vae_forward.21} parent=5 // pred_check
      %p1034 = pneg %p1033
    $region38: #{vae_forward.21} parent=5 // pred_check_branch
      %1036 = sbr.rel (%p1034) target = $region40
    $region39: #{vae_forward.21} parent=5 // pred_region
      %s1037 = ssub.s32 %s9, 2
      // Predicated region
      $region41: #{vae_forward.21} parent=39 // pred_check
        %p1038 = pneg %p106
      $region42: #{vae_forward.21} parent=39 // pred_check_branch
        %1040 = sbr.rel (%p1038) target = $region44
      $region43: #{vae_forward.21} parent=39 // pred_region
        %s1041 = smul.u32 32, %s15
        %p1042 = scmp.lt.s32.totalorder %s1041, 63
        %s1043 = scalar_select %p1042, %s1041, 63
        %s1044 = smul.addr %s1043, 8
        %s1045 = scalar_lea.vmem %s3, %s1044
      $region44: #{vae_forward.21} parent=39 // pred_fallthru
        _
    $region40: #{vae_forward.21} parent=5 // pred_fallthru
      _
  $region6: #{vae_forward.21} parent=0 // loop_footer
    %s13 = sadd.s32 1, %s9
  $region7: #{vae_forward.21} parent=0 // loop_footer_branch
    %8 = sbr.rel target = $region3
  $region8: #{vae_forward.21} parent=0 // loop_exit
    _

</llo_original>
